<compile_context>
chip_gen: v7x
topology: tpu7x:2x2x1
jax: 0.10.0
libtpu: 0.0.40
codegen_flags: <defaults>
</compile_context>

<pallas_src>
import jax
import jax.numpy as jnp
from jax.experimental import pallas as pl
from jax.experimental.pallas import tpu as pltpu

IN_DIM = 2048
HID = 256
OUT_DIM = 1


def _round_up(n, m):
    return ((n + m - 1) // m) * m


def _pick_tile(B, tb):
    """Batch tile for B >= 256: multiple of 128, >= 2 grid steps, capped at 1024."""
    if tb is None:
        tb = B // 2                      # >= 2 grid steps -> both v7x TCs get work
    # MXU-aligned multiple of 128; cap at 1024: double-buffered f32 x tiles
    # (2 x 8 MiB) + resident weights fit v7x's 64 MiB VMEM with headroom.
    return int(min(1024, max(128, (int(tb) // 128) * 128)))


def mlp_kernel(x_ref, w1_ref, b1_ref, w2_ref, b2_ref, w3_ref, b3_ref, o_ref):
    # fc1 + relu: x streamed as f32, cast to bf16 on-chip (VPU cast hides under the
    # x DMA); bf16 MXU operands with f32 accumulation; bias/ReLU stay f32.
    x_bf = x_ref[...].astype(jnp.bfloat16)
    h1 = jnp.dot(x_bf, w1_ref[...], preferred_element_type=jnp.float32)
    h1 = jnp.maximum(h1 + b1_ref[...], 0.0)

    # fc2 + relu.
    h2 = jnp.dot(h1.astype(jnp.bfloat16), w2_ref[...],
                 preferred_element_type=jnp.float32)
    h2 = jnp.maximum(h2 + b2_ref[...], 0.0)

    # fc3 (out_features == 1): keep it off the MXU. VPU multiply, XLU transpose,
    # then a sublane reduction producing a lane-dense (1, tb) row so the final
    # store is an unmasked full-lane vst (instead of a masked (tb, 1) column).
    w3_row = w3_ref[...].astype(jnp.float32)              # (1, HID)
    contrib = (h2 * w3_row).T                              # (HID, tb)  VPU + XLU
    logits = jnp.sum(contrib, axis=0, keepdims=True) + b3_ref[0, 0]   # (1, tb)
    o_ref[...] = jax.nn.sigmoid(logits).astype(o_ref.dtype)


def binary_classifier_forward(x, w1, b1, w2, b2, w3, b3, *, tb=None):
    """x: (B, 2048) f32. w1 (2048,256), w2 (256,256), w3 (1,256) bf16 or f32;
    b1/b2 (1,256) f32; b3 (1,1) f32. Returns (B, 1) f32 sigmoid outputs."""
    B = x.shape[0]

    if B < 256:
        # Tiny batches: pad up to 128-row tiles (<= 127 wasted rows, trivial traffic)
        # so every in-kernel shape stays (8,128)-aligned and the output lane-dense.
        b_eff = _round_up(max(B, 1), 128)
        if b_eff != B:
            x = jnp.pad(x, ((0, b_eff - B), (0, 0)))
        tb_eff = 128
    else:
        # Large batches: no pad; Pallas clips the ragged edge block and the garbage
        # rows >= B are sliced off below.
        b_eff = B
        tb_eff = _pick_tile(B, tb)

    num_tiles = pl.cdiv(b_eff, tb_eff)
    b_pad = num_tiles * tb_eff

    # bf16 matmul weights / f32 biases. These are no-ops if the caller already
    # pre-cast once via prepare_params (recommended for repeated inference).
    w1 = w1.astype(jnp.bfloat16)
    w2 = w2.astype(jnp.bfloat16)
    w3 = w3.astype(jnp.bfloat16)
    b1 = b1.astype(jnp.float32)
    b2 = b2.astype(jnp.float32)
    b3 = b3.astype(jnp.float32)

    out = pl.pallas_call(
        mlp_kernel,
        out_shape=jax.ShapeDtypeStruct((1, b_pad), jnp.float32),
        grid=(num_tiles,),
        in_specs=[
            # x: f32 batch tiles, streamed / double-buffered; bf16 cast is in-kernel.
            pl.BlockSpec((tb_eff, IN_DIM), lambda i: (i, 0)),
            # Weights / biases: constant index_map -> fetched once, VMEM-resident.
            pl.BlockSpec((IN_DIM, HID), lambda i: (0, 0)),
            pl.BlockSpec((1, HID), lambda i: (0, 0)),
            pl.BlockSpec((HID, HID), lambda i: (0, 0)),
            pl.BlockSpec((1, HID), lambda i: (0, 0)),
            pl.BlockSpec((1, HID), lambda i: (0, 0)),
            # Scalar fc3 bias lives in SMEM.
            pl.BlockSpec(memory_space=pltpu.MemorySpace.SMEM),
        ],
        # Lane-dense output: grid step i writes columns [i*tb, (i+1)*tb).
        out_specs=pl.BlockSpec((1, tb_eff), lambda i: (0, i)),
        compiler_params=pltpu.CompilerParams(
            dimension_semantics=("parallel",),   # >= 2 steps shard across v7x's 2 TCs
            vmem_limit_bytes=48 * 1024 * 1024,
        ),
    )(x, w1, b1, w2, b2, w3, b3)

    # (1, b_pad) row -> (B, 1); padded / ragged-edge entries are dropped here.
    return out.reshape(-1)[:B, None]


def prepare_params(w1, b1, w2, b2, w3, b3):
    """One-time cast of matmul weights to bf16 (call once, outside the hot path)."""
    return (w1.astype(jnp.bfloat16), b1.astype(jnp.float32),
            w2.astype(jnp.bfloat16), b2.astype(jnp.float32),
            w3.astype(jnp.bfloat16), b3.astype(jnp.float32))


def init_params(key):
    k1, k2, k3 = jax.random.split(key, 3)

    # Deterministic synthetic weights (PyTorch-like uniform fan-in scaling).
    def uni(k, shape, fan_in):
        bound = 1.0 / jnp.sqrt(fan_in)
        return jax.random.uniform(k, shape, jnp.float32, -bound, bound)

    w1 = uni(k1, (IN_DIM, HID), IN_DIM)                       # fc1.weight.T
    b1 = uni(jax.random.fold_in(k1, 1), (1, HID), IN_DIM)     # fc1.bias
    w2 = uni(k2, (HID, HID), HID)                             # fc2.weight.T
    b2 = uni(jax.random.fold_in(k2, 1), (1, HID), HID)        # fc2.bias
    w3 = uni(k3, (OUT_DIM, HID), HID)                         # fc3.weight  (1, 256)
    b3 = uni(jax.random.fold_in(k3, 1), (1, OUT_DIM), HID)    # fc3.bias    (1, 1)
    return w1, b1, w2, b2, w3, b3


if __name__ == "__main__":
    key = jax.random.PRNGKey(0)
    kx, kp = jax.random.split(key)

    B = 256  # two 128-row tiles -> exercises streaming pipeline + both v7x TCs
    x = jax.random.normal(kx, (B, IN_DIM), jnp.float32)
    params_f32 = init_params(kp)
    params = prepare_params(*params_f32)   # one-time bf16 cast of matmul weights

    out = binary_classifier_forward(x, *params)
    out = jax.block_until_ready(out)
    assert out.shape == (B, OUT_DIM)

    # Pure-JAX reference replicating the kernel's dtype choices
    # (bf16 matmul operands, f32 accumulation / elementwise, f32 x cast on the fly).
    w1, b1, w2, b2, w3, b3 = params_f32
    w1b, w2b, w3b = (w.astype(jnp.bfloat16) for w in (w1, w2, w3))
    h1 = jnp.maximum(
        jnp.dot(x.astype(jnp.bfloat16), w1b,
                preferred_element_type=jnp.float32) + b1, 0.0)
    h2 = jnp.maximum(
        jnp.dot(h1.astype(jnp.bfloat16), w2b,
                preferred_element_type=jnp.float32) + b2, 0.0)
    logits = jnp.sum(h2 * w3b.astype(jnp.float32), axis=-1, keepdims=True) + b3[0, 0]
    ref = jax.nn.sigmoid(logits)

    assert jnp.allclose(out, ref, atol=2e-2), "mismatch vs reference"

    print("KERNEL_OK")
</pallas_src>

<mosaic_0001>
module attributes {stable_mosaic.version = 11 : i64} {
  func.func @mlp_kernel(%arg0: i32, %arg1: memref<128x2048xf32, #tpu.memory_space<vmem>>, %arg2: memref<2048x256xbf16, #tpu.memory_space<vmem>>, %arg3: memref<1x256xf32, #tpu.memory_space<vmem>>, %arg4: memref<256x256xbf16, #tpu.memory_space<vmem>>, %arg5: memref<1x256xf32, #tpu.memory_space<vmem>>, %arg6: memref<1x256xbf16, #tpu.memory_space<vmem>>, %arg7: memref<1x1xf32, #tpu.memory_space<smem>>, %arg8: memref<1x128xf32, #tpu.memory_space<vmem>>) attributes {dimension_semantics = [#tpu.dimension_semantics<parallel>], iteration_bounds = array<i64: 2>, scalar_prefetch = 0 : i64, scratch_operands = 0 : i64, tpu.core_type = #tpu.core_type<tc>, window_params = [{transform_indices = @transform_0, window_bounds = array<i64: 128, 2048>}, {pipeline_mode = #tpu.pipeline_mode<synchronous>, transform_indices = @transform_1, window_bounds = array<i64: 2048, 256>}, {pipeline_mode = #tpu.pipeline_mode<synchronous>, transform_indices = @transform_2, window_bounds = array<i64: 1, 256>}, {pipeline_mode = #tpu.pipeline_mode<synchronous>, transform_indices = @transform_3, window_bounds = array<i64: 256, 256>}, {pipeline_mode = #tpu.pipeline_mode<synchronous>, transform_indices = @transform_4, window_bounds = array<i64: 1, 256>}, {pipeline_mode = #tpu.pipeline_mode<synchronous>, transform_indices = @transform_5, window_bounds = array<i64: 1, 256>}, {transform_indices = @transform_6, window_bounds = array<i64: 1, 1>}, {transform_indices = @transform_7, window_bounds = array<i64: 1, 128>}]} {
    %c0 = arith.constant 0 : index
    %c0_0 = arith.constant 0 : index
    %0 = vector.load %arg1[%c0, %c0_0] : memref<128x2048xf32, #tpu.memory_space<vmem>>, vector<128x2048xf32>
    %1 = arith.truncf %0 : vector<128x2048xf32> to vector<128x2048xbf16>
    %c0_1 = arith.constant 0 : index
    %c0_2 = arith.constant 0 : index
    %2 = vector.load %arg2[%c0_1, %c0_2] : memref<2048x256xbf16, #tpu.memory_space<vmem>>, vector<2048x256xbf16>
    %cst = arith.constant dense<0.000000e+00> : vector<128x256xf32>
    %3 = tpu.matmul %1, %2, %cst {dimension_numbers = #tpu.dot_dimension_numbers<[1], [0], [0], [1], [0, 0, 1, 1], [], []>} : vector<128x2048xbf16>, vector<2048x256xbf16>, vector<128x256xf32> -> vector<128x256xf32>
    %c0_3 = arith.constant 0 : index
    %c0_4 = arith.constant 0 : index
    %4 = vector.load %arg3[%c0_3, %c0_4] : memref<1x256xf32, #tpu.memory_space<vmem>>, vector<1x256xf32>
    %5 = vector.broadcast %4 : vector<1x256xf32> to vector<128x256xf32>
    %6 = arith.addf %3, %5 : vector<128x256xf32>
    %cst_5 = arith.constant 0.000000e+00 : f32
    %7 = vector.broadcast %cst_5 : f32 to vector<128x256xf32>
    %8 = arith.maximumf %6, %7 : vector<128x256xf32>
    %9 = arith.truncf %8 : vector<128x256xf32> to vector<128x256xbf16>
    %c0_6 = arith.constant 0 : index
    %c0_7 = arith.constant 0 : index
    %10 = vector.load %arg4[%c0_6, %c0_7] : memref<256x256xbf16, #tpu.memory_space<vmem>>, vector<256x256xbf16>
    %cst_8 = arith.constant dense<0.000000e+00> : vector<128x256xf32>
    %11 = tpu.matmul %9, %10, %cst_8 {dimension_numbers = #tpu.dot_dimension_numbers<[1], [0], [0], [1], [0, 0, 1, 1], [], []>} : vector<128x256xbf16>, vector<256x256xbf16>, vector<128x256xf32> -> vector<128x256xf32>
    %c0_9 = arith.constant 0 : index
    %c0_10 = arith.constant 0 : index
    %12 = vector.load %arg5[%c0_9, %c0_10] : memref<1x256xf32, #tpu.memory_space<vmem>>, vector<1x256xf32>
    %13 = vector.broadcast %12 : vector<1x256xf32> to vector<128x256xf32>
    %14 = arith.addf %11, %13 : vector<128x256xf32>
    %cst_11 = arith.constant 0.000000e+00 : f32
    %15 = vector.broadcast %cst_11 : f32 to vector<128x256xf32>
    %16 = arith.maximumf %14, %15 : vector<128x256xf32>
    %c0_12 = arith.constant 0 : index
    %c0_13 = arith.constant 0 : index
    %17 = vector.load %arg6[%c0_12, %c0_13] : memref<1x256xbf16, #tpu.memory_space<vmem>>, vector<1x256xbf16>
    %18 = arith.extf %17 : vector<1x256xbf16> to vector<1x256xf32>
    %19 = vector.broadcast %18 : vector<1x256xf32> to vector<128x256xf32>
    %20 = arith.mulf %16, %19 : vector<128x256xf32>
    %21 = tpu.transpose %20, [1, 0] : vector<128x256xf32> -> vector<256x128xf32>
    %cst_14 = arith.constant dense<0.000000e+00> : vector<128xf32>
    %22 = vector.multi_reduction <add>, %21, %cst_14 [0] : vector<256x128xf32> to vector<128xf32>
    %23 = vector.shape_cast %22 : vector<128xf32> to vector<1x128xf32>
    %c0_15 = arith.constant 0 : index
    %c0_16 = arith.constant 0 : index
    %24 = memref.load %arg7[%c0_15, %c0_16] : memref<1x1xf32, #tpu.memory_space<smem>>
    %25 = vector.broadcast %24 : f32 to vector<1x128xf32>
    %26 = arith.addf %23, %25 : vector<1x128xf32>
    %27 = arith.negf %26 : vector<1x128xf32>
    %28 = math.exp %27 : vector<1x128xf32>
    %cst_17 = arith.constant 1.000000e+00 : f32
    %29 = vector.broadcast %cst_17 : f32 to vector<1x128xf32>
    %30 = arith.addf %29, %28 : vector<1x128xf32>
    %31 = arith.divf %29, %30 : vector<1x128xf32>
    %c0_18 = arith.constant 0 : index
    %c0_19 = arith.constant 0 : index
    %32 = vector.load %arg8[%c0_18, %c0_19] : memref<1x128xf32, #tpu.memory_space<vmem>>, vector<1x128xf32>
    tpu.vector_store %arg8[%c0_18, %c0_19], %31 {strides = array<i32>} : memref<1x128xf32, #tpu.memory_space<vmem>>, vector<1x128xf32>,
    return
  }
  func.func @transform_0(%arg0: i32) -> (i32, i32) {
    %c0_i32 = arith.constant 0 : i32
    %c0_i32_0 = arith.constant 0 : i32
    return %arg0, %c0_i32 : i32, i32
  }
  func.func @transform_1(%arg0: i32) -> (i32, i32) {
    %c0_i32 = arith.constant 0 : i32
    %c0_i32_0 = arith.constant 0 : i32
    %c0_i32_1 = arith.constant 0 : i32
    return %c0_i32, %c0_i32_0 : i32, i32
  }
  func.func @transform_2(%arg0: i32) -> (i32, i32) {
    %c0_i32 = arith.constant 0 : i32
    %c0_i32_0 = arith.constant 0 : i32
    %c0_i32_1 = arith.constant 0 : i32
    return %c0_i32, %c0_i32_0 : i32, i32
  }
  func.func @transform_3(%arg0: i32) -> (i32, i32) {
    %c0_i32 = arith.constant 0 : i32
    %c0_i32_0 = arith.constant 0 : i32
    %c0_i32_1 = arith.constant 0 : i32
    return %c0_i32, %c0_i32_0 : i32, i32
  }
  func.func @transform_4(%arg0: i32) -> (i32, i32) {
    %c0_i32 = arith.constant 0 : i32
    %c0_i32_0 = arith.constant 0 : i32
    %c0_i32_1 = arith.constant 0 : i32
    return %c0_i32, %c0_i32_0 : i32, i32
  }
  func.func @transform_5(%arg0: i32) -> (i32, i32) {
    %c0_i32 = arith.constant 0 : i32
    %c0_i32_0 = arith.constant 0 : i32
    %c0_i32_1 = arith.constant 0 : i32
    return %c0_i32, %c0_i32_0 : i32, i32
  }
  func.func @transform_6(%arg0: i32) -> (i32, i32) {
    %c0_i32 = arith.constant 0 : i32
    %c0_i32_0 = arith.constant 0 : i32
    %c0_i32_1 = arith.constant 0 : i32
    return %c0_i32, %c0_i32_0 : i32, i32
  }
  func.func @transform_7(%arg0: i32) -> (i32, i32) {
    %c0_i32 = arith.constant 0 : i32
    %c0_i32_0 = arith.constant 0 : i32
    return %c0_i32, %arg0 : i32, i32
  }
}

</mosaic_0001>

<llo_original>
// kernel: tpu_custom_call.1
$region0: #{tpu_custom_call.1}
  #allocation0 [shape = 'u32[]', space=smem, size = 0x4, offset = 0x4, fixed_abs, tag = 'smem constant byte address 0x4 - core index']
  #allocation1 [shape = 'u32[144,128]{1,0:T(1,128)}', space=vmem, size = 0x12000, scoped, tag = 'internal scratch']
  #allocation2 [shape = 'f32[1,1]{1,0:T(1,128)S(6)}', space=smem, size = 0x200, scoped, tag = 'scoped memory for tpu_custom_call.1']
  %s0 = inlined_call_operand.hbm [shape: f32[256,2048], index: 0, kind: input, shape index: {}]
  %s1 = inlined_call_operand.hbm [shape: bf16[2048,256], index: 1, kind: input, shape index: {}]
  %s2 = inlined_call_operand.hbm [shape: f32[1,256], index: 2, kind: input, shape index: {}]
  %s3 = inlined_call_operand.hbm [shape: bf16[256,256], index: 3, kind: input, shape index: {}]
  %s4 = inlined_call_operand.hbm [shape: f32[1,256], index: 4, kind: input, shape index: {}]
  %s5 = inlined_call_operand.hbm [shape: bf16[1,256], index: 5, kind: input, shape index: {}]
  %s6 = inlined_call_operand.<no memory space> [shape: f32[1,1], index: 6, kind: input, shape index: {}]
  %s7 = inlined_call_operand.hbm [shape: f32[1,256], index: 7, kind: output, shape index: {}]
  %s8 = sld [smem:[#allocation0]]
  $region85: #{tpu_custom_call.1} parent=0
    _
  %s10 = ssub.s32 1, %s8
  %s11 = scalar_select 0, %s10, %s8
  %12 = sst [smem:[#allocation2]] %s6
  $region1: #{tpu_custom_call.1} parent=0
    #allocation3 [shape = 'u8[2097152]{0}', space=vmem, size = 0x200000, scoped, tag = 'input window, operand 0']
    #allocation4 [shape = 's32[2]{0}', space=sflag, size = 0x8, scoped, tag = 'scoped memory for tpu_custom_call.1']
    #allocation5 [shape = 's32[2]{0}', space=sflag, size = 0x8, scoped, tag = 'scoped memory for tpu_custom_call.1']
    #allocation6 [shape = 'u8[1048576]{0}', space=vmem, size = 0x100000, scoped, tag = 'input window, operand 1, single buffered']
    #allocation7 [shape = 's32[1]{0}', space=sflag, size = 0x4, scoped, tag = 'scoped memory for tpu_custom_call.1']
    #allocation8 [shape = 'u8[1024]{0}', space=vmem, size = 0x400, scoped, tag = 'input window, operand 2, single buffered']
    #allocation9 [shape = 'u8[131072]{0}', space=vmem, size = 0x20000, scoped, tag = 'input window, operand 3, single buffered']
    #allocation10 [shape = 's32[1]{0}', space=sflag, size = 0x4, scoped, tag = 'scoped memory for tpu_custom_call.1']
    #allocation11 [shape = 'u8[1024]{0}', space=vmem, size = 0x400, scoped, tag = 'input window, operand 4, single buffered']
    #allocation12 [shape = 'u8[1024]{0}', space=vmem, size = 0x400, scoped, tag = 'input window, operand 5, single buffered']
    #allocation13 [shape = 's32[1]{0}', space=sflag, size = 0x4, scoped, tag = 'scoped memory for tpu_custom_call.1']
    #allocation14 [shape = 'u8[1024]{0}', space=vmem, size = 0x400, scoped, tag = 'output window, operand 0']
    %13 = vsyncpa [#allocation4], 0
    %s14 = scalar_lea.sflag [#allocation4], 1
    %15 = vsyncpa %s14, 0
    %16 = vsyncpa [#allocation7], 0
    %17 = vsyncpa [#allocation10], 0
    %18 = vsyncpa [#allocation13], 0
    %19 = vsyncpa [#allocation5], 0
    %s20 = scalar_lea.sflag [#allocation5], 1
    %21 = vsyncpa %s20, 0
    loop: start=0, step=1, limit=4
    $region2: #{tpu_custom_call.1} parent=1 // loop_pre_header
      _
    $region3: #{tpu_custom_call.1} parent=1 // loop_header
      %s23 = sphi 0, %s27
      %p24 = scmp.ge.s32.totalorder %s23, 4
      %s33 = sphi 0, %s35
      %s36 = sphi 0, %s33
      %s37 = sphi 0, %s36
      %s53 = sphi 0, %s37
      %s57 = sphi 0, %s57
      %s59 = sphi 0, %s57
      %s60 = sphi 0, %s59
      %s74 = sphi 0, %s60
      %s78 = sphi 0, %s78
      %s80 = sphi 0, %s78
      %s81 = sphi 0, %s80
      %s95 = sphi 0, %s81
      %s99 = sphi 0, %s99
      %s101 = sphi 0, %s99
      %s102 = sphi 0, %s101
      %s116 = sphi 0, %s102
      %s120 = sphi 0, %s120
      %s122 = sphi 0, %s120
      %s123 = sphi 0, %s122
      %s137 = sphi 0, %s123
      %s141 = sphi 0, %s141
      %s143 = sphi 0, %s141
      %s144 = sphi 0, %s143
      %s158 = sphi 0, %s144
      %s162 = sphi 0, %s162
      %s164 = sphi 0, %s162
      %s165 = sphi 0, %s164
      %s179 = sphi 0, %s165
      %s185 = sphi 0, %s187
      %s188 = sphi 0, %s185
      %s189 = sphi 0, %s188
      %s205 = sphi 0, %s189
    $region4: #{tpu_custom_call.1} parent=1 // loop_header_branch
      %26 = sbr.rel (%p24) target = $region8
    $region5: #{tpu_custom_call.1} parent=1 // loop_body
      %s28 = ssub.s32 %s23, 1
      %s29 = ssub.s32 %s23, 2
      %s30 = sadd.s32 %s23, 1
      %s31 = ssub.s32 %s23, %s30
      %p32 = scmp.eq.s32.totalorder %s31, 0
      %s34 = sadd.s32 %s33, 1
      %s35 = scalar_select %p32, %s33, %s34
      %p38 = pneg %p32
      %p39 = scmp.eq.s32.totalorder %s23, 1
      %p40 = por %p38, %p39
      %p41 = scmp.ne.s32.totalorder %s33, %s36
      %p42 = scmp.eq.s32.totalorder %s23, 0
      %p43 = por %p41, %p42
      %p44 = scmp.ne.s32.totalorder %s33, %s36
      %p45 = scmp.eq.s32.totalorder %s28, 1
      %p46 = por %p44, %p45
      %p47 = scmp.ne.s32.totalorder %s36, %s37
      %p48 = scmp.eq.s32.totalorder %s28, 0
      %p49 = por %p47, %p48
      %p50 = scmp.ne.s32.totalorder %s36, %s37
      %p51 = scmp.eq.s32.totalorder %s29, 1
      %p52 = por %p50, %p51
      %p54 = scmp.ne.s32.totalorder %s37, %s53
      %p55 = scmp.eq.s32.totalorder %s29, 0
      %p56 = por %p54, %p55
      %s58 = sadd.s32 %s57, 1
      %p61 = scmp.eq.s32.totalorder %s23, 1
      %p62 = scmp.ne.s32.totalorder %s57, %s59
      %p63 = scmp.eq.s32.totalorder %s23, 0
      %p64 = por %p62, %p63
      %p65 = scmp.ne.s32.totalorder %s57, %s59
      %p66 = scmp.eq.s32.totalorder %s28, 1
      %p67 = por %p65, %p66
      %p68 = scmp.ne.s32.totalorder %s59, %s60
      %p69 = scmp.eq.s32.totalorder %s28, 0
      %p70 = por %p68, %p69
      %p71 = scmp.ne.s32.totalorder %s59, %s60
      %p72 = scmp.eq.s32.totalorder %s29, 1
      %p73 = por %p71, %p72
      %p75 = scmp.ne.s32.totalorder %s60, %s74
      %p76 = scmp.eq.s32.totalorder %s29, 0
      %p77 = por %p75, %p76
      %s79 = sadd.s32 %s78, 1
      %p82 = scmp.eq.s32.totalorder %s23, 1
      %p83 = scmp.ne.s32.totalorder %s78, %s80
      %p84 = scmp.eq.s32.totalorder %s23, 0
      %p85 = por %p83, %p84
      %p86 = scmp.ne.s32.totalorder %s78, %s80
      %p87 = scmp.eq.s32.totalorder %s28, 1
      %p88 = por %p86, %p87
      %p89 = scmp.ne.s32.totalorder %s80, %s81
      %p90 = scmp.eq.s32.totalorder %s28, 0
      %p91 = por %p89, %p90
      %p92 = scmp.ne.s32.totalorder %s80, %s81
      %p93 = scmp.eq.s32.totalorder %s29, 1
      %p94 = por %p92, %p93
      %p96 = scmp.ne.s32.totalorder %s81, %s95
      %p97 = scmp.eq.s32.totalorder %s29, 0
      %p98 = por %p96, %p97
      %s100 = sadd.s32 %s99, 1
      %p103 = scmp.eq.s32.totalorder %s23, 1
      %p104 = scmp.ne.s32.totalorder %s99, %s101
      %p105 = scmp.eq.s32.totalorder %s23, 0
      %p106 = por %p104, %p105
      %p107 = scmp.ne.s32.totalorder %s99, %s101
      %p108 = scmp.eq.s32.totalorder %s28, 1
      %p109 = por %p107, %p108
      %p110 = scmp.ne.s32.totalorder %s101, %s102
      %p111 = scmp.eq.s32.totalorder %s28, 0
      %p112 = por %p110, %p111
      %p113 = scmp.ne.s32.totalorder %s101, %s102
      %p114 = scmp.eq.s32.totalorder %s29, 1
      %p115 = por %p113, %p114
      %p117 = scmp.ne.s32.totalorder %s102, %s116
      %p118 = scmp.eq.s32.totalorder %s29, 0
      %p119 = por %p117, %p118
      %s121 = sadd.s32 %s120, 1
      %p124 = scmp.eq.s32.totalorder %s23, 1
      %p125 = scmp.ne.s32.totalorder %s120, %s122
      %p126 = scmp.eq.s32.totalorder %s23, 0
      %p127 = por %p125, %p126
      %p128 = scmp.ne.s32.totalorder %s120, %s122
      %p129 = scmp.eq.s32.totalorder %s28, 1
      %p130 = por %p128, %p129
      %p131 = scmp.ne.s32.totalorder %s122, %s123
      %p132 = scmp.eq.s32.totalorder %s28, 0
      %p133 = por %p131, %p132
      %p134 = scmp.ne.s32.totalorder %s122, %s123
      %p135 = scmp.eq.s32.totalorder %s29, 1
      %p136 = por %p134, %p135
      %p138 = scmp.ne.s32.totalorder %s123, %s137
      %p139 = scmp.eq.s32.totalorder %s29, 0
      %p140 = por %p138, %p139
      %s142 = sadd.s32 %s141, 1
      %p145 = scmp.eq.s32.totalorder %s23, 1
      %p146 = scmp.ne.s32.totalorder %s141, %s143
      %p147 = scmp.eq.s32.totalorder %s23, 0
      %p148 = por %p146, %p147
      %p149 = scmp.ne.s32.totalorder %s141, %s143
      %p150 = scmp.eq.s32.totalorder %s28, 1
      %p151 = por %p149, %p150
      %p152 = scmp.ne.s32.totalorder %s143, %s144
      %p153 = scmp.eq.s32.totalorder %s28, 0
      %p154 = por %p152, %p153
      %p155 = scmp.ne.s32.totalorder %s143, %s144
      %p156 = scmp.eq.s32.totalorder %s29, 1
      %p157 = por %p155, %p156
      %p159 = scmp.ne.s32.totalorder %s144, %s158
      %p160 = scmp.eq.s32.totalorder %s29, 0
      %p161 = por %p159, %p160
      %s163 = sadd.s32 %s162, 1
      %p166 = scmp.eq.s32.totalorder %s23, 1
      %p167 = scmp.ne.s32.totalorder %s162, %s164
      %p168 = scmp.eq.s32.totalorder %s23, 0
      %p169 = por %p167, %p168
      %p170 = scmp.ne.s32.totalorder %s162, %s164
      %p171 = scmp.eq.s32.totalorder %s28, 1
      %p172 = por %p170, %p171
      %p173 = scmp.ne.s32.totalorder %s164, %s165
      %p174 = scmp.eq.s32.totalorder %s28, 0
      %p175 = por %p173, %p174
      %p176 = scmp.ne.s32.totalorder %s164, %s165
      %p177 = scmp.eq.s32.totalorder %s29, 1
      %p178 = por %p176, %p177
      %p180 = scmp.ne.s32.totalorder %s165, %s179
      %p181 = scmp.eq.s32.totalorder %s29, 0
      %p182 = por %p180, %p181
      %s183 = ssub.s32 %s23, %s30
      %p184 = scmp.eq.s32.totalorder %s183, 0
      %s186 = sadd.s32 %s185, 1
      %s187 = scalar_select %p184, %s185, %s186
      %p190 = pneg %p184
      %p191 = scmp.eq.s32.totalorder %s23, 1
      %p192 = por %p190, %p191
      %p193 = scmp.ne.s32.totalorder %s185, %s188
      %p194 = scmp.eq.s32.totalorder %s23, 0
      %p195 = por %p193, %p194
      %p196 = scmp.ne.s32.totalorder %s185, %s188
      %p197 = scmp.eq.s32.totalorder %s28, 1
      %p198 = por %p196, %p197
      %p199 = scmp.ne.s32.totalorder %s188, %s189
      %p200 = scmp.eq.s32.totalorder %s28, 0
      %p201 = por %p199, %p200
      %p202 = scmp.ne.s32.totalorder %s188, %s189
      %p203 = scmp.eq.s32.totalorder %s29, 1
      %p204 = por %p202, %p203
      %p206 = scmp.ne.s32.totalorder %s189, %s205
      %p207 = scmp.eq.s32.totalorder %s29, 0
      %p208 = por %p206, %p207
      %p209 = scmp.le.s32.totalorder 1, %s23
      %p210 = scmp.lt.s32.totalorder %s23, 3
      %p211 = pnand %p209, %p210
      %p212 = pneg %p211
      // Predicated region
      $region9: #{tpu_custom_call.1} parent=5 // pred_check
        _
      $region10: #{tpu_custom_call.1} parent=5 // pred_check_branch
        %214 = sbr.rel (%p211) target = $region12
      $region11: #{tpu_custom_call.1} parent=5 // pred_region
        %s215 = ssub.s32 %s23, 1
        // Predicated region
        $region13: #{tpu_custom_call.1} parent=11 // pred_check
          %p216 = pneg %p70
        $region14: #{tpu_custom_call.1} parent=11 // pred_check_branch
          %218 = sbr.rel (%p216) target = $region16
        $region15: #{tpu_custom_call.1} parent=11 // pred_region
          %s220 = ssub.s32 32768, 32768
          %221 = vsyncadd [#allocation7], %s220
          %s222 = sshll.u32 [#allocation6], 4
          %s223 = int_to_ptr.vmem [resolvable:$true] %s222
          %228 = dma.hbm_to_vmem [thread:$0]  %s1, 32768, %s223, [#allocation7], 128, 128, 8
        $region16: #{tpu_custom_call.1} parent=11 // pred_fallthru
          _
        // Predicated region
        $region17: #{tpu_custom_call.1} parent=11 // pred_check
          %p229 = pneg %p91
        $region18: #{tpu_custom_call.1} parent=11 // pred_check_branch
          %231 = sbr.rel (%p229) target = $region20
        $region19: #{tpu_custom_call.1} parent=11 // pred_region
          %s233 = ssub.s32 32, 32
          %234 = vsyncadd [#allocation7], %s233
          %s236 = sshll.u32 [#allocation8], 4
          %s237 = int_to_ptr.vmem [resolvable:$true] %s236
          %239 = dma.hbm_to_vmem [thread:$0]  %s2, 32, %s237, [#allocation7]
        $region20: #{tpu_custom_call.1} parent=11 // pred_fallthru
          _
        // Predicated region
        $region21: #{tpu_custom_call.1} parent=11 // pred_check
          %p240 = pneg %p112
        $region22: #{tpu_custom_call.1} parent=11 // pred_check_branch
          %242 = sbr.rel (%p240) target = $region24
        $region23: #{tpu_custom_call.1} parent=11 // pred_region
          %s244 = ssub.s32 4096, 4096
          %245 = vsyncadd [#allocation10], %s244
          %s246 = sshll.u32 [#allocation9], 4
          %s247 = int_to_ptr.vmem [resolvable:$true] %s246
          %252 = dma.hbm_to_vmem [thread:$0]  %s3, 4096, %s247, [#allocation10], 128, 128, 8
        $region24: #{tpu_custom_call.1} parent=11 // pred_fallthru
          _
        // Predicated region
        $region25: #{tpu_custom_call.1} parent=11 // pred_check
          %p253 = pneg %p133
        $region26: #{tpu_custom_call.1} parent=11 // pred_check_branch
          %255 = sbr.rel (%p253) target = $region28
        $region27: #{tpu_custom_call.1} parent=11 // pred_region
          %s257 = ssub.s32 32, 32
          %258 = vsyncadd [#allocation10], %s257
          %s260 = sshll.u32 [#allocation11], 4
          %s261 = int_to_ptr.vmem [resolvable:$true] %s260
          %263 = dma.hbm_to_vmem [thread:$0]  %s4, 32, %s261, [#allocation10]
        $region28: #{tpu_custom_call.1} parent=11 // pred_fallthru
          _
        // Predicated region
        $region29: #{tpu_custom_call.1} parent=11 // pred_check
          %p264 = pneg %p154
        $region30: #{tpu_custom_call.1} parent=11 // pred_check_branch
          %266 = sbr.rel (%p264) target = $region32
        $region31: #{tpu_custom_call.1} parent=11 // pred_region
          %s268 = ssub.s32 32, 32
          %269 = vsyncadd [#allocation13], %s268
          %s271 = sshll.u32 [#allocation12], 4
          %s272 = int_to_ptr.vmem [resolvable:$true] %s271
          %274 = dma.hbm_to_vmem [thread:$0]  %s5, 32, %s272, [#allocation13]
        $region32: #{tpu_custom_call.1} parent=11 // pred_fallthru
          _
        // Predicated region
        $region33: #{tpu_custom_call.1} parent=11 // pred_check
          %p275 = pneg %p175
        $region34: #{tpu_custom_call.1} parent=11 // pred_check_branch
          %277 = sbr.rel (%p275) target = $region36
        $region35: #{tpu_custom_call.1} parent=11 // pred_region
          _
        $region36: #{tpu_custom_call.1} parent=11 // pred_fallthru
          _
      $region12: #{tpu_custom_call.1} parent=5 // pred_fallthru
        _
      %p278 = scmp.lt.s32.totalorder %s23, 2
      // Predicated region
      $region37: #{tpu_custom_call.1} parent=5 // pred_check
        %p279 = pneg %p278
      $region38: #{tpu_custom_call.1} parent=5 // pred_check_branch
        %281 = sbr.rel (%p279) target = $region40
      $region39: #{tpu_custom_call.1} parent=5 // pred_region
        // Predicated region
        $region41: #{tpu_custom_call.1} parent=39 // pred_check
          %p282 = pneg %p43
        $region42: #{tpu_custom_call.1} parent=39 // pred_check_branch
          %284 = sbr.rel (%p282) target = $region44
        $region43: #{tpu_custom_call.1} parent=39 // pred_region
          %s285 = sand.u32 %s33, 1
          %s286 = scalar_lea.sflag [#allocation4], %s285
          %s287 = sand.u32 %s33, 1
          %s288 = smul.addr %s287, 2048
          %s289 = scalar_lea.vmem [#allocation3], %s288
          %s290 = smul.u32 16, %s23
          %s292 = ssub.s32 32768, 32768
          %293 = vsyncadd %s286, %s292
          %s294 = smul.addr %s290, 16
          %s295 = smul.addr %s294, 128
          %s296 = scalar_lea.hbm %s0, %s295
          %s297 = sshll.u32 %s289, 4
          %s298 = int_to_ptr.vmem [resolvable:$true] %s297
          %303 = dma.hbm_to_vmem [thread:$0]  %s296, 32768, %s298, %s286, 2048, 2048, 128
        $region44: #{tpu_custom_call.1} parent=39 // pred_fallthru
          _
      $region40: #{tpu_custom_call.1} parent=5 // pred_fallthru
        _
      %p304 = scmp.le.s32.totalorder 1, %s23
      %p305 = scmp.lt.s32.totalorder %s23, 3
      %p306 = pnand %p304, %p305
      %p307 = pneg %p306
      // Predicated region
      $region45: #{tpu_custom_call.1} parent=5 // pred_check
        _
      $region46: #{tpu_custom_call.1} parent=5 // pred_check_branch
        %309 = sbr.rel (%p306) target = $region48
      $region47: #{tpu_custom_call.1} parent=5 // pred_region
        %s310 = ssub.s32 %s23, 1
        %s311 = sand.u32 %s36, 1
        %s312 = scalar_lea.sflag [#allocation4], %s311
        %s313 = sand.u32 %s36, 1
        %s314 = smul.addr %s313, 2048
        %s315 = scalar_lea.vmem [#allocation3], %s314
        // Predicated region
        $region49: #{tpu_custom_call.1} parent=47 // pred_check
          %p316 = pneg %p49
        $region50: #{tpu_custom_call.1} parent=47 // pred_check_branch
          %318 = sbr.rel (%p316) target = $region52
        $region51: #{tpu_custom_call.1} parent=47 // pred_region
          %319 = dma.done %s312, 32768
        $region52: #{tpu_custom_call.1} parent=47 // pred_fallthru
          _
        // Predicated region
        $region53: #{tpu_custom_call.1} parent=47 // pred_check
          %p320 = pneg %p70
        $region54: #{tpu_custom_call.1} parent=47 // pred_check_branch
          %322 = sbr.rel (%p320) target = $region56
        $region55: #{tpu_custom_call.1} parent=47 // pred_region
          %323 = dma.done [#allocation7], 32768
        $region56: #{tpu_custom_call.1} parent=47 // pred_fallthru
          _
        // Predicated region
        $region57: #{tpu_custom_call.1} parent=47 // pred_check
          %p324 = pneg %p91
        $region58: #{tpu_custom_call.1} parent=47 // pred_check_branch
          %326 = sbr.rel (%p324) target = $region60
        $region59: #{tpu_custom_call.1} parent=47 // pred_region
          %327 = dma.done [#allocation7], 32
        $region60: #{tpu_custom_call.1} parent=47 // pred_fallthru
          _
        // Predicated region
        $region61: #{tpu_custom_call.1} parent=47 // pred_check
          %p328 = pneg %p112
        $region62: #{tpu_custom_call.1} parent=47 // pred_check_branch
          %330 = sbr.rel (%p328) target = $region64
        $region63: #{tpu_custom_call.1} parent=47 // pred_region
          %331 = dma.done [#allocation10], 4096
        $region64: #{tpu_custom_call.1} parent=47 // pred_fallthru
          _
        // Predicated region
        $region65: #{tpu_custom_call.1} parent=47 // pred_check
          %p332 = pneg %p133
        $region66: #{tpu_custom_call.1} parent=47 // pred_check_branch
          %334 = sbr.rel (%p332) target = $region68
        $region67: #{tpu_custom_call.1} parent=47 // pred_region
          %335 = dma.done [#allocation10], 32
        $region68: #{tpu_custom_call.1} parent=47 // pred_fallthru
          _
        // Predicated region
        $region69: #{tpu_custom_call.1} parent=47 // pred_check
          %p336 = pneg %p154
        $region70: #{tpu_custom_call.1} parent=47 // pred_check_branch
          %338 = sbr.rel (%p336) target = $region72
        $region71: #{tpu_custom_call.1} parent=47 // pred_region
          %339 = dma.done [#allocation13], 32
        $region72: #{tpu_custom_call.1} parent=47 // pred_fallthru
          _
        %s340 = sand.u32 %s36, 1
        %s341 = scalar_lea.sflag [#allocation4], %s340
        %s342 = sand.u32 %s36, 1
        %s343 = smul.addr %s342, 2048
        %s344 = scalar_lea.vmem [#allocation3], %s343
        %p345 = pneg %p49
        %p346 = pneg %p46
        %p347 = pneg %p70
        %p348 = pneg %p67
        %p349 = pneg %p91
        %p350 = pneg %p88
        %p351 = pneg %p112
        %p352 = pneg %p109
        %p353 = pneg %p133
        %p354 = pneg %p130
        %p355 = pneg %p154
        %p356 = pneg %p151
        %p357 = pneg %p175
        %p358 = pneg %p172
        %p359 = pneg %p201
        %p360 = pneg %p198
        %s361 = sand.u32 %s188, 1
        %s362 = scalar_lea.sflag [#allocation5], %s361
        %s363 = sand.u32 %s188, 1
        %s364 = scalar_lea.vmem [#allocation14], %s363
        %s365 = smul.u32 16, %s28
        %v366 = vld [vmem:[%s315] sm:$0xff]
        %v367 = vld [vmem:[%s315 + $0x8] sm:$0xff]
        %v368 = vld [vmem:[%s315 + $0x10] sm:$0xff]
        %v369 = vld [vmem:[%s315 + $0x18] sm:$0xff]
        %v370 = vld [vmem:[%s315 + $0x20] sm:$0xff]
        %v371 = vld [vmem:[%s315 + $0x28] sm:$0xff]
        %v372 = vld [vmem:[%s315 + $0x30] sm:$0xff]
        %v373 = vld [vmem:[%s315 + $0x38] sm:$0xff]
        %v374 = vld [vmem:[%s315 + $0x40] sm:$0xff]
        %v375 = vld [vmem:[%s315 + $0x48] sm:$0xff]
        %v376 = vld [vmem:[%s315 + $0x50] sm:$0xff]
        %v377 = vld [vmem:[%s315 + $0x58] sm:$0xff]
        %v378 = vld [vmem:[%s315 + $0x60] sm:$0xff]
        %v379 = vld [vmem:[%s315 + $0x68] sm:$0xff]
        %v380 = vld [vmem:[%s315 + $0x70] sm:$0xff]
        %v381 = vld [vmem:[%s315 + $0x78] sm:$0xff]
        %v382 = vld [vmem:[%s315 + $0x80] sm:$0xff]
        %v383 = vld [vmem:[%s315 + $0x88] sm:$0xff]
        %v384 = vld [vmem:[%s315 + $0x90] sm:$0xff]
        %v385 = vld [vmem:[%s315 + $0x98] sm:$0xff]
        %v386 = vld [vmem:[%s315 + $0xa0] sm:$0xff]
        %v387 = vld [vmem:[%s315 + $0xa8] sm:$0xff]
        %v388 = vld [vmem:[%s315 + $0xb0] sm:$0xff]
        %v389 = vld [vmem:[%s315 + $0xb8] sm:$0xff]
        %v390 = vld [vmem:[%s315 + $0xc0] sm:$0xff]
        %v391 = vld [vmem:[%s315 + $0xc8] sm:$0xff]
        %v392 = vld [vmem:[%s315 + $0xd0] sm:$0xff]
        %v393 = vld [vmem:[%s315 + $0xd8] sm:$0xff]
        %v394 = vld [vmem:[%s315 + $0xe0] sm:$0xff]
        %v395 = vld [vmem:[%s315 + $0xe8] sm:$0xff]
        %v396 = vld [vmem:[%s315 + $0xf0] sm:$0xff]
        %v397 = vld [vmem:[%s315 + $0xf8] sm:$0xff]
        %v398 = vld [vmem:[%s315 + $0x100] sm:$0xff]
        %v399 = vld [vmem:[%s315 + $0x108] sm:$0xff]
        %v400 = vld [vmem:[%s315 + $0x110] sm:$0xff]
        %v401 = vld [vmem:[%s315 + $0x118] sm:$0xff]
        %v402 = vld [vmem:[%s315 + $0x120] sm:$0xff]
        %v403 = vld [vmem:[%s315 + $0x128] sm:$0xff]
        %v404 = vld [vmem:[%s315 + $0x130] sm:$0xff]
        %v405 = vld [vmem:[%s315 + $0x138] sm:$0xff]
        %v406 = vld [vmem:[%s315 + $0x140] sm:$0xff]
        %v407 = vld [vmem:[%s315 + $0x148] sm:$0xff]
        %v408 = vld [vmem:[%s315 + $0x150] sm:$0xff]
        %v409 = vld [vmem:[%s315 + $0x158] sm:$0xff]
        %v410 = vld [vmem:[%s315 + $0x160] sm:$0xff]
        %v411 = vld [vmem:[%s315 + $0x168] sm:$0xff]
        %v412 = vld [vmem:[%s315 + $0x170] sm:$0xff]
        %v413 = vld [vmem:[%s315 + $0x178] sm:$0xff]
        %v414 = vld [vmem:[%s315 + $0x180] sm:$0xff]
        %v415 = vld [vmem:[%s315 + $0x188] sm:$0xff]
        %v416 = vld [vmem:[%s315 + $0x190] sm:$0xff]
        %v417 = vld [vmem:[%s315 + $0x198] sm:$0xff]
        %v418 = vld [vmem:[%s315 + $0x1a0] sm:$0xff]
        %v419 = vld [vmem:[%s315 + $0x1a8] sm:$0xff]
        %v420 = vld [vmem:[%s315 + $0x1b0] sm:$0xff]
        %v421 = vld [vmem:[%s315 + $0x1b8] sm:$0xff]
        %v422 = vld [vmem:[%s315 + $0x1c0] sm:$0xff]
        %v423 = vld [vmem:[%s315 + $0x1c8] sm:$0xff]
        %v424 = vld [vmem:[%s315 + $0x1d0] sm:$0xff]
        %v425 = vld [vmem:[%s315 + $0x1d8] sm:$0xff]
        %v426 = vld [vmem:[%s315 + $0x1e0] sm:$0xff]
        %v427 = vld [vmem:[%s315 + $0x1e8] sm:$0xff]
        %v428 = vld [vmem:[%s315 + $0x1f0] sm:$0xff]
        %v429 = vld [vmem:[%s315 + $0x1f8] sm:$0xff]
        %v430 = vld [vmem:[%s315 + $0x200] sm:$0xff]
        %v431 = vld [vmem:[%s315 + $0x208] sm:$0xff]
        %v432 = vld [vmem:[%s315 + $0x210] sm:$0xff]
        %v433 = vld [vmem:[%s315 + $0x218] sm:$0xff]
        %v434 = vld [vmem:[%s315 + $0x220] sm:$0xff]
        %v435 = vld [vmem:[%s315 + $0x228] sm:$0xff]
        %v436 = vld [vmem:[%s315 + $0x230] sm:$0xff]
        %v437 = vld [vmem:[%s315 + $0x238] sm:$0xff]
        %v438 = vld [vmem:[%s315 + $0x240] sm:$0xff]
        %v439 = vld [vmem:[%s315 + $0x248] sm:$0xff]
        %v440 = vld [vmem:[%s315 + $0x250] sm:$0xff]
        %v441 = vld [vmem:[%s315 + $0x258] sm:$0xff]
        %v442 = vld [vmem:[%s315 + $0x260] sm:$0xff]
        %v443 = vld [vmem:[%s315 + $0x268] sm:$0xff]
        %v444 = vld [vmem:[%s315 + $0x270] sm:$0xff]
        %v445 = vld [vmem:[%s315 + $0x278] sm:$0xff]
        %v446 = vld [vmem:[%s315 + $0x280] sm:$0xff]
        %v447 = vld [vmem:[%s315 + $0x288] sm:$0xff]
        %v448 = vld [vmem:[%s315 + $0x290] sm:$0xff]
        %v449 = vld [vmem:[%s315 + $0x298] sm:$0xff]
        %v450 = vld [vmem:[%s315 + $0x2a0] sm:$0xff]
        %v451 = vld [vmem:[%s315 + $0x2a8] sm:$0xff]
        %v452 = vld [vmem:[%s315 + $0x2b0] sm:$0xff]
        %v453 = vld [vmem:[%s315 + $0x2b8] sm:$0xff]
        %v454 = vld [vmem:[%s315 + $0x2c0] sm:$0xff]
        %v455 = vld [vmem:[%s315 + $0x2c8] sm:$0xff]
        %v456 = vld [vmem:[%s315 + $0x2d0] sm:$0xff]
        %v457 = vld [vmem:[%s315 + $0x2d8] sm:$0xff]
        %v458 = vld [vmem:[%s315 + $0x2e0] sm:$0xff]
        %v459 = vld [vmem:[%s315 + $0x2e8] sm:$0xff]
        %v460 = vld [vmem:[%s315 + $0x2f0] sm:$0xff]
        %v461 = vld [vmem:[%s315 + $0x2f8] sm:$0xff]
        %v462 = vld [vmem:[%s315 + $0x300] sm:$0xff]
        %v463 = vld [vmem:[%s315 + $0x308] sm:$0xff]
        %v464 = vld [vmem:[%s315 + $0x310] sm:$0xff]
        %v465 = vld [vmem:[%s315 + $0x318] sm:$0xff]
        %v466 = vld [vmem:[%s315 + $0x320] sm:$0xff]
        %v467 = vld [vmem:[%s315 + $0x328] sm:$0xff]
        %v468 = vld [vmem:[%s315 + $0x330] sm:$0xff]
        %v469 = vld [vmem:[%s315 + $0x338] sm:$0xff]
        %v470 = vld [vmem:[%s315 + $0x340] sm:$0xff]
        %v471 = vld [vmem:[%s315 + $0x348] sm:$0xff]
        %v472 = vld [vmem:[%s315 + $0x350] sm:$0xff]
        %v473 = vld [vmem:[%s315 + $0x358] sm:$0xff]
        %v474 = vld [vmem:[%s315 + $0x360] sm:$0xff]
        %v475 = vld [vmem:[%s315 + $0x368] sm:$0xff]
        %v476 = vld [vmem:[%s315 + $0x370] sm:$0xff]
        %v477 = vld [vmem:[%s315 + $0x378] sm:$0xff]
        %v478 = vld [vmem:[%s315 + $0x380] sm:$0xff]
        %v479 = vld [vmem:[%s315 + $0x388] sm:$0xff]
        %v480 = vld [vmem:[%s315 + $0x390] sm:$0xff]
        %v481 = vld [vmem:[%s315 + $0x398] sm:$0xff]
        %v482 = vld [vmem:[%s315 + $0x3a0] sm:$0xff]
        %v483 = vld [vmem:[%s315 + $0x3a8] sm:$0xff]
        %v484 = vld [vmem:[%s315 + $0x3b0] sm:$0xff]
        %v485 = vld [vmem:[%s315 + $0x3b8] sm:$0xff]
        %v486 = vld [vmem:[%s315 + $0x3c0] sm:$0xff]
        %v487 = vld [vmem:[%s315 + $0x3c8] sm:$0xff]
        %v488 = vld [vmem:[%s315 + $0x3d0] sm:$0xff]
        %v489 = vld [vmem:[%s315 + $0x3d8] sm:$0xff]
        %v490 = vld [vmem:[%s315 + $0x3e0] sm:$0xff]
        %v491 = vld [vmem:[%s315 + $0x3e8] sm:$0xff]
        %v492 = vld [vmem:[%s315 + $0x3f0] sm:$0xff]
        %v493 = vld [vmem:[%s315 + $0x3f8] sm:$0xff]
        %v494 = vld [vmem:[%s315 + $0x400] sm:$0xff]
        %v495 = vld [vmem:[%s315 + $0x408] sm:$0xff]
        %v496 = vld [vmem:[%s315 + $0x410] sm:$0xff]
        %v497 = vld [vmem:[%s315 + $0x418] sm:$0xff]
        %v498 = vld [vmem:[%s315 + $0x420] sm:$0xff]
        %v499 = vld [vmem:[%s315 + $0x428] sm:$0xff]
        %v500 = vld [vmem:[%s315 + $0x430] sm:$0xff]
        %v501 = vld [vmem:[%s315 + $0x438] sm:$0xff]
        %v502 = vld [vmem:[%s315 + $0x440] sm:$0xff]
        %v503 = vld [vmem:[%s315 + $0x448] sm:$0xff]
        %v504 = vld [vmem:[%s315 + $0x450] sm:$0xff]
        %v505 = vld [vmem:[%s315 + $0x458] sm:$0xff]
        %v506 = vld [vmem:[%s315 + $0x460] sm:$0xff]
        %v507 = vld [vmem:[%s315 + $0x468] sm:$0xff]
        %v508 = vld [vmem:[%s315 + $0x470] sm:$0xff]
        %v509 = vld [vmem:[%s315 + $0x478] sm:$0xff]
        %v510 = vld [vmem:[%s315 + $0x480] sm:$0xff]
        %v511 = vld [vmem:[%s315 + $0x488] sm:$0xff]
        %v512 = vld [vmem:[%s315 + $0x490] sm:$0xff]
        %v513 = vld [vmem:[%s315 + $0x498] sm:$0xff]
        %v514 = vld [vmem:[%s315 + $0x4a0] sm:$0xff]
        %v515 = vld [vmem:[%s315 + $0x4a8] sm:$0xff]
        %v516 = vld [vmem:[%s315 + $0x4b0] sm:$0xff]
        %v517 = vld [vmem:[%s315 + $0x4b8] sm:$0xff]
        %v518 = vld [vmem:[%s315 + $0x4c0] sm:$0xff]
        %v519 = vld [vmem:[%s315 + $0x4c8] sm:$0xff]
        %v520 = vld [vmem:[%s315 + $0x4d0] sm:$0xff]
        %v521 = vld [vmem:[%s315 + $0x4d8] sm:$0xff]
        %v522 = vld [vmem:[%s315 + $0x4e0] sm:$0xff]
        %v523 = vld [vmem:[%s315 + $0x4e8] sm:$0xff]
        %v524 = vld [vmem:[%s315 + $0x4f0] sm:$0xff]
        %v525 = vld [vmem:[%s315 + $0x4f8] sm:$0xff]
        %v526 = vld [vmem:[%s315 + $0x500] sm:$0xff]
        %v527 = vld [vmem:[%s315 + $0x508] sm:$0xff]
        %v528 = vld [vmem:[%s315 + $0x510] sm:$0xff]
        %v529 = vld [vmem:[%s315 + $0x518] sm:$0xff]
        %v530 = vld [vmem:[%s315 + $0x520] sm:$0xff]
        %v531 = vld [vmem:[%s315 + $0x528] sm:$0xff]
        %v532 = vld [vmem:[%s315 + $0x530] sm:$0xff]
        %v533 = vld [vmem:[%s315 + $0x538] sm:$0xff]
        %v534 = vld [vmem:[%s315 + $0x540] sm:$0xff]
        %v535 = vld [vmem:[%s315 + $0x548] sm:$0xff]
        %v536 = vld [vmem:[%s315 + $0x550] sm:$0xff]
        %v537 = vld [vmem:[%s315 + $0x558] sm:$0xff]
        %v538 = vld [vmem:[%s315 + $0x560] sm:$0xff]
        %v539 = vld [vmem:[%s315 + $0x568] sm:$0xff]
        %v540 = vld [vmem:[%s315 + $0x570] sm:$0xff]
        %v541 = vld [vmem:[%s315 + $0x578] sm:$0xff]
        %v542 = vld [vmem:[%s315 + $0x580] sm:$0xff]
        %v543 = vld [vmem:[%s315 + $0x588] sm:$0xff]
        %v544 = vld [vmem:[%s315 + $0x590] sm:$0xff]
        %v545 = vld [vmem:[%s315 + $0x598] sm:$0xff]
        %v546 = vld [vmem:[%s315 + $0x5a0] sm:$0xff]
        %v547 = vld [vmem:[%s315 + $0x5a8] sm:$0xff]
        %v548 = vld [vmem:[%s315 + $0x5b0] sm:$0xff]
        %v549 = vld [vmem:[%s315 + $0x5b8] sm:$0xff]
        %v550 = vld [vmem:[%s315 + $0x5c0] sm:$0xff]
        %v551 = vld [vmem:[%s315 + $0x5c8] sm:$0xff]
        %v552 = vld [vmem:[%s315 + $0x5d0] sm:$0xff]
        %v553 = vld [vmem:[%s315 + $0x5d8] sm:$0xff]
        %v554 = vld [vmem:[%s315 + $0x5e0] sm:$0xff]
        %v555 = vld [vmem:[%s315 + $0x5e8] sm:$0xff]
        %v556 = vld [vmem:[%s315 + $0x5f0] sm:$0xff]
        %v557 = vld [vmem:[%s315 + $0x5f8] sm:$0xff]
        %v558 = vld [vmem:[%s315 + $0x600] sm:$0xff]
        %v559 = vld [vmem:[%s315 + $0x608] sm:$0xff]
        %v560 = vld [vmem:[%s315 + $0x610] sm:$0xff]
        %v561 = vld [vmem:[%s315 + $0x618] sm:$0xff]
        %v562 = vld [vmem:[%s315 + $0x620] sm:$0xff]
        %v563 = vld [vmem:[%s315 + $0x628] sm:$0xff]
        %v564 = vld [vmem:[%s315 + $0x630] sm:$0xff]
        %v565 = vld [vmem:[%s315 + $0x638] sm:$0xff]
        %v566 = vld [vmem:[%s315 + $0x640] sm:$0xff]
        %v567 = vld [vmem:[%s315 + $0x648] sm:$0xff]
        %v568 = vld [vmem:[%s315 + $0x650] sm:$0xff]
        %v569 = vld [vmem:[%s315 + $0x658] sm:$0xff]
        %v570 = vld [vmem:[%s315 + $0x660] sm:$0xff]
        %v571 = vld [vmem:[%s315 + $0x668] sm:$0xff]
        %v572 = vld [vmem:[%s315 + $0x670] sm:$0xff]
        %v573 = vld [vmem:[%s315 + $0x678] sm:$0xff]
        %v574 = vld [vmem:[%s315 + $0x680] sm:$0xff]
        %v575 = vld [vmem:[%s315 + $0x688] sm:$0xff]
        %v576 = vld [vmem:[%s315 + $0x690] sm:$0xff]
        %v577 = vld [vmem:[%s315 + $0x698] sm:$0xff]
        %v578 = vld [vmem:[%s315 + $0x6a0] sm:$0xff]
        %v579 = vld [vmem:[%s315 + $0x6a8] sm:$0xff]
        %v580 = vld [vmem:[%s315 + $0x6b0] sm:$0xff]
        %v581 = vld [vmem:[%s315 + $0x6b8] sm:$0xff]
        %v582 = vld [vmem:[%s315 + $0x6c0] sm:$0xff]
        %v583 = vld [vmem:[%s315 + $0x6c8] sm:$0xff]
        %v584 = vld [vmem:[%s315 + $0x6d0] sm:$0xff]
        %v585 = vld [vmem:[%s315 + $0x6d8] sm:$0xff]
        %v586 = vld [vmem:[%s315 + $0x6e0] sm:$0xff]
        %v587 = vld [vmem:[%s315 + $0x6e8] sm:$0xff]
        %v588 = vld [vmem:[%s315 + $0x6f0] sm:$0xff]
        %v589 = vld [vmem:[%s315 + $0x6f8] sm:$0xff]
        %v590 = vld [vmem:[%s315 + $0x700] sm:$0xff]
        %v591 = vld [vmem:[%s315 + $0x708] sm:$0xff]
        %v592 = vld [vmem:[%s315 + $0x710] sm:$0xff]
        %v593 = vld [vmem:[%s315 + $0x718] sm:$0xff]
        %v594 = vld [vmem:[%s315 + $0x720] sm:$0xff]
        %v595 = vld [vmem:[%s315 + $0x728] sm:$0xff]
        %v596 = vld [vmem:[%s315 + $0x730] sm:$0xff]
        %v597 = vld [vmem:[%s315 + $0x738] sm:$0xff]
        %v598 = vld [vmem:[%s315 + $0x740] sm:$0xff]
        %v599 = vld [vmem:[%s315 + $0x748] sm:$0xff]
        %v600 = vld [vmem:[%s315 + $0x750] sm:$0xff]
        %v601 = vld [vmem:[%s315 + $0x758] sm:$0xff]
        %v602 = vld [vmem:[%s315 + $0x760] sm:$0xff]
        %v603 = vld [vmem:[%s315 + $0x768] sm:$0xff]
        %v604 = vld [vmem:[%s315 + $0x770] sm:$0xff]
        %v605 = vld [vmem:[%s315 + $0x778] sm:$0xff]
        %v606 = vld [vmem:[%s315 + $0x780] sm:$0xff]
        %v607 = vld [vmem:[%s315 + $0x788] sm:$0xff]
        %v608 = vld [vmem:[%s315 + $0x790] sm:$0xff]
        %v609 = vld [vmem:[%s315 + $0x798] sm:$0xff]
        %v610 = vld [vmem:[%s315 + $0x7a0] sm:$0xff]
        %v611 = vld [vmem:[%s315 + $0x7a8] sm:$0xff]
        %v612 = vld [vmem:[%s315 + $0x7b0] sm:$0xff]
        %v613 = vld [vmem:[%s315 + $0x7b8] sm:$0xff]
        %v614 = vld [vmem:[%s315 + $0x7c0] sm:$0xff]
        %v615 = vld [vmem:[%s315 + $0x7c8] sm:$0xff]
        %v616 = vld [vmem:[%s315 + $0x7d0] sm:$0xff]
        %v617 = vld [vmem:[%s315 + $0x7d8] sm:$0xff]
        %v618 = vld [vmem:[%s315 + $0x7e0] sm:$0xff]
        %v619 = vld [vmem:[%s315 + $0x7e8] sm:$0xff]
        %v620 = vld [vmem:[%s315 + $0x7f0] sm:$0xff]
        %v621 = vld [vmem:[%s315 + $0x7f8] sm:$0xff]
        %v622 = vpack.c.bf16 %v382, %v366
        %v623 = vpack.c.bf16 %v383, %v367
        %v624 = vpack.c.bf16 %v384, %v368
        %v625 = vpack.c.bf16 %v385, %v369
        %v626 = vpack.c.bf16 %v386, %v370
        %v627 = vpack.c.bf16 %v387, %v371
        %v628 = vpack.c.bf16 %v388, %v372
        %v629 = vpack.c.bf16 %v389, %v373
        %v630 = vpack.c.bf16 %v390, %v374
        %v631 = vpack.c.bf16 %v391, %v375
        %v632 = vpack.c.bf16 %v392, %v376
        %v633 = vpack.c.bf16 %v393, %v377
        %v634 = vpack.c.bf16 %v394, %v378
        %v635 = vpack.c.bf16 %v395, %v379
        %v636 = vpack.c.bf16 %v396, %v380
        %v637 = vpack.c.bf16 %v397, %v381
        %v638 = vpack.c.bf16 %v414, %v398
        %v639 = vpack.c.bf16 %v415, %v399
        %v640 = vpack.c.bf16 %v416, %v400
        %v641 = vpack.c.bf16 %v417, %v401
        %v642 = vpack.c.bf16 %v418, %v402
        %v643 = vpack.c.bf16 %v419, %v403
        %v644 = vpack.c.bf16 %v420, %v404
        %v645 = vpack.c.bf16 %v421, %v405
        %v646 = vpack.c.bf16 %v422, %v406
        %v647 = vpack.c.bf16 %v423, %v407
        %v648 = vpack.c.bf16 %v424, %v408
        %v649 = vpack.c.bf16 %v425, %v409
        %v650 = vpack.c.bf16 %v426, %v410
        %v651 = vpack.c.bf16 %v427, %v411
        %v652 = vpack.c.bf16 %v428, %v412
        %v653 = vpack.c.bf16 %v429, %v413
        %v654 = vpack.c.bf16 %v446, %v430
        %v655 = vpack.c.bf16 %v447, %v431
        %v656 = vpack.c.bf16 %v448, %v432
        %v657 = vpack.c.bf16 %v449, %v433
        %v658 = vpack.c.bf16 %v450, %v434
        %v659 = vpack.c.bf16 %v451, %v435
        %v660 = vpack.c.bf16 %v452, %v436
        %v661 = vpack.c.bf16 %v453, %v437
        %v662 = vpack.c.bf16 %v454, %v438
        %v663 = vpack.c.bf16 %v455, %v439
        %v664 = vpack.c.bf16 %v456, %v440
        %v665 = vpack.c.bf16 %v457, %v441
        %v666 = vpack.c.bf16 %v458, %v442
        %v667 = vpack.c.bf16 %v459, %v443
        %v668 = vpack.c.bf16 %v460, %v444
        %v669 = vpack.c.bf16 %v461, %v445
        %v670 = vpack.c.bf16 %v478, %v462
        %v671 = vpack.c.bf16 %v479, %v463
        %v672 = vpack.c.bf16 %v480, %v464
        %v673 = vpack.c.bf16 %v481, %v465
        %v674 = vpack.c.bf16 %v482, %v466
        %v675 = vpack.c.bf16 %v483, %v467
        %v676 = vpack.c.bf16 %v484, %v468
        %v677 = vpack.c.bf16 %v485, %v469
        %v678 = vpack.c.bf16 %v486, %v470
        %v679 = vpack.c.bf16 %v487, %v471
        %v680 = vpack.c.bf16 %v488, %v472
        %v681 = vpack.c.bf16 %v489, %v473
        %v682 = vpack.c.bf16 %v490, %v474
        %v683 = vpack.c.bf16 %v491, %v475
        %v684 = vpack.c.bf16 %v492, %v476
        %v685 = vpack.c.bf16 %v493, %v477
        %v686 = vpack.c.bf16 %v510, %v494
        %v687 = vpack.c.bf16 %v511, %v495
        %v688 = vpack.c.bf16 %v512, %v496
        %v689 = vpack.c.bf16 %v513, %v497
        %v690 = vpack.c.bf16 %v514, %v498
        %v691 = vpack.c.bf16 %v515, %v499
        %v692 = vpack.c.bf16 %v516, %v500
        %v693 = vpack.c.bf16 %v517, %v501
        %v694 = vpack.c.bf16 %v518, %v502
        %v695 = vpack.c.bf16 %v519, %v503
        %v696 = vpack.c.bf16 %v520, %v504
        %v697 = vpack.c.bf16 %v521, %v505
        %v698 = vpack.c.bf16 %v522, %v506
        %v699 = vpack.c.bf16 %v523, %v507
        %v700 = vpack.c.bf16 %v524, %v508
        %v701 = vpack.c.bf16 %v525, %v509
        %v702 = vpack.c.bf16 %v542, %v526
        %v703 = vpack.c.bf16 %v543, %v527
        %v704 = vpack.c.bf16 %v544, %v528
        %v705 = vpack.c.bf16 %v545, %v529
        %v706 = vpack.c.bf16 %v546, %v530
        %v707 = vpack.c.bf16 %v547, %v531
        %v708 = vpack.c.bf16 %v548, %v532
        %v709 = vpack.c.bf16 %v549, %v533
        %v710 = vpack.c.bf16 %v550, %v534
        %v711 = vpack.c.bf16 %v551, %v535
        %v712 = vpack.c.bf16 %v552, %v536
        %v713 = vpack.c.bf16 %v553, %v537
        %v714 = vpack.c.bf16 %v554, %v538
        %v715 = vpack.c.bf16 %v555, %v539
        %v716 = vpack.c.bf16 %v556, %v540
        %v717 = vpack.c.bf16 %v557, %v541
        %v718 = vpack.c.bf16 %v574, %v558
        %v719 = vpack.c.bf16 %v575, %v559
        %v720 = vpack.c.bf16 %v576, %v560
        %v721 = vpack.c.bf16 %v577, %v561
        %v722 = vpack.c.bf16 %v578, %v562
        %v723 = vpack.c.bf16 %v579, %v563
        %v724 = vpack.c.bf16 %v580, %v564
        %v725 = vpack.c.bf16 %v581, %v565
        %v726 = vpack.c.bf16 %v582, %v566
        %v727 = vpack.c.bf16 %v583, %v567
        %v728 = vpack.c.bf16 %v584, %v568
        %v729 = vpack.c.bf16 %v585, %v569
        %v730 = vpack.c.bf16 %v586, %v570
        %v731 = vpack.c.bf16 %v587, %v571
        %v732 = vpack.c.bf16 %v588, %v572
        %v733 = vpack.c.bf16 %v589, %v573
        %v734 = vpack.c.bf16 %v606, %v590
        %v735 = vpack.c.bf16 %v607, %v591
        %v736 = vpack.c.bf16 %v608, %v592
        %v737 = vpack.c.bf16 %v609, %v593
        %v738 = vpack.c.bf16 %v610, %v594
        %v739 = vpack.c.bf16 %v611, %v595
        %v740 = vpack.c.bf16 %v612, %v596
        %v741 = vpack.c.bf16 %v613, %v597
        %v742 = vpack.c.bf16 %v614, %v598
        %v743 = vpack.c.bf16 %v615, %v599
        %v744 = vpack.c.bf16 %v616, %v600
        %v745 = vpack.c.bf16 %v617, %v601
        %v746 = vpack.c.bf16 %v618, %v602
        %v747 = vpack.c.bf16 %v619, %v603
        %v748 = vpack.c.bf16 %v620, %v604
        %v749 = vpack.c.bf16 %v621, %v605
        %v750 = vld [vmem:[#allocation6] sm:$0xff]
        %v751 = vld [vmem:[#allocation6 + $0x8] sm:$0xff]
        %v752 = vld [vmem:[#allocation6 + $0x10] sm:$0xff]
        %v753 = vld [vmem:[#allocation6 + $0x18] sm:$0xff]
        %v754 = vld [vmem:[#allocation6 + $0x20] sm:$0xff]
        %v755 = vld [vmem:[#allocation6 + $0x28] sm:$0xff]
        %v756 = vld [vmem:[#allocation6 + $0x30] sm:$0xff]
        %v757 = vld [vmem:[#allocation6 + $0x38] sm:$0xff]
        %v758 = vld [vmem:[#allocation6 + $0x40] sm:$0xff]
        %v759 = vld [vmem:[#allocation6 + $0x48] sm:$0xff]
        %v760 = vld [vmem:[#allocation6 + $0x50] sm:$0xff]
        %v761 = vld [vmem:[#allocation6 + $0x58] sm:$0xff]
        %v762 = vld [vmem:[#allocation6 + $0x60] sm:$0xff]
        %v763 = vld [vmem:[#allocation6 + $0x68] sm:$0xff]
        %v764 = vld [vmem:[#allocation6 + $0x70] sm:$0xff]
        %v765 = vld [vmem:[#allocation6 + $0x78] sm:$0xff]
        %v766 = vld [vmem:[#allocation6 + $0x80] sm:$0xff]
        %v767 = vld [vmem:[#allocation6 + $0x88] sm:$0xff]
        %v768 = vld [vmem:[#allocation6 + $0x90] sm:$0xff]
        %v769 = vld [vmem:[#allocation6 + $0x98] sm:$0xff]
        %v770 = vld [vmem:[#allocation6 + $0xa0] sm:$0xff]
        %v771 = vld [vmem:[#allocation6 + $0xa8] sm:$0xff]
        %v772 = vld [vmem:[#allocation6 + $0xb0] sm:$0xff]
        %v773 = vld [vmem:[#allocation6 + $0xb8] sm:$0xff]
        %v774 = vld [vmem:[#allocation6 + $0xc0] sm:$0xff]
        %v775 = vld [vmem:[#allocation6 + $0xc8] sm:$0xff]
        %v776 = vld [vmem:[#allocation6 + $0xd0] sm:$0xff]
        %v777 = vld [vmem:[#allocation6 + $0xd8] sm:$0xff]
        %v778 = vld [vmem:[#allocation6 + $0xe0] sm:$0xff]
        %v779 = vld [vmem:[#allocation6 + $0xe8] sm:$0xff]
        %v780 = vld [vmem:[#allocation6 + $0xf0] sm:$0xff]
        %v781 = vld [vmem:[#allocation6 + $0xf8] sm:$0xff]
        %v782 = vld [vmem:[#allocation6 + $0x100] sm:$0xff]
        %v783 = vld [vmem:[#allocation6 + $0x108] sm:$0xff]
        %v784 = vld [vmem:[#allocation6 + $0x110] sm:$0xff]
        %v785 = vld [vmem:[#allocation6 + $0x118] sm:$0xff]
        %v786 = vld [vmem:[#allocation6 + $0x120] sm:$0xff]
        %v787 = vld [vmem:[#allocation6 + $0x128] sm:$0xff]
        %v788 = vld [vmem:[#allocation6 + $0x130] sm:$0xff]
        %v789 = vld [vmem:[#allocation6 + $0x138] sm:$0xff]
        %v790 = vld [vmem:[#allocation6 + $0x140] sm:$0xff]
        %v791 = vld [vmem:[#allocation6 + $0x148] sm:$0xff]
        %v792 = vld [vmem:[#allocation6 + $0x150] sm:$0xff]
        %v793 = vld [vmem:[#allocation6 + $0x158] sm:$0xff]
        %v794 = vld [vmem:[#allocation6 + $0x160] sm:$0xff]
        %v795 = vld [vmem:[#allocation6 + $0x168] sm:$0xff]
        %v796 = vld [vmem:[#allocation6 + $0x170] sm:$0xff]
        %v797 = vld [vmem:[#allocation6 + $0x178] sm:$0xff]
        %v798 = vld [vmem:[#allocation6 + $0x180] sm:$0xff]
        %v799 = vld [vmem:[#allocation6 + $0x188] sm:$0xff]
        %v800 = vld [vmem:[#allocation6 + $0x190] sm:$0xff]
        %v801 = vld [vmem:[#allocation6 + $0x198] sm:$0xff]
        %v802 = vld [vmem:[#allocation6 + $0x1a0] sm:$0xff]
        %v803 = vld [vmem:[#allocation6 + $0x1a8] sm:$0xff]
        %v804 = vld [vmem:[#allocation6 + $0x1b0] sm:$0xff]
        %v805 = vld [vmem:[#allocation6 + $0x1b8] sm:$0xff]
        %v806 = vld [vmem:[#allocation6 + $0x1c0] sm:$0xff]
        %v807 = vld [vmem:[#allocation6 + $0x1c8] sm:$0xff]
        %v808 = vld [vmem:[#allocation6 + $0x1d0] sm:$0xff]
        %v809 = vld [vmem:[#allocation6 + $0x1d8] sm:$0xff]
        %v810 = vld [vmem:[#allocation6 + $0x1e0] sm:$0xff]
        %v811 = vld [vmem:[#allocation6 + $0x1e8] sm:$0xff]
        %v812 = vld [vmem:[#allocation6 + $0x1f0] sm:$0xff]
        %v813 = vld [vmem:[#allocation6 + $0x1f8] sm:$0xff]
        %v814 = vld [vmem:[#allocation6 + $0x200] sm:$0xff]
        %v815 = vld [vmem:[#allocation6 + $0x208] sm:$0xff]
        %v816 = vld [vmem:[#allocation6 + $0x210] sm:$0xff]
        %v817 = vld [vmem:[#allocation6 + $0x218] sm:$0xff]
        %v818 = vld [vmem:[#allocation6 + $0x220] sm:$0xff]
        %v819 = vld [vmem:[#allocation6 + $0x228] sm:$0xff]
        %v820 = vld [vmem:[#allocation6 + $0x230] sm:$0xff]
        %v821 = vld [vmem:[#allocation6 + $0x238] sm:$0xff]
        %v822 = vld [vmem:[#allocation6 + $0x240] sm:$0xff]
        %v823 = vld [vmem:[#allocation6 + $0x248] sm:$0xff]
        %v824 = vld [vmem:[#allocation6 + $0x250] sm:$0xff]
        %v825 = vld [vmem:[#allocation6 + $0x258] sm:$0xff]
        %v826 = vld [vmem:[#allocation6 + $0x260] sm:$0xff]
        %v827 = vld [vmem:[#allocation6 + $0x268] sm:$0xff]
        %v828 = vld [vmem:[#allocation6 + $0x270] sm:$0xff]
        %v829 = vld [vmem:[#allocation6 + $0x278] sm:$0xff]
        %v830 = vld [vmem:[#allocation6 + $0x280] sm:$0xff]
        %v831 = vld [vmem:[#allocation6 + $0x288] sm:$0xff]
        %v832 = vld [vmem:[#allocation6 + $0x290] sm:$0xff]
        %v833 = vld [vmem:[#allocation6 + $0x298] sm:$0xff]
        %v834 = vld [vmem:[#allocation6 + $0x2a0] sm:$0xff]
        %v835 = vld [vmem:[#allocation6 + $0x2a8] sm:$0xff]
        %v836 = vld [vmem:[#allocation6 + $0x2b0] sm:$0xff]
        %v837 = vld [vmem:[#allocation6 + $0x2b8] sm:$0xff]
        %v838 = vld [vmem:[#allocation6 + $0x2c0] sm:$0xff]
        %v839 = vld [vmem:[#allocation6 + $0x2c8] sm:$0xff]
        %v840 = vld [vmem:[#allocation6 + $0x2d0] sm:$0xff]
        %v841 = vld [vmem:[#allocation6 + $0x2d8] sm:$0xff]
        %v842 = vld [vmem:[#allocation6 + $0x2e0] sm:$0xff]
        %v843 = vld [vmem:[#allocation6 + $0x2e8] sm:$0xff]
        %v844 = vld [vmem:[#allocation6 + $0x2f0] sm:$0xff]
        %v845 = vld [vmem:[#allocation6 + $0x2f8] sm:$0xff]
        %v846 = vld [vmem:[#allocation6 + $0x300] sm:$0xff]
        %v847 = vld [vmem:[#allocation6 + $0x308] sm:$0xff]
        %v848 = vld [vmem:[#allocation6 + $0x310] sm:$0xff]
        %v849 = vld [vmem:[#allocation6 + $0x318] sm:$0xff]
        %v850 = vld [vmem:[#allocation6 + $0x320] sm:$0xff]
        %v851 = vld [vmem:[#allocation6 + $0x328] sm:$0xff]
        %v852 = vld [vmem:[#allocation6 + $0x330] sm:$0xff]
        %v853 = vld [vmem:[#allocation6 + $0x338] sm:$0xff]
        %v854 = vld [vmem:[#allocation6 + $0x340] sm:$0xff]
        %v855 = vld [vmem:[#allocation6 + $0x348] sm:$0xff]
        %v856 = vld [vmem:[#allocation6 + $0x350] sm:$0xff]
        %v857 = vld [vmem:[#allocation6 + $0x358] sm:$0xff]
        %v858 = vld [vmem:[#allocation6 + $0x360] sm:$0xff]
        %v859 = vld [vmem:[#allocation6 + $0x368] sm:$0xff]
        %v860 = vld [vmem:[#allocation6 + $0x370] sm:$0xff]
        %v861 = vld [vmem:[#allocation6 + $0x378] sm:$0xff]
        %v862 = vld [vmem:[#allocation6 + $0x380] sm:$0xff]
        %v863 = vld [vmem:[#allocation6 + $0x388] sm:$0xff]
        %v864 = vld [vmem:[#allocation6 + $0x390] sm:$0xff]
        %v865 = vld [vmem:[#allocation6 + $0x398] sm:$0xff]
        %v866 = vld [vmem:[#allocation6 + $0x3a0] sm:$0xff]
        %v867 = vld [vmem:[#allocation6 + $0x3a8] sm:$0xff]
        %v868 = vld [vmem:[#allocation6 + $0x3b0] sm:$0xff]
        %v869 = vld [vmem:[#allocation6 + $0x3b8] sm:$0xff]
        %v870 = vld [vmem:[#allocation6 + $0x3c0] sm:$0xff]
        %v871 = vld [vmem:[#allocation6 + $0x3c8] sm:$0xff]
        %v872 = vld [vmem:[#allocation6 + $0x3d0] sm:$0xff]
        %v873 = vld [vmem:[#allocation6 + $0x3d8] sm:$0xff]
        %v874 = vld [vmem:[#allocation6 + $0x3e0] sm:$0xff]
        %v875 = vld [vmem:[#allocation6 + $0x3e8] sm:$0xff]
        %v876 = vld [vmem:[#allocation6 + $0x3f0] sm:$0xff]
        %v877 = vld [vmem:[#allocation6 + $0x3f8] sm:$0xff]
        %v878 = vld [vmem:[#allocation6 + $0x400] sm:$0xff]
        %v879 = vld [vmem:[#allocation6 + $0x408] sm:$0xff]
        %v880 = vld [vmem:[#allocation6 + $0x410] sm:$0xff]
        %v881 = vld [vmem:[#allocation6 + $0x418] sm:$0xff]
        %v882 = vld [vmem:[#allocation6 + $0x420] sm:$0xff]
        %v883 = vld [vmem:[#allocation6 + $0x428] sm:$0xff]
        %v884 = vld [vmem:[#allocation6 + $0x430] sm:$0xff]
        %v885 = vld [vmem:[#allocation6 + $0x438] sm:$0xff]
        %v886 = vld [vmem:[#allocation6 + $0x440] sm:$0xff]
        %v887 = vld [vmem:[#allocation6 + $0x448] sm:$0xff]
        %v888 = vld [vmem:[#allocation6 + $0x450] sm:$0xff]
        %v889 = vld [vmem:[#allocation6 + $0x458] sm:$0xff]
        %v890 = vld [vmem:[#allocation6 + $0x460] sm:$0xff]
        %v891 = vld [vmem:[#allocation6 + $0x468] sm:$0xff]
        %v892 = vld [vmem:[#allocation6 + $0x470] sm:$0xff]
        %v893 = vld [vmem:[#allocation6 + $0x478] sm:$0xff]
        %v894 = vld [vmem:[#allocation6 + $0x480] sm:$0xff]
        %v895 = vld [vmem:[#allocation6 + $0x488] sm:$0xff]
        %v896 = vld [vmem:[#allocation6 + $0x490] sm:$0xff]
        %v897 = vld [vmem:[#allocation6 + $0x498] sm:$0xff]
        %v898 = vld [vmem:[#allocation6 + $0x4a0] sm:$0xff]
        %v899 = vld [vmem:[#allocation6 + $0x4a8] sm:$0xff]
        %v900 = vld [vmem:[#allocation6 + $0x4b0] sm:$0xff]
        %v901 = vld [vmem:[#allocation6 + $0x4b8] sm:$0xff]
        %v902 = vld [vmem:[#allocation6 + $0x4c0] sm:$0xff]
        %v903 = vld [vmem:[#allocation6 + $0x4c8] sm:$0xff]
        %v904 = vld [vmem:[#allocation6 + $0x4d0] sm:$0xff]
        %v905 = vld [vmem:[#allocation6 + $0x4d8] sm:$0xff]
        %v906 = vld [vmem:[#allocation6 + $0x4e0] sm:$0xff]
        %v907 = vld [vmem:[#allocation6 + $0x4e8] sm:$0xff]
        %v908 = vld [vmem:[#allocation6 + $0x4f0] sm:$0xff]
        %v909 = vld [vmem:[#allocation6 + $0x4f8] sm:$0xff]
        %v910 = vld [vmem:[#allocation6 + $0x500] sm:$0xff]
        %v911 = vld [vmem:[#allocation6 + $0x508] sm:$0xff]
        %v912 = vld [vmem:[#allocation6 + $0x510] sm:$0xff]
        %v913 = vld [vmem:[#allocation6 + $0x518] sm:$0xff]
        %v914 = vld [vmem:[#allocation6 + $0x520] sm:$0xff]
        %v915 = vld [vmem:[#allocation6 + $0x528] sm:$0xff]
        %v916 = vld [vmem:[#allocation6 + $0x530] sm:$0xff]
        %v917 = vld [vmem:[#allocation6 + $0x538] sm:$0xff]
        %v918 = vld [vmem:[#allocation6 + $0x540] sm:$0xff]
        %v919 = vld [vmem:[#allocation6 + $0x548] sm:$0xff]
        %v920 = vld [vmem:[#allocation6 + $0x550] sm:$0xff]
        %v921 = vld [vmem:[#allocation6 + $0x558] sm:$0xff]
        %v922 = vld [vmem:[#allocation6 + $0x560] sm:$0xff]
        %v923 = vld [vmem:[#allocation6 + $0x568] sm:$0xff]
        %v924 = vld [vmem:[#allocation6 + $0x570] sm:$0xff]
        %v925 = vld [vmem:[#allocation6 + $0x578] sm:$0xff]
        %v926 = vld [vmem:[#allocation6 + $0x580] sm:$0xff]
        %v927 = vld [vmem:[#allocation6 + $0x588] sm:$0xff]
        %v928 = vld [vmem:[#allocation6 + $0x590] sm:$0xff]
        %v929 = vld [vmem:[#allocation6 + $0x598] sm:$0xff]
        %v930 = vld [vmem:[#allocation6 + $0x5a0] sm:$0xff]
        %v931 = vld [vmem:[#allocation6 + $0x5a8] sm:$0xff]
        %v932 = vld [vmem:[#allocation6 + $0x5b0] sm:$0xff]
        %v933 = vld [vmem:[#allocation6 + $0x5b8] sm:$0xff]
        %v934 = vld [vmem:[#allocation6 + $0x5c0] sm:$0xff]
        %v935 = vld [vmem:[#allocation6 + $0x5c8] sm:$0xff]
        %v936 = vld [vmem:[#allocation6 + $0x5d0] sm:$0xff]
        %v937 = vld [vmem:[#allocation6 + $0x5d8] sm:$0xff]
        %v938 = vld [vmem:[#allocation6 + $0x5e0] sm:$0xff]
        %v939 = vld [vmem:[#allocation6 + $0x5e8] sm:$0xff]
        %v940 = vld [vmem:[#allocation6 + $0x5f0] sm:$0xff]
        %v941 = vld [vmem:[#allocation6 + $0x5f8] sm:$0xff]
        %v942 = vld [vmem:[#allocation6 + $0x600] sm:$0xff]
        %v943 = vld [vmem:[#allocation6 + $0x608] sm:$0xff]
        %v944 = vld [vmem:[#allocation6 + $0x610] sm:$0xff]
        %v945 = vld [vmem:[#allocation6 + $0x618] sm:$0xff]
        %v946 = vld [vmem:[#allocation6 + $0x620] sm:$0xff]
        %v947 = vld [vmem:[#allocation6 + $0x628] sm:$0xff]
        %v948 = vld [vmem:[#allocation6 + $0x630] sm:$0xff]
        %v949 = vld [vmem:[#allocation6 + $0x638] sm:$0xff]
        %v950 = vld [vmem:[#allocation6 + $0x640] sm:$0xff]
        %v951 = vld [vmem:[#allocation6 + $0x648] sm:$0xff]
        %v952 = vld [vmem:[#allocation6 + $0x650] sm:$0xff]
        %v953 = vld [vmem:[#allocation6 + $0x658] sm:$0xff]
        %v954 = vld [vmem:[#allocation6 + $0x660] sm:$0xff]
        %v955 = vld [vmem:[#allocation6 + $0x668] sm:$0xff]
        %v956 = vld [vmem:[#allocation6 + $0x670] sm:$0xff]
        %v957 = vld [vmem:[#allocation6 + $0x678] sm:$0xff]
        %v958 = vld [vmem:[#allocation6 + $0x680] sm:$0xff]
        %v959 = vld [vmem:[#allocation6 + $0x688] sm:$0xff]
        %v960 = vld [vmem:[#allocation6 + $0x690] sm:$0xff]
        %v961 = vld [vmem:[#allocation6 + $0x698] sm:$0xff]
        %v962 = vld [vmem:[#allocation6 + $0x6a0] sm:$0xff]
        %v963 = vld [vmem:[#allocation6 + $0x6a8] sm:$0xff]
        %v964 = vld [vmem:[#allocation6 + $0x6b0] sm:$0xff]
        %v965 = vld [vmem:[#allocation6 + $0x6b8] sm:$0xff]
        %v966 = vld [vmem:[#allocation6 + $0x6c0] sm:$0xff]
        %v967 = vld [vmem:[#allocation6 + $0x6c8] sm:$0xff]
        %v968 = vld [vmem:[#allocation6 + $0x6d0] sm:$0xff]
        %v969 = vld [vmem:[#allocation6 + $0x6d8] sm:$0xff]
        %v970 = vld [vmem:[#allocation6 + $0x6e0] sm:$0xff]
        %v971 = vld [vmem:[#allocation6 + $0x6e8] sm:$0xff]
        %v972 = vld [vmem:[#allocation6 + $0x6f0] sm:$0xff]
        %v973 = vld [vmem:[#allocation6 + $0x6f8] sm:$0xff]
        %v974 = vld [vmem:[#allocation6 + $0x700] sm:$0xff]
        %v975 = vld [vmem:[#allocation6 + $0x708] sm:$0xff]
        %v976 = vld [vmem:[#allocation6 + $0x710] sm:$0xff]
        %v977 = vld [vmem:[#allocation6 + $0x718] sm:$0xff]
        %v978 = vld [vmem:[#allocation6 + $0x720] sm:$0xff]
        %v979 = vld [vmem:[#allocation6 + $0x728] sm:$0xff]
        %v980 = vld [vmem:[#allocation6 + $0x730] sm:$0xff]
        %v981 = vld [vmem:[#allocation6 + $0x738] sm:$0xff]
        %v982 = vld [vmem:[#allocation6 + $0x740] sm:$0xff]
        %v983 = vld [vmem:[#allocation6 + $0x748] sm:$0xff]
        %v984 = vld [vmem:[#allocation6 + $0x750] sm:$0xff]
        %v985 = vld [vmem:[#allocation6 + $0x758] sm:$0xff]
        %v986 = vld [vmem:[#allocation6 + $0x760] sm:$0xff]
        %v987 = vld [vmem:[#allocation6 + $0x768] sm:$0xff]
        %v988 = vld [vmem:[#allocation6 + $0x770] sm:$0xff]
        %v989 = vld [vmem:[#allocation6 + $0x778] sm:$0xff]
        %v990 = vld [vmem:[#allocation6 + $0x780] sm:$0xff]
        %v991 = vld [vmem:[#allocation6 + $0x788] sm:$0xff]
        %v992 = vld [vmem:[#allocation6 + $0x790] sm:$0xff]
        %v993 = vld [vmem:[#allocation6 + $0x798] sm:$0xff]
        %v994 = vld [vmem:[#allocation6 + $0x7a0] sm:$0xff]
        %v995 = vld [vmem:[#allocation6 + $0x7a8] sm:$0xff]
        %v996 = vld [vmem:[#allocation6 + $0x7b0] sm:$0xff]
        %v997 = vld [vmem:[#allocation6 + $0x7b8] sm:$0xff]
        %v998 = vld [vmem:[#allocation6 + $0x7c0] sm:$0xff]
        %v999 = vld [vmem:[#allocation6 + $0x7c8] sm:$0xff]
        %v1000 = vld [vmem:[#allocation6 + $0x7d0] sm:$0xff]
        %v1001 = vld [vmem:[#allocation6 + $0x7d8] sm:$0xff]
        %v1002 = vld [vmem:[#allocation6 + $0x7e0] sm:$0xff]
        %v1003 = vld [vmem:[#allocation6 + $0x7e8] sm:$0xff]
        %v1004 = vld [vmem:[#allocation6 + $0x7f0] sm:$0xff]
        %v1005 = vld [vmem:[#allocation6 + $0x7f8] sm:$0xff]
        %v1006 = vld [vmem:[#allocation8] sm:$0x3]
        %v1008 = vlaneseq
        %v1009 = vshrl.u32 %v1008, 7
        %v1010 = vsub.s32 0, %v1009
        %v1011 = vrot.slane %v1006, %v1010
        %v1012 = vlaneseq
        %v1013 = vshrl.u32 %v1012, 7
        %v1014 = vsub.s32 1, %v1013
        %v1015 = vrot.slane %v1006, %v1014
        %v1274 = vunpack.c.l.b16 %v750
        %v1275 = vunpack.c.h.b16 %v750
        %v1276 = vunpack.c.l.b16 %v751
        %v1277 = vunpack.c.h.b16 %v751
        %v1278 = vunpack.c.l.b16 %v752
        %v1279 = vunpack.c.h.b16 %v752
        %v1280 = vunpack.c.l.b16 %v753
        %v1281 = vunpack.c.h.b16 %v753
        %v1282 = vunpack.c.l.b16 %v754
        %v1283 = vunpack.c.h.b16 %v754
        %v1284 = vunpack.c.l.b16 %v755
        %v1285 = vunpack.c.h.b16 %v755
        %v1286 = vunpack.c.l.b16 %v756
        %v1287 = vunpack.c.h.b16 %v756
        %v1288 = vunpack.c.l.b16 %v757
        %v1289 = vunpack.c.h.b16 %v757
        %v1290 = vunpack.c.l.b16 %v758
        %v1291 = vunpack.c.h.b16 %v758
        %v1292 = vunpack.c.l.b16 %v759
        %v1293 = vunpack.c.h.b16 %v759
        %v1294 = vunpack.c.l.b16 %v760
        %v1295 = vunpack.c.h.b16 %v760
        %v1296 = vunpack.c.l.b16 %v761
        %v1297 = vunpack.c.h.b16 %v761
        %v1298 = vunpack.c.l.b16 %v762
        %v1299 = vunpack.c.h.b16 %v762
        %v1300 = vunpack.c.l.b16 %v763
        %v1301 = vunpack.c.h.b16 %v763
        %v1302 = vunpack.c.l.b16 %v764
        %v1303 = vunpack.c.h.b16 %v764
        %v1304 = vunpack.c.l.b16 %v765
        %v1305 = vunpack.c.h.b16 %v765
        %v1306 = vunpack.c.l.b16 %v766
        %v1307 = vunpack.c.h.b16 %v766
        %v1308 = vunpack.c.l.b16 %v767
        %v1309 = vunpack.c.h.b16 %v767
        %v1310 = vunpack.c.l.b16 %v768
        %v1311 = vunpack.c.h.b16 %v768
        %v1312 = vunpack.c.l.b16 %v769
        %v1313 = vunpack.c.h.b16 %v769
        %v1314 = vunpack.c.l.b16 %v770
        %v1315 = vunpack.c.h.b16 %v770
        %v1316 = vunpack.c.l.b16 %v771
        %v1317 = vunpack.c.h.b16 %v771
        %v1318 = vunpack.c.l.b16 %v772
        %v1319 = vunpack.c.h.b16 %v772
        %v1320 = vunpack.c.l.b16 %v773
        %v1321 = vunpack.c.h.b16 %v773
        %v1322 = vunpack.c.l.b16 %v774
        %v1323 = vunpack.c.h.b16 %v774
        %v1324 = vunpack.c.l.b16 %v775
        %v1325 = vunpack.c.h.b16 %v775
        %v1326 = vunpack.c.l.b16 %v776
        %v1327 = vunpack.c.h.b16 %v776
        %v1328 = vunpack.c.l.b16 %v777
        %v1329 = vunpack.c.h.b16 %v777
        %v1330 = vunpack.c.l.b16 %v778
        %v1331 = vunpack.c.h.b16 %v778
        %v1332 = vunpack.c.l.b16 %v779
        %v1333 = vunpack.c.h.b16 %v779
        %v1334 = vunpack.c.l.b16 %v780
        %v1335 = vunpack.c.h.b16 %v780
        %v1336 = vunpack.c.l.b16 %v781
        %v1337 = vunpack.c.h.b16 %v781
        %v1338 = vunpack.c.l.b16 %v782
        %v1339 = vunpack.c.h.b16 %v782
        %v1340 = vunpack.c.l.b16 %v783
        %v1341 = vunpack.c.h.b16 %v783
        %v1342 = vunpack.c.l.b16 %v784
        %v1343 = vunpack.c.h.b16 %v784
        %v1344 = vunpack.c.l.b16 %v785
        %v1345 = vunpack.c.h.b16 %v785
        %v1346 = vunpack.c.l.b16 %v786
        %v1347 = vunpack.c.h.b16 %v786
        %v1348 = vunpack.c.l.b16 %v787
        %v1349 = vunpack.c.h.b16 %v787
        %v1350 = vunpack.c.l.b16 %v788
        %v1351 = vunpack.c.h.b16 %v788
        %v1352 = vunpack.c.l.b16 %v789
        %v1353 = vunpack.c.h.b16 %v789
        %v1354 = vunpack.c.l.b16 %v790
        %v1355 = vunpack.c.h.b16 %v790
        %v1356 = vunpack.c.l.b16 %v791
        %v1357 = vunpack.c.h.b16 %v791
        %v1358 = vunpack.c.l.b16 %v792
        %v1359 = vunpack.c.h.b16 %v792
        %v1360 = vunpack.c.l.b16 %v793
        %v1361 = vunpack.c.h.b16 %v793
        %v1362 = vunpack.c.l.b16 %v794
        %v1363 = vunpack.c.h.b16 %v794
        %v1364 = vunpack.c.l.b16 %v795
        %v1365 = vunpack.c.h.b16 %v795
        %v1366 = vunpack.c.l.b16 %v796
        %v1367 = vunpack.c.h.b16 %v796
        %v1368 = vunpack.c.l.b16 %v797
        %v1369 = vunpack.c.h.b16 %v797
        %v1370 = vunpack.c.l.b16 %v798
        %v1371 = vunpack.c.h.b16 %v798
        %v1372 = vunpack.c.l.b16 %v799
        %v1373 = vunpack.c.h.b16 %v799
        %v1374 = vunpack.c.l.b16 %v800
        %v1375 = vunpack.c.h.b16 %v800
        %v1376 = vunpack.c.l.b16 %v801
        %v1377 = vunpack.c.h.b16 %v801
        %v1378 = vunpack.c.l.b16 %v802
        %v1379 = vunpack.c.h.b16 %v802
        %v1380 = vunpack.c.l.b16 %v803
        %v1381 = vunpack.c.h.b16 %v803
        %v1382 = vunpack.c.l.b16 %v804
        %v1383 = vunpack.c.h.b16 %v804
        %v1384 = vunpack.c.l.b16 %v805
        %v1385 = vunpack.c.h.b16 %v805
        %v1386 = vunpack.c.l.b16 %v806
        %v1387 = vunpack.c.h.b16 %v806
        %v1388 = vunpack.c.l.b16 %v807
        %v1389 = vunpack.c.h.b16 %v807
        %v1390 = vunpack.c.l.b16 %v808
        %v1391 = vunpack.c.h.b16 %v808
        %v1392 = vunpack.c.l.b16 %v809
        %v1393 = vunpack.c.h.b16 %v809
        %v1394 = vunpack.c.l.b16 %v810
        %v1395 = vunpack.c.h.b16 %v810
        %v1396 = vunpack.c.l.b16 %v811
        %v1397 = vunpack.c.h.b16 %v811
        %v1398 = vunpack.c.l.b16 %v812
        %v1399 = vunpack.c.h.b16 %v812
        %v1400 = vunpack.c.l.b16 %v813
        %v1401 = vunpack.c.h.b16 %v813
        %v1402 = vunpack.c.l.b16 %v814
        %v1403 = vunpack.c.h.b16 %v814
        %v1404 = vunpack.c.l.b16 %v815
        %v1405 = vunpack.c.h.b16 %v815
        %v1406 = vunpack.c.l.b16 %v816
        %v1407 = vunpack.c.h.b16 %v816
        %v1408 = vunpack.c.l.b16 %v817
        %v1409 = vunpack.c.h.b16 %v817
        %v1410 = vunpack.c.l.b16 %v818
        %v1411 = vunpack.c.h.b16 %v818
        %v1412 = vunpack.c.l.b16 %v819
        %v1413 = vunpack.c.h.b16 %v819
        %v1414 = vunpack.c.l.b16 %v820
        %v1415 = vunpack.c.h.b16 %v820
        %v1416 = vunpack.c.l.b16 %v821
        %v1417 = vunpack.c.h.b16 %v821
        %v1418 = vunpack.c.l.b16 %v822
        %v1419 = vunpack.c.h.b16 %v822
        %v1420 = vunpack.c.l.b16 %v823
        %v1421 = vunpack.c.h.b16 %v823
        %v1422 = vunpack.c.l.b16 %v824
        %v1423 = vunpack.c.h.b16 %v824
        %v1424 = vunpack.c.l.b16 %v825
        %v1425 = vunpack.c.h.b16 %v825
        %v1426 = vunpack.c.l.b16 %v826
        %v1427 = vunpack.c.h.b16 %v826
        %v1428 = vunpack.c.l.b16 %v827
        %v1429 = vunpack.c.h.b16 %v827
        %v1430 = vunpack.c.l.b16 %v828
        %v1431 = vunpack.c.h.b16 %v828
        %v1432 = vunpack.c.l.b16 %v829
        %v1433 = vunpack.c.h.b16 %v829
        %v1434 = vunpack.c.l.b16 %v830
        %v1435 = vunpack.c.h.b16 %v830
        %v1436 = vunpack.c.l.b16 %v831
        %v1437 = vunpack.c.h.b16 %v831
        %v1438 = vunpack.c.l.b16 %v832
        %v1439 = vunpack.c.h.b16 %v832
        %v1440 = vunpack.c.l.b16 %v833
        %v1441 = vunpack.c.h.b16 %v833
        %v1442 = vunpack.c.l.b16 %v834
        %v1443 = vunpack.c.h.b16 %v834
        %v1444 = vunpack.c.l.b16 %v835
        %v1445 = vunpack.c.h.b16 %v835
        %v1446 = vunpack.c.l.b16 %v836
        %v1447 = vunpack.c.h.b16 %v836
        %v1448 = vunpack.c.l.b16 %v837
        %v1449 = vunpack.c.h.b16 %v837
        %v1450 = vunpack.c.l.b16 %v838
        %v1451 = vunpack.c.h.b16 %v838
        %v1452 = vunpack.c.l.b16 %v839
        %v1453 = vunpack.c.h.b16 %v839
        %v1454 = vunpack.c.l.b16 %v840
        %v1455 = vunpack.c.h.b16 %v840
        %v1456 = vunpack.c.l.b16 %v841
        %v1457 = vunpack.c.h.b16 %v841
        %v1458 = vunpack.c.l.b16 %v842
        %v1459 = vunpack.c.h.b16 %v842
        %v1460 = vunpack.c.l.b16 %v843
        %v1461 = vunpack.c.h.b16 %v843
        %v1462 = vunpack.c.l.b16 %v844
        %v1463 = vunpack.c.h.b16 %v844
        %v1464 = vunpack.c.l.b16 %v845
        %v1465 = vunpack.c.h.b16 %v845
        %v1466 = vunpack.c.l.b16 %v846
        %v1467 = vunpack.c.h.b16 %v846
        %v1468 = vunpack.c.l.b16 %v847
        %v1469 = vunpack.c.h.b16 %v847
        %v1470 = vunpack.c.l.b16 %v848
        %v1471 = vunpack.c.h.b16 %v848
        %v1472 = vunpack.c.l.b16 %v849
        %v1473 = vunpack.c.h.b16 %v849
        %v1474 = vunpack.c.l.b16 %v850
        %v1475 = vunpack.c.h.b16 %v850
        %v1476 = vunpack.c.l.b16 %v851
        %v1477 = vunpack.c.h.b16 %v851
        %v1478 = vunpack.c.l.b16 %v852
        %v1479 = vunpack.c.h.b16 %v852
        %v1480 = vunpack.c.l.b16 %v853
        %v1481 = vunpack.c.h.b16 %v853
        %v1482 = vunpack.c.l.b16 %v854
        %v1483 = vunpack.c.h.b16 %v854
        %v1484 = vunpack.c.l.b16 %v855
        %v1485 = vunpack.c.h.b16 %v855
        %v1486 = vunpack.c.l.b16 %v856
        %v1487 = vunpack.c.h.b16 %v856
        %v1488 = vunpack.c.l.b16 %v857
        %v1489 = vunpack.c.h.b16 %v857
        %v1490 = vunpack.c.l.b16 %v858
        %v1491 = vunpack.c.h.b16 %v858
        %v1492 = vunpack.c.l.b16 %v859
        %v1493 = vunpack.c.h.b16 %v859
        %v1494 = vunpack.c.l.b16 %v860
        %v1495 = vunpack.c.h.b16 %v860
        %v1496 = vunpack.c.l.b16 %v861
        %v1497 = vunpack.c.h.b16 %v861
        %v1498 = vunpack.c.l.b16 %v862
        %v1499 = vunpack.c.h.b16 %v862
        %v1500 = vunpack.c.l.b16 %v863
        %v1501 = vunpack.c.h.b16 %v863
        %v1502 = vunpack.c.l.b16 %v864
        %v1503 = vunpack.c.h.b16 %v864
        %v1504 = vunpack.c.l.b16 %v865
        %v1505 = vunpack.c.h.b16 %v865
        %v1506 = vunpack.c.l.b16 %v866
        %v1507 = vunpack.c.h.b16 %v866
        %v1508 = vunpack.c.l.b16 %v867
        %v1509 = vunpack.c.h.b16 %v867
        %v1510 = vunpack.c.l.b16 %v868
        %v1511 = vunpack.c.h.b16 %v868
        %v1512 = vunpack.c.l.b16 %v869
        %v1513 = vunpack.c.h.b16 %v869
        %v1514 = vunpack.c.l.b16 %v870
        %v1515 = vunpack.c.h.b16 %v870
        %v1516 = vunpack.c.l.b16 %v871
        %v1517 = vunpack.c.h.b16 %v871
        %v1518 = vunpack.c.l.b16 %v872
        %v1519 = vunpack.c.h.b16 %v872
        %v1520 = vunpack.c.l.b16 %v873
        %v1521 = vunpack.c.h.b16 %v873
        %v1522 = vunpack.c.l.b16 %v874
        %v1523 = vunpack.c.h.b16 %v874
        %v1524 = vunpack.c.l.b16 %v875
        %v1525 = vunpack.c.h.b16 %v875
        %v1526 = vunpack.c.l.b16 %v876
        %v1527 = vunpack.c.h.b16 %v876
        %v1528 = vunpack.c.l.b16 %v877
        %v1529 = vunpack.c.h.b16 %v877
        %v1530 = vunpack.c.l.b16 %v878
        %v1531 = vunpack.c.h.b16 %v878
        %v1532 = vunpack.c.l.b16 %v879
        %v1533 = vunpack.c.h.b16 %v879
        %v1534 = vunpack.c.l.b16 %v880
        %v1535 = vunpack.c.h.b16 %v880
        %v1536 = vunpack.c.l.b16 %v881
        %v1537 = vunpack.c.h.b16 %v881
        %v1538 = vunpack.c.l.b16 %v882
        %v1539 = vunpack.c.h.b16 %v882
        %v1540 = vunpack.c.l.b16 %v883
        %v1541 = vunpack.c.h.b16 %v883
        %v1542 = vunpack.c.l.b16 %v884
        %v1543 = vunpack.c.h.b16 %v884
        %v1544 = vunpack.c.l.b16 %v885
        %v1545 = vunpack.c.h.b16 %v885
        %v1546 = vunpack.c.l.b16 %v886
        %v1547 = vunpack.c.h.b16 %v886
        %v1548 = vunpack.c.l.b16 %v887
        %v1549 = vunpack.c.h.b16 %v887
        %v1550 = vunpack.c.l.b16 %v888
        %v1551 = vunpack.c.h.b16 %v888
        %v1552 = vunpack.c.l.b16 %v889
        %v1553 = vunpack.c.h.b16 %v889
        %v1554 = vunpack.c.l.b16 %v890
        %v1555 = vunpack.c.h.b16 %v890
        %v1556 = vunpack.c.l.b16 %v891
        %v1557 = vunpack.c.h.b16 %v891
        %v1558 = vunpack.c.l.b16 %v892
        %v1559 = vunpack.c.h.b16 %v892
        %v1560 = vunpack.c.l.b16 %v893
        %v1561 = vunpack.c.h.b16 %v893
        %v1562 = vunpack.c.l.b16 %v894
        %v1563 = vunpack.c.h.b16 %v894
        %v1564 = vunpack.c.l.b16 %v895
        %v1565 = vunpack.c.h.b16 %v895
        %v1566 = vunpack.c.l.b16 %v896
        %v1567 = vunpack.c.h.b16 %v896
        %v1568 = vunpack.c.l.b16 %v897
        %v1569 = vunpack.c.h.b16 %v897
        %v1570 = vunpack.c.l.b16 %v898
        %v1571 = vunpack.c.h.b16 %v898
        %v1572 = vunpack.c.l.b16 %v899
        %v1573 = vunpack.c.h.b16 %v899
        %v1574 = vunpack.c.l.b16 %v900
        %v1575 = vunpack.c.h.b16 %v900
        %v1576 = vunpack.c.l.b16 %v901
        %v1577 = vunpack.c.h.b16 %v901
        %v1578 = vunpack.c.l.b16 %v902
        %v1579 = vunpack.c.h.b16 %v902
        %v1580 = vunpack.c.l.b16 %v903
        %v1581 = vunpack.c.h.b16 %v903
        %v1582 = vunpack.c.l.b16 %v904
        %v1583 = vunpack.c.h.b16 %v904
        %v1584 = vunpack.c.l.b16 %v905
        %v1585 = vunpack.c.h.b16 %v905
        %v1586 = vunpack.c.l.b16 %v906
        %v1587 = vunpack.c.h.b16 %v906
        %v1588 = vunpack.c.l.b16 %v907
        %v1589 = vunpack.c.h.b16 %v907
        %v1590 = vunpack.c.l.b16 %v908
        %v1591 = vunpack.c.h.b16 %v908
        %v1592 = vunpack.c.l.b16 %v909
        %v1593 = vunpack.c.h.b16 %v909
        %v1594 = vunpack.c.l.b16 %v910
        %v1595 = vunpack.c.h.b16 %v910
        %v1596 = vunpack.c.l.b16 %v911
        %v1597 = vunpack.c.h.b16 %v911
        %v1598 = vunpack.c.l.b16 %v912
        %v1599 = vunpack.c.h.b16 %v912
        %v1600 = vunpack.c.l.b16 %v913
        %v1601 = vunpack.c.h.b16 %v913
        %v1602 = vunpack.c.l.b16 %v914
        %v1603 = vunpack.c.h.b16 %v914
        %v1604 = vunpack.c.l.b16 %v915
        %v1605 = vunpack.c.h.b16 %v915
        %v1606 = vunpack.c.l.b16 %v916
        %v1607 = vunpack.c.h.b16 %v916
        %v1608 = vunpack.c.l.b16 %v917
        %v1609 = vunpack.c.h.b16 %v917
        %v1610 = vunpack.c.l.b16 %v918
        %v1611 = vunpack.c.h.b16 %v918
        %v1612 = vunpack.c.l.b16 %v919
        %v1613 = vunpack.c.h.b16 %v919
        %v1614 = vunpack.c.l.b16 %v920
        %v1615 = vunpack.c.h.b16 %v920
        %v1616 = vunpack.c.l.b16 %v921
        %v1617 = vunpack.c.h.b16 %v921
        %v1618 = vunpack.c.l.b16 %v922
        %v1619 = vunpack.c.h.b16 %v922
        %v1620 = vunpack.c.l.b16 %v923
        %v1621 = vunpack.c.h.b16 %v923
        %v1622 = vunpack.c.l.b16 %v924
        %v1623 = vunpack.c.h.b16 %v924
        %v1624 = vunpack.c.l.b16 %v925
        %v1625 = vunpack.c.h.b16 %v925
        %v1626 = vunpack.c.l.b16 %v926
        %v1627 = vunpack.c.h.b16 %v926
        %v1628 = vunpack.c.l.b16 %v927
        %v1629 = vunpack.c.h.b16 %v927
        %v1630 = vunpack.c.l.b16 %v928
        %v1631 = vunpack.c.h.b16 %v928
        %v1632 = vunpack.c.l.b16 %v929
        %v1633 = vunpack.c.h.b16 %v929
        %v1634 = vunpack.c.l.b16 %v930
        %v1635 = vunpack.c.h.b16 %v930
        %v1636 = vunpack.c.l.b16 %v931
        %v1637 = vunpack.c.h.b16 %v931
        %v1638 = vunpack.c.l.b16 %v932
        %v1639 = vunpack.c.h.b16 %v932
        %v1640 = vunpack.c.l.b16 %v933
        %v1641 = vunpack.c.h.b16 %v933
        %v1642 = vunpack.c.l.b16 %v934
        %v1643 = vunpack.c.h.b16 %v934
        %v1644 = vunpack.c.l.b16 %v935
        %v1645 = vunpack.c.h.b16 %v935
        %v1646 = vunpack.c.l.b16 %v936
        %v1647 = vunpack.c.h.b16 %v936
        %v1648 = vunpack.c.l.b16 %v937
        %v1649 = vunpack.c.h.b16 %v937
        %v1650 = vunpack.c.l.b16 %v938
        %v1651 = vunpack.c.h.b16 %v938
        %v1652 = vunpack.c.l.b16 %v939
        %v1653 = vunpack.c.h.b16 %v939
        %v1654 = vunpack.c.l.b16 %v940
        %v1655 = vunpack.c.h.b16 %v940
        %v1656 = vunpack.c.l.b16 %v941
        %v1657 = vunpack.c.h.b16 %v941
        %v1658 = vunpack.c.l.b16 %v942
        %v1659 = vunpack.c.h.b16 %v942
        %v1660 = vunpack.c.l.b16 %v943
        %v1661 = vunpack.c.h.b16 %v943
        %v1662 = vunpack.c.l.b16 %v944
        %v1663 = vunpack.c.h.b16 %v944
        %v1664 = vunpack.c.l.b16 %v945
        %v1665 = vunpack.c.h.b16 %v945
        %v1666 = vunpack.c.l.b16 %v946
        %v1667 = vunpack.c.h.b16 %v946
        %v1668 = vunpack.c.l.b16 %v947
        %v1669 = vunpack.c.h.b16 %v947
        %v1670 = vunpack.c.l.b16 %v948
        %v1671 = vunpack.c.h.b16 %v948
        %v1672 = vunpack.c.l.b16 %v949
        %v1673 = vunpack.c.h.b16 %v949
        %v1674 = vunpack.c.l.b16 %v950
        %v1675 = vunpack.c.h.b16 %v950
        %v1676 = vunpack.c.l.b16 %v951
        %v1677 = vunpack.c.h.b16 %v951
        %v1678 = vunpack.c.l.b16 %v952
        %v1679 = vunpack.c.h.b16 %v952
        %v1680 = vunpack.c.l.b16 %v953
        %v1681 = vunpack.c.h.b16 %v953
        %v1682 = vunpack.c.l.b16 %v954
        %v1683 = vunpack.c.h.b16 %v954
        %v1684 = vunpack.c.l.b16 %v955
        %v1685 = vunpack.c.h.b16 %v955
        %v1686 = vunpack.c.l.b16 %v956
        %v1687 = vunpack.c.h.b16 %v956
        %v1688 = vunpack.c.l.b16 %v957
        %v1689 = vunpack.c.h.b16 %v957
        %v1690 = vunpack.c.l.b16 %v958
        %v1691 = vunpack.c.h.b16 %v958
        %v1692 = vunpack.c.l.b16 %v959
        %v1693 = vunpack.c.h.b16 %v959
        %v1694 = vunpack.c.l.b16 %v960
        %v1695 = vunpack.c.h.b16 %v960
        %v1696 = vunpack.c.l.b16 %v961
        %v1697 = vunpack.c.h.b16 %v961
        %v1698 = vunpack.c.l.b16 %v962
        %v1699 = vunpack.c.h.b16 %v962
        %v1700 = vunpack.c.l.b16 %v963
        %v1701 = vunpack.c.h.b16 %v963
        %v1702 = vunpack.c.l.b16 %v964
        %v1703 = vunpack.c.h.b16 %v964
        %v1704 = vunpack.c.l.b16 %v965
        %v1705 = vunpack.c.h.b16 %v965
        %v1706 = vunpack.c.l.b16 %v966
        %v1707 = vunpack.c.h.b16 %v966
        %v1708 = vunpack.c.l.b16 %v967
        %v1709 = vunpack.c.h.b16 %v967
        %v1710 = vunpack.c.l.b16 %v968
        %v1711 = vunpack.c.h.b16 %v968
        %v1712 = vunpack.c.l.b16 %v969
        %v1713 = vunpack.c.h.b16 %v969
        %v1714 = vunpack.c.l.b16 %v970
        %v1715 = vunpack.c.h.b16 %v970
        %v1716 = vunpack.c.l.b16 %v971
        %v1717 = vunpack.c.h.b16 %v971
        %v1718 = vunpack.c.l.b16 %v972
        %v1719 = vunpack.c.h.b16 %v972
        %v1720 = vunpack.c.l.b16 %v973
        %v1721 = vunpack.c.h.b16 %v973
        %v1722 = vunpack.c.l.b16 %v974
        %v1723 = vunpack.c.h.b16 %v974
        %v1724 = vunpack.c.l.b16 %v975
        %v1725 = vunpack.c.h.b16 %v975
        %v1726 = vunpack.c.l.b16 %v976
        %v1727 = vunpack.c.h.b16 %v976
        %v1728 = vunpack.c.l.b16 %v977
        %v1729 = vunpack.c.h.b16 %v977
        %v1730 = vunpack.c.l.b16 %v978
        %v1731 = vunpack.c.h.b16 %v978
        %v1732 = vunpack.c.l.b16 %v979
        %v1733 = vunpack.c.h.b16 %v979
        %v1734 = vunpack.c.l.b16 %v980
        %v1735 = vunpack.c.h.b16 %v980
        %v1736 = vunpack.c.l.b16 %v981
        %v1737 = vunpack.c.h.b16 %v981
        %v1738 = vunpack.c.l.b16 %v982
        %v1739 = vunpack.c.h.b16 %v982
        %v1740 = vunpack.c.l.b16 %v983
        %v1741 = vunpack.c.h.b16 %v983
        %v1742 = vunpack.c.l.b16 %v984
        %v1743 = vunpack.c.h.b16 %v984
        %v1744 = vunpack.c.l.b16 %v985
        %v1745 = vunpack.c.h.b16 %v985
        %v1746 = vunpack.c.l.b16 %v986
        %v1747 = vunpack.c.h.b16 %v986
        %v1748 = vunpack.c.l.b16 %v987
        %v1749 = vunpack.c.h.b16 %v987
        %v1750 = vunpack.c.l.b16 %v988
        %v1751 = vunpack.c.h.b16 %v988
        %v1752 = vunpack.c.l.b16 %v989
        %v1753 = vunpack.c.h.b16 %v989
        %v1754 = vunpack.c.l.b16 %v990
        %v1755 = vunpack.c.h.b16 %v990
        %v1756 = vunpack.c.l.b16 %v991
        %v1757 = vunpack.c.h.b16 %v991
        %v1758 = vunpack.c.l.b16 %v992
        %v1759 = vunpack.c.h.b16 %v992
        %v1760 = vunpack.c.l.b16 %v993
        %v1761 = vunpack.c.h.b16 %v993
        %v1762 = vunpack.c.l.b16 %v994
        %v1763 = vunpack.c.h.b16 %v994
        %v1764 = vunpack.c.l.b16 %v995
        %v1765 = vunpack.c.h.b16 %v995
        %v1766 = vunpack.c.l.b16 %v996
        %v1767 = vunpack.c.h.b16 %v996
        %v1768 = vunpack.c.l.b16 %v997
        %v1769 = vunpack.c.h.b16 %v997
        %v1770 = vunpack.c.l.b16 %v998
        %v1771 = vunpack.c.h.b16 %v998
        %v1772 = vunpack.c.l.b16 %v999
        %v1773 = vunpack.c.h.b16 %v999
        %v1774 = vunpack.c.l.b16 %v1000
        %v1775 = vunpack.c.h.b16 %v1000
        %v1776 = vunpack.c.l.b16 %v1001
        %v1777 = vunpack.c.h.b16 %v1001
        %v1778 = vunpack.c.l.b16 %v1002
        %v1779 = vunpack.c.h.b16 %v1002
        %v1780 = vunpack.c.l.b16 %v1003
        %v1781 = vunpack.c.h.b16 %v1003
        %v1782 = vunpack.c.l.b16 %v1004
        %v1783 = vunpack.c.h.b16 %v1004
        %v1784 = vunpack.c.l.b16 %v1005
        %v1785 = vunpack.c.h.b16 %v1005
        %v1786 = vpack.c.b16 %v1276, %v1274
        %v1787 = vpack.c.b16 %v1277, %v1275
        %v1788 = vpack.c.b16 %v1280, %v1278
        %v1789 = vpack.c.b16 %v1281, %v1279
        %v1790 = vpack.c.b16 %v1284, %v1282
        %v1791 = vpack.c.b16 %v1285, %v1283
        %v1792 = vpack.c.b16 %v1288, %v1286
        %v1793 = vpack.c.b16 %v1289, %v1287
        %v1794 = vpack.c.b16 %v1292, %v1290
        %v1795 = vpack.c.b16 %v1293, %v1291
        %v1796 = vpack.c.b16 %v1296, %v1294
        %v1797 = vpack.c.b16 %v1297, %v1295
        %v1798 = vpack.c.b16 %v1300, %v1298
        %v1799 = vpack.c.b16 %v1301, %v1299
        %v1800 = vpack.c.b16 %v1304, %v1302
        %v1801 = vpack.c.b16 %v1305, %v1303
        %v1802 = vpack.c.b16 %v1308, %v1306
        %v1803 = vpack.c.b16 %v1309, %v1307
        %v1804 = vpack.c.b16 %v1312, %v1310
        %v1805 = vpack.c.b16 %v1313, %v1311
        %v1806 = vpack.c.b16 %v1316, %v1314
        %v1807 = vpack.c.b16 %v1317, %v1315
        %v1808 = vpack.c.b16 %v1320, %v1318
        %v1809 = vpack.c.b16 %v1321, %v1319
        %v1810 = vpack.c.b16 %v1324, %v1322
        %v1811 = vpack.c.b16 %v1325, %v1323
        %v1812 = vpack.c.b16 %v1328, %v1326
        %v1813 = vpack.c.b16 %v1329, %v1327
        %v1814 = vpack.c.b16 %v1332, %v1330
        %v1815 = vpack.c.b16 %v1333, %v1331
        %v1816 = vpack.c.b16 %v1336, %v1334
        %v1817 = vpack.c.b16 %v1337, %v1335
        %v1818 = vpack.c.b16 %v1340, %v1338
        %v1819 = vpack.c.b16 %v1341, %v1339
        %v1820 = vpack.c.b16 %v1344, %v1342
        %v1821 = vpack.c.b16 %v1345, %v1343
        %v1822 = vpack.c.b16 %v1348, %v1346
        %v1823 = vpack.c.b16 %v1349, %v1347
        %v1824 = vpack.c.b16 %v1352, %v1350
        %v1825 = vpack.c.b16 %v1353, %v1351
        %v1826 = vpack.c.b16 %v1356, %v1354
        %v1827 = vpack.c.b16 %v1357, %v1355
        %v1828 = vpack.c.b16 %v1360, %v1358
        %v1829 = vpack.c.b16 %v1361, %v1359
        %v1830 = vpack.c.b16 %v1364, %v1362
        %v1831 = vpack.c.b16 %v1365, %v1363
        %v1832 = vpack.c.b16 %v1368, %v1366
        %v1833 = vpack.c.b16 %v1369, %v1367
        %v1834 = vpack.c.b16 %v1372, %v1370
        %v1835 = vpack.c.b16 %v1373, %v1371
        %v1836 = vpack.c.b16 %v1376, %v1374
        %v1837 = vpack.c.b16 %v1377, %v1375
        %v1838 = vpack.c.b16 %v1380, %v1378
        %v1839 = vpack.c.b16 %v1381, %v1379
        %v1840 = vpack.c.b16 %v1384, %v1382
        %v1841 = vpack.c.b16 %v1385, %v1383
        %v1842 = vpack.c.b16 %v1388, %v1386
        %v1843 = vpack.c.b16 %v1389, %v1387
        %v1844 = vpack.c.b16 %v1392, %v1390
        %v1845 = vpack.c.b16 %v1393, %v1391
        %v1846 = vpack.c.b16 %v1396, %v1394
        %v1847 = vpack.c.b16 %v1397, %v1395
        %v1848 = vpack.c.b16 %v1400, %v1398
        %v1849 = vpack.c.b16 %v1401, %v1399
        %v1850 = vpack.c.b16 %v1404, %v1402
        %v1851 = vpack.c.b16 %v1405, %v1403
        %v1852 = vpack.c.b16 %v1408, %v1406
        %v1853 = vpack.c.b16 %v1409, %v1407
        %v1854 = vpack.c.b16 %v1412, %v1410
        %v1855 = vpack.c.b16 %v1413, %v1411
        %v1856 = vpack.c.b16 %v1416, %v1414
        %v1857 = vpack.c.b16 %v1417, %v1415
        %v1858 = vpack.c.b16 %v1420, %v1418
        %v1859 = vpack.c.b16 %v1421, %v1419
        %v1860 = vpack.c.b16 %v1424, %v1422
        %v1861 = vpack.c.b16 %v1425, %v1423
        %v1862 = vpack.c.b16 %v1428, %v1426
        %v1863 = vpack.c.b16 %v1429, %v1427
        %v1864 = vpack.c.b16 %v1432, %v1430
        %v1865 = vpack.c.b16 %v1433, %v1431
        %v1866 = vpack.c.b16 %v1436, %v1434
        %v1867 = vpack.c.b16 %v1437, %v1435
        %v1868 = vpack.c.b16 %v1440, %v1438
        %v1869 = vpack.c.b16 %v1441, %v1439
        %v1870 = vpack.c.b16 %v1444, %v1442
        %v1871 = vpack.c.b16 %v1445, %v1443
        %v1872 = vpack.c.b16 %v1448, %v1446
        %v1873 = vpack.c.b16 %v1449, %v1447
        %v1874 = vpack.c.b16 %v1452, %v1450
        %v1875 = vpack.c.b16 %v1453, %v1451
        %v1876 = vpack.c.b16 %v1456, %v1454
        %v1877 = vpack.c.b16 %v1457, %v1455
        %v1878 = vpack.c.b16 %v1460, %v1458
        %v1879 = vpack.c.b16 %v1461, %v1459
        %v1880 = vpack.c.b16 %v1464, %v1462
        %v1881 = vpack.c.b16 %v1465, %v1463
        %v1882 = vpack.c.b16 %v1468, %v1466
        %v1883 = vpack.c.b16 %v1469, %v1467
        %v1884 = vpack.c.b16 %v1472, %v1470
        %v1885 = vpack.c.b16 %v1473, %v1471
        %v1886 = vpack.c.b16 %v1476, %v1474
        %v1887 = vpack.c.b16 %v1477, %v1475
        %v1888 = vpack.c.b16 %v1480, %v1478
        %v1889 = vpack.c.b16 %v1481, %v1479
        %v1890 = vpack.c.b16 %v1484, %v1482
        %v1891 = vpack.c.b16 %v1485, %v1483
        %v1892 = vpack.c.b16 %v1488, %v1486
        %v1893 = vpack.c.b16 %v1489, %v1487
        %v1894 = vpack.c.b16 %v1492, %v1490
        %v1895 = vpack.c.b16 %v1493, %v1491
        %v1896 = vpack.c.b16 %v1496, %v1494
        %v1897 = vpack.c.b16 %v1497, %v1495
        %v1898 = vpack.c.b16 %v1500, %v1498
        %v1899 = vpack.c.b16 %v1501, %v1499
        %v1900 = vpack.c.b16 %v1504, %v1502
        %v1901 = vpack.c.b16 %v1505, %v1503
        %v1902 = vpack.c.b16 %v1508, %v1506
        %v1903 = vpack.c.b16 %v1509, %v1507
        %v1904 = vpack.c.b16 %v1512, %v1510
        %v1905 = vpack.c.b16 %v1513, %v1511
        %v1906 = vpack.c.b16 %v1516, %v1514
        %v1907 = vpack.c.b16 %v1517, %v1515
        %v1908 = vpack.c.b16 %v1520, %v1518
        %v1909 = vpack.c.b16 %v1521, %v1519
        %v1910 = vpack.c.b16 %v1524, %v1522
        %v1911 = vpack.c.b16 %v1525, %v1523
        %v1912 = vpack.c.b16 %v1528, %v1526
        %v1913 = vpack.c.b16 %v1529, %v1527
        %v1914 = vpack.c.b16 %v1532, %v1530
        %v1915 = vpack.c.b16 %v1533, %v1531
        %v1916 = vpack.c.b16 %v1536, %v1534
        %v1917 = vpack.c.b16 %v1537, %v1535
        %v1918 = vpack.c.b16 %v1540, %v1538
        %v1919 = vpack.c.b16 %v1541, %v1539
        %v1920 = vpack.c.b16 %v1544, %v1542
        %v1921 = vpack.c.b16 %v1545, %v1543
        %v1922 = vpack.c.b16 %v1548, %v1546
        %v1923 = vpack.c.b16 %v1549, %v1547
        %v1924 = vpack.c.b16 %v1552, %v1550
        %v1925 = vpack.c.b16 %v1553, %v1551
        %v1926 = vpack.c.b16 %v1556, %v1554
        %v1927 = vpack.c.b16 %v1557, %v1555
        %v1928 = vpack.c.b16 %v1560, %v1558
        %v1929 = vpack.c.b16 %v1561, %v1559
        %v1930 = vpack.c.b16 %v1564, %v1562
        %v1931 = vpack.c.b16 %v1565, %v1563
        %v1932 = vpack.c.b16 %v1568, %v1566
        %v1933 = vpack.c.b16 %v1569, %v1567
        %v1934 = vpack.c.b16 %v1572, %v1570
        %v1935 = vpack.c.b16 %v1573, %v1571
        %v1936 = vpack.c.b16 %v1576, %v1574
        %v1937 = vpack.c.b16 %v1577, %v1575
        %v1938 = vpack.c.b16 %v1580, %v1578
        %v1939 = vpack.c.b16 %v1581, %v1579
        %v1940 = vpack.c.b16 %v1584, %v1582
        %v1941 = vpack.c.b16 %v1585, %v1583
        %v1942 = vpack.c.b16 %v1588, %v1586
        %v1943 = vpack.c.b16 %v1589, %v1587
        %v1944 = vpack.c.b16 %v1592, %v1590
        %v1945 = vpack.c.b16 %v1593, %v1591
        %v1946 = vpack.c.b16 %v1596, %v1594
        %v1947 = vpack.c.b16 %v1597, %v1595
        %v1948 = vpack.c.b16 %v1600, %v1598
        %v1949 = vpack.c.b16 %v1601, %v1599
        %v1950 = vpack.c.b16 %v1604, %v1602
        %v1951 = vpack.c.b16 %v1605, %v1603
        %v1952 = vpack.c.b16 %v1608, %v1606
        %v1953 = vpack.c.b16 %v1609, %v1607
        %v1954 = vpack.c.b16 %v1612, %v1610
        %v1955 = vpack.c.b16 %v1613, %v1611
        %v1956 = vpack.c.b16 %v1616, %v1614
        %v1957 = vpack.c.b16 %v1617, %v1615
        %v1958 = vpack.c.b16 %v1620, %v1618
        %v1959 = vpack.c.b16 %v1621, %v1619
        %v1960 = vpack.c.b16 %v1624, %v1622
        %v1961 = vpack.c.b16 %v1625, %v1623
        %v1962 = vpack.c.b16 %v1628, %v1626
        %v1963 = vpack.c.b16 %v1629, %v1627
        %v1964 = vpack.c.b16 %v1632, %v1630
        %v1965 = vpack.c.b16 %v1633, %v1631
        %v1966 = vpack.c.b16 %v1636, %v1634
        %v1967 = vpack.c.b16 %v1637, %v1635
        %v1968 = vpack.c.b16 %v1640, %v1638
        %v1969 = vpack.c.b16 %v1641, %v1639
        %v1970 = vpack.c.b16 %v1644, %v1642
        %v1971 = vpack.c.b16 %v1645, %v1643
        %v1972 = vpack.c.b16 %v1648, %v1646
        %v1973 = vpack.c.b16 %v1649, %v1647
        %v1974 = vpack.c.b16 %v1652, %v1650
        %v1975 = vpack.c.b16 %v1653, %v1651
        %v1976 = vpack.c.b16 %v1656, %v1654
        %v1977 = vpack.c.b16 %v1657, %v1655
        %v1978 = vpack.c.b16 %v1660, %v1658
        %v1979 = vpack.c.b16 %v1661, %v1659
        %v1980 = vpack.c.b16 %v1664, %v1662
        %v1981 = vpack.c.b16 %v1665, %v1663
        %v1982 = vpack.c.b16 %v1668, %v1666
        %v1983 = vpack.c.b16 %v1669, %v1667
        %v1984 = vpack.c.b16 %v1672, %v1670
        %v1985 = vpack.c.b16 %v1673, %v1671
        %v1986 = vpack.c.b16 %v1676, %v1674
        %v1987 = vpack.c.b16 %v1677, %v1675
        %v1988 = vpack.c.b16 %v1680, %v1678
        %v1989 = vpack.c.b16 %v1681, %v1679
        %v1990 = vpack.c.b16 %v1684, %v1682
        %v1991 = vpack.c.b16 %v1685, %v1683
        %v1992 = vpack.c.b16 %v1688, %v1686
        %v1993 = vpack.c.b16 %v1689, %v1687
        %v1994 = vpack.c.b16 %v1692, %v1690
        %v1995 = vpack.c.b16 %v1693, %v1691
        %v1996 = vpack.c.b16 %v1696, %v1694
        %v1997 = vpack.c.b16 %v1697, %v1695
        %v1998 = vpack.c.b16 %v1700, %v1698
        %v1999 = vpack.c.b16 %v1701, %v1699
        %v2000 = vpack.c.b16 %v1704, %v1702
        %v2001 = vpack.c.b16 %v1705, %v1703
        %v2002 = vpack.c.b16 %v1708, %v1706
        %v2003 = vpack.c.b16 %v1709, %v1707
        %v2004 = vpack.c.b16 %v1712, %v1710
        %v2005 = vpack.c.b16 %v1713, %v1711
        %v2006 = vpack.c.b16 %v1716, %v1714
        %v2007 = vpack.c.b16 %v1717, %v1715
        %v2008 = vpack.c.b16 %v1720, %v1718
        %v2009 = vpack.c.b16 %v1721, %v1719
        %v2010 = vpack.c.b16 %v1724, %v1722
        %v2011 = vpack.c.b16 %v1725, %v1723
        %v2012 = vpack.c.b16 %v1728, %v1726
        %v2013 = vpack.c.b16 %v1729, %v1727
        %v2014 = vpack.c.b16 %v1732, %v1730
        %v2015 = vpack.c.b16 %v1733, %v1731
        %v2016 = vpack.c.b16 %v1736, %v1734
        %v2017 = vpack.c.b16 %v1737, %v1735
        %v2018 = vpack.c.b16 %v1740, %v1738
        %v2019 = vpack.c.b16 %v1741, %v1739
        %v2020 = vpack.c.b16 %v1744, %v1742
        %v2021 = vpack.c.b16 %v1745, %v1743
        %v2022 = vpack.c.b16 %v1748, %v1746
        %v2023 = vpack.c.b16 %v1749, %v1747
        %v2024 = vpack.c.b16 %v1752, %v1750
        %v2025 = vpack.c.b16 %v1753, %v1751
        %v2026 = vpack.c.b16 %v1756, %v1754
        %v2027 = vpack.c.b16 %v1757, %v1755
        %v2028 = vpack.c.b16 %v1760, %v1758
        %v2029 = vpack.c.b16 %v1761, %v1759
        %v2030 = vpack.c.b16 %v1764, %v1762
        %v2031 = vpack.c.b16 %v1765, %v1763
        %v2032 = vpack.c.b16 %v1768, %v1766
        %v2033 = vpack.c.b16 %v1769, %v1767
        %v2034 = vpack.c.b16 %v1772, %v1770
        %v2035 = vpack.c.b16 %v1773, %v1771
        %v2036 = vpack.c.b16 %v1776, %v1774
        %v2037 = vpack.c.b16 %v1777, %v1775
        %v2038 = vpack.c.b16 %v1780, %v1778
        %v2039 = vpack.c.b16 %v1781, %v1779
        %v2040 = vpack.c.b16 %v1784, %v1782
        %v2041 = vpack.c.b16 %v1785, %v1783
        %2298 = vmatprep.subr.bf16.mxu0 %v1787
        %2299 = vmatpush1.bf16.msra.mxu0 %v1786
        %2300 = vmatprep.subr.bf16.mxu0 %v1789
        %2301 = vmatpush1.bf16.msra.mxu0 %v1788
        %2302 = vmatprep.subr.bf16.mxu0 %v1791
        %2303 = vmatpush1.bf16.msra.mxu0 %v1790
        %2304 = vmatprep.subr.bf16.mxu0 %v1793
        %2305 = vmatpush1.bf16.msra.mxu0 %v1792
        %2306 = vmatprep.subr.bf16.mxu0 %v1795
        %2307 = vmatpush1.bf16.msra.mxu0 %v1794
        %2308 = vmatprep.subr.bf16.mxu0 %v1797
        %2309 = vmatpush1.bf16.msra.mxu0 %v1796
        %2310 = vmatprep.subr.bf16.mxu0 %v1799
        %2311 = vmatpush1.bf16.msra.mxu0 %v1798
        %2312 = vmatprep.subr.bf16.mxu0 %v1801
        %2313 = vmatpush1.bf16.msra.mxu0 %v1800
        %2314 = vmatprep.subr.bf16.mxu0 %v1803
        %2315 = vmatpush1.bf16.msra.mxu0 %v1802
        %2316 = vmatprep.subr.bf16.mxu0 %v1805
        %2317 = vmatpush1.bf16.msra.mxu0 %v1804
        %2318 = vmatprep.subr.bf16.mxu0 %v1807
        %2319 = vmatpush1.bf16.msra.mxu0 %v1806
        %2320 = vmatprep.subr.bf16.mxu0 %v1809
        %2321 = vmatpush1.bf16.msra.mxu0 %v1808
        %2322 = vmatprep.subr.bf16.mxu0 %v1811
        %2323 = vmatpush1.bf16.msra.mxu0 %v1810
        %2324 = vmatprep.subr.bf16.mxu0 %v1813
        %2325 = vmatpush1.bf16.msra.mxu0 %v1812
        %2326 = vmatprep.subr.bf16.mxu0 %v1815
        %2327 = vmatpush1.bf16.msra.mxu0 %v1814
        %2328 = vmatprep.subr.bf16.mxu0 %v1817
        %2329 = vmatpush1.bf16.msra.mxu0 %v1816
        %2330 = vmatprep.mubr.bf16.mxu0 %v623
        %2331 = vmatmul.mubr.bf16.gmra.mrb[0].mxu0 %v622
        %v2332 = vpop.f32.mrb[0].mxu0
        %v2333 = vadd.f32 %v1011, %v2332
        %v2334 = vpop.f32.mrb[0].mxu0
        %v2335 = vadd.f32 %v1015, %v2334
        %v2336 = vpop.f32.mrb[0].mxu0
        %v2337 = vadd.f32 %v1011, %v2336
        %v2338 = vpop.f32.mrb[0].mxu0
        %v2339 = vadd.f32 %v1015, %v2338
        %2340 = vmatprep.mubr.bf16.mxu0 %v639
        %2341 = vmatmul.mubr.bf16.gmra.mrb[0].mxu0 %v638
        %v2342 = vpop.f32.mrb[0].mxu0
        %v2343 = vadd.f32 %v1011, %v2342
        %v2344 = vpop.f32.mrb[0].mxu0
        %v2345 = vadd.f32 %v1015, %v2344
        %v2346 = vpop.f32.mrb[0].mxu0
        %v2347 = vadd.f32 %v1011, %v2346
        %v2348 = vpop.f32.mrb[0].mxu0
        %v2349 = vadd.f32 %v1015, %v2348
        %2350 = vmatprep.mubr.bf16.mxu0 %v655
        %2351 = vmatmul.mubr.bf16.gmra.mrb[0].mxu0 %v654
        %v2352 = vpop.f32.mrb[0].mxu0
        %v2353 = vadd.f32 %v1011, %v2352
        %v2354 = vpop.f32.mrb[0].mxu0
        %v2355 = vadd.f32 %v1015, %v2354
        %v2356 = vpop.f32.mrb[0].mxu0
        %v2357 = vadd.f32 %v1011, %v2356
        %v2358 = vpop.f32.mrb[0].mxu0
        %v2359 = vadd.f32 %v1015, %v2358
        %2360 = vmatprep.mubr.bf16.mxu0 %v671
        %2361 = vmatmul.mubr.bf16.gmra.mrb[0].mxu0 %v670
        %v2362 = vpop.f32.mrb[0].mxu0
        %v2363 = vadd.f32 %v1011, %v2362
        %v2364 = vpop.f32.mrb[0].mxu0
        %v2365 = vadd.f32 %v1015, %v2364
        %v2366 = vpop.f32.mrb[0].mxu0
        %v2367 = vadd.f32 %v1011, %v2366
        %v2368 = vpop.f32.mrb[0].mxu0
        %v2369 = vadd.f32 %v1015, %v2368
        %2370 = vmatprep.mubr.bf16.mxu0 %v687
        %2371 = vmatmul.mubr.bf16.gmra.mrb[0].mxu0 %v686
        %v2372 = vpop.f32.mrb[0].mxu0
        %v2373 = vadd.f32 %v1011, %v2372
        %v2374 = vpop.f32.mrb[0].mxu0
        %v2375 = vadd.f32 %v1015, %v2374
        %v2376 = vpop.f32.mrb[0].mxu0
        %v2377 = vadd.f32 %v1011, %v2376
        %v2378 = vpop.f32.mrb[0].mxu0
        %v2379 = vadd.f32 %v1015, %v2378
        %2380 = vmatprep.mubr.bf16.mxu0 %v703
        %2381 = vmatmul.mubr.bf16.gmra.mrb[0].mxu0 %v702
        %v2382 = vpop.f32.mrb[0].mxu0
        %v2383 = vadd.f32 %v1011, %v2382
        %v2384 = vpop.f32.mrb[0].mxu0
        %v2385 = vadd.f32 %v1015, %v2384
        %v2386 = vpop.f32.mrb[0].mxu0
        %v2387 = vadd.f32 %v1011, %v2386
        %v2388 = vpop.f32.mrb[0].mxu0
        %v2389 = vadd.f32 %v1015, %v2388
        %2390 = vmatprep.mubr.bf16.mxu0 %v719
        %2391 = vmatmul.mubr.bf16.gmra.mrb[0].mxu0 %v718
        %v2392 = vpop.f32.mrb[0].mxu0
        %v2393 = vadd.f32 %v1011, %v2392
        %v2394 = vpop.f32.mrb[0].mxu0
        %v2395 = vadd.f32 %v1015, %v2394
        %v2396 = vpop.f32.mrb[0].mxu0
        %v2397 = vadd.f32 %v1011, %v2396
        %v2398 = vpop.f32.mrb[0].mxu0
        %v2399 = vadd.f32 %v1015, %v2398
        %2400 = vmatprep.mubr.bf16.mxu0 %v735
        %2401 = vmatmul.mubr.bf16.gmra.mrb[0].mxu0 %v734
        %v2402 = vpop.f32.mrb[0].mxu0
        %v2403 = vadd.f32 %v1011, %v2402
        %v2404 = vpop.f32.mrb[0].mxu0
        %v2405 = vadd.f32 %v1015, %v2404
        %v2406 = vpop.f32.mrb[0].mxu0
        %v2407 = vadd.f32 %v1011, %v2406
        %v2408 = vpop.f32.mrb[0].mxu0
        %v2409 = vadd.f32 %v1015, %v2408
        %2410 = vdwg.mxu0
        %2411 = vmatprep.subr.bf16.mxu0 %v1819
        %2412 = vmatpush1.bf16.msra.mxu0 %v1818
        %2413 = vmatprep.subr.bf16.mxu0 %v1821
        %2414 = vmatpush1.bf16.msra.mxu0 %v1820
        %2415 = vmatprep.subr.bf16.mxu0 %v1823
        %2416 = vmatpush1.bf16.msra.mxu0 %v1822
        %2417 = vmatprep.subr.bf16.mxu0 %v1825
        %2418 = vmatpush1.bf16.msra.mxu0 %v1824
        %2419 = vmatprep.subr.bf16.mxu0 %v1827
        %2420 = vmatpush1.bf16.msra.mxu0 %v1826
        %2421 = vmatprep.subr.bf16.mxu0 %v1829
        %2422 = vmatpush1.bf16.msra.mxu0 %v1828
        %2423 = vmatprep.subr.bf16.mxu0 %v1831
        %2424 = vmatpush1.bf16.msra.mxu0 %v1830
        %2425 = vmatprep.subr.bf16.mxu0 %v1833
        %2426 = vmatpush1.bf16.msra.mxu0 %v1832
        %2427 = vmatprep.subr.bf16.mxu0 %v1835
        %2428 = vmatpush1.bf16.msra.mxu0 %v1834
        %2429 = vmatprep.subr.bf16.mxu0 %v1837
        %2430 = vmatpush1.bf16.msra.mxu0 %v1836
        %2431 = vmatprep.subr.bf16.mxu0 %v1839
        %2432 = vmatpush1.bf16.msra.mxu0 %v1838
        %2433 = vmatprep.subr.bf16.mxu0 %v1841
        %2434 = vmatpush1.bf16.msra.mxu0 %v1840
        %2435 = vmatprep.subr.bf16.mxu0 %v1843
        %2436 = vmatpush1.bf16.msra.mxu0 %v1842
        %2437 = vmatprep.subr.bf16.mxu0 %v1845
        %2438 = vmatpush1.bf16.msra.mxu0 %v1844
        %2439 = vmatprep.subr.bf16.mxu0 %v1847
        %2440 = vmatpush1.bf16.msra.mxu0 %v1846
        %2441 = vmatprep.subr.bf16.mxu0 %v1849
        %2442 = vmatpush1.bf16.msra.mxu0 %v1848
        %2443 = vmatprep.mubr.bf16.mxu0 %v625
        %2444 = vmatmul.mubr.bf16.gmra.mrb[0].mxu0 %v624
        %v2445 = vpop.f32.mrb[0].mxu0
        %v2446 = vadd.f32 %v2333, %v2445
        %v2447 = vpop.f32.mrb[0].mxu0
        %v2448 = vadd.f32 %v2335, %v2447
        %v2449 = vpop.f32.mrb[0].mxu0
        %v2450 = vadd.f32 %v2337, %v2449
        %v2451 = vpop.f32.mrb[0].mxu0
        %v2452 = vadd.f32 %v2339, %v2451
        %2453 = vmatprep.mubr.bf16.mxu0 %v641
        %2454 = vmatmul.mubr.bf16.gmra.mrb[0].mxu0 %v640
        %v2455 = vpop.f32.mrb[0].mxu0
        %v2456 = vadd.f32 %v2343, %v2455
        %v2457 = vpop.f32.mrb[0].mxu0
        %v2458 = vadd.f32 %v2345, %v2457
        %v2459 = vpop.f32.mrb[0].mxu0
        %v2460 = vadd.f32 %v2347, %v2459
        %v2461 = vpop.f32.mrb[0].mxu0
        %v2462 = vadd.f32 %v2349, %v2461
        %2463 = vmatprep.mubr.bf16.mxu0 %v657
        %2464 = vmatmul.mubr.bf16.gmra.mrb[0].mxu0 %v656
        %v2465 = vpop.f32.mrb[0].mxu0
        %v2466 = vadd.f32 %v2353, %v2465
        %v2467 = vpop.f32.mrb[0].mxu0
        %v2468 = vadd.f32 %v2355, %v2467
        %v2469 = vpop.f32.mrb[0].mxu0
        %v2470 = vadd.f32 %v2357, %v2469
        %v2471 = vpop.f32.mrb[0].mxu0
        %v2472 = vadd.f32 %v2359, %v2471
        %2473 = vmatprep.mubr.bf16.mxu0 %v673
        %2474 = vmatmul.mubr.bf16.gmra.mrb[0].mxu0 %v672
        %v2475 = vpop.f32.mrb[0].mxu0
        %v2476 = vadd.f32 %v2363, %v2475
        %v2477 = vpop.f32.mrb[0].mxu0
        %v2478 = vadd.f32 %v2365, %v2477
        %v2479 = vpop.f32.mrb[0].mxu0
        %v2480 = vadd.f32 %v2367, %v2479
        %v2481 = vpop.f32.mrb[0].mxu0
        %v2482 = vadd.f32 %v2369, %v2481
        %2483 = vmatprep.mubr.bf16.mxu0 %v689
        %2484 = vmatmul.mubr.bf16.gmra.mrb[0].mxu0 %v688
        %v2485 = vpop.f32.mrb[0].mxu0
        %v2486 = vadd.f32 %v2373, %v2485
        %v2487 = vpop.f32.mrb[0].mxu0
        %v2488 = vadd.f32 %v2375, %v2487
        %v2489 = vpop.f32.mrb[0].mxu0
        %v2490 = vadd.f32 %v2377, %v2489
        %v2491 = vpop.f32.mrb[0].mxu0
        %v2492 = vadd.f32 %v2379, %v2491
        %2493 = vmatprep.mubr.bf16.mxu0 %v705
        %2494 = vmatmul.mubr.bf16.gmra.mrb[0].mxu0 %v704
        %v2495 = vpop.f32.mrb[0].mxu0
        %v2496 = vadd.f32 %v2383, %v2495
        %v2497 = vpop.f32.mrb[0].mxu0
        %v2498 = vadd.f32 %v2385, %v2497
        %v2499 = vpop.f32.mrb[0].mxu0
        %v2500 = vadd.f32 %v2387, %v2499
        %v2501 = vpop.f32.mrb[0].mxu0
        %v2502 = vadd.f32 %v2389, %v2501
        %2503 = vmatprep.mubr.bf16.mxu0 %v721
        %2504 = vmatmul.mubr.bf16.gmra.mrb[0].mxu0 %v720
        %v2505 = vpop.f32.mrb[0].mxu0
        %v2506 = vadd.f32 %v2393, %v2505
        %v2507 = vpop.f32.mrb[0].mxu0
        %v2508 = vadd.f32 %v2395, %v2507
        %v2509 = vpop.f32.mrb[0].mxu0
        %v2510 = vadd.f32 %v2397, %v2509
        %v2511 = vpop.f32.mrb[0].mxu0
        %v2512 = vadd.f32 %v2399, %v2511
        %2513 = vmatprep.mubr.bf16.mxu0 %v737
        %2514 = vmatmul.mubr.bf16.gmra.mrb[0].mxu0 %v736
        %v2515 = vpop.f32.mrb[0].mxu0
        %v2516 = vadd.f32 %v2403, %v2515
        %v2517 = vpop.f32.mrb[0].mxu0
        %v2518 = vadd.f32 %v2405, %v2517
        %v2519 = vpop.f32.mrb[0].mxu0
        %v2520 = vadd.f32 %v2407, %v2519
        %v2521 = vpop.f32.mrb[0].mxu0
        %v2522 = vadd.f32 %v2409, %v2521
        %2523 = vdwg.mxu0
        %2524 = vmatprep.subr.bf16.mxu0 %v1851
        %2525 = vmatpush1.bf16.msra.mxu0 %v1850
        %2526 = vmatprep.subr.bf16.mxu0 %v1853
        %2527 = vmatpush1.bf16.msra.mxu0 %v1852
        %2528 = vmatprep.subr.bf16.mxu0 %v1855
        %2529 = vmatpush1.bf16.msra.mxu0 %v1854
        %2530 = vmatprep.subr.bf16.mxu0 %v1857
        %2531 = vmatpush1.bf16.msra.mxu0 %v1856
        %2532 = vmatprep.subr.bf16.mxu0 %v1859
        %2533 = vmatpush1.bf16.msra.mxu0 %v1858
        %2534 = vmatprep.subr.bf16.mxu0 %v1861
        %2535 = vmatpush1.bf16.msra.mxu0 %v1860
        %2536 = vmatprep.subr.bf16.mxu0 %v1863
        %2537 = vmatpush1.bf16.msra.mxu0 %v1862
        %2538 = vmatprep.subr.bf16.mxu0 %v1865
        %2539 = vmatpush1.bf16.msra.mxu0 %v1864
        %2540 = vmatprep.subr.bf16.mxu0 %v1867
        %2541 = vmatpush1.bf16.msra.mxu0 %v1866
        %2542 = vmatprep.subr.bf16.mxu0 %v1869
        %2543 = vmatpush1.bf16.msra.mxu0 %v1868
        %2544 = vmatprep.subr.bf16.mxu0 %v1871
        %2545 = vmatpush1.bf16.msra.mxu0 %v1870
        %2546 = vmatprep.subr.bf16.mxu0 %v1873
        %2547 = vmatpush1.bf16.msra.mxu0 %v1872
        %2548 = vmatprep.subr.bf16.mxu0 %v1875
        %2549 = vmatpush1.bf16.msra.mxu0 %v1874
        %2550 = vmatprep.subr.bf16.mxu0 %v1877
        %2551 = vmatpush1.bf16.msra.mxu0 %v1876
        %2552 = vmatprep.subr.bf16.mxu0 %v1879
        %2553 = vmatpush1.bf16.msra.mxu0 %v1878
        %2554 = vmatprep.subr.bf16.mxu0 %v1881
        %2555 = vmatpush1.bf16.msra.mxu0 %v1880
        %2556 = vmatprep.mubr.bf16.mxu0 %v627
        %2557 = vmatmul.mubr.bf16.gmra.mrb[0].mxu0 %v626
        %v2558 = vpop.f32.mrb[0].mxu0
        %v2559 = vadd.f32 %v2446, %v2558
        %v2560 = vpop.f32.mrb[0].mxu0
        %v2561 = vadd.f32 %v2448, %v2560
        %v2562 = vpop.f32.mrb[0].mxu0
        %v2563 = vadd.f32 %v2450, %v2562
        %v2564 = vpop.f32.mrb[0].mxu0
        %v2565 = vadd.f32 %v2452, %v2564
        %2566 = vmatprep.mubr.bf16.mxu0 %v643
        %2567 = vmatmul.mubr.bf16.gmra.mrb[0].mxu0 %v642
        %v2568 = vpop.f32.mrb[0].mxu0
        %v2569 = vadd.f32 %v2456, %v2568
        %v2570 = vpop.f32.mrb[0].mxu0
        %v2571 = vadd.f32 %v2458, %v2570
        %v2572 = vpop.f32.mrb[0].mxu0
        %v2573 = vadd.f32 %v2460, %v2572
        %v2574 = vpop.f32.mrb[0].mxu0
        %v2575 = vadd.f32 %v2462, %v2574
        %2576 = vmatprep.mubr.bf16.mxu0 %v659
        %2577 = vmatmul.mubr.bf16.gmra.mrb[0].mxu0 %v658
        %v2578 = vpop.f32.mrb[0].mxu0
        %v2579 = vadd.f32 %v2466, %v2578
        %v2580 = vpop.f32.mrb[0].mxu0
        %v2581 = vadd.f32 %v2468, %v2580
        %v2582 = vpop.f32.mrb[0].mxu0
        %v2583 = vadd.f32 %v2470, %v2582
        %v2584 = vpop.f32.mrb[0].mxu0
        %v2585 = vadd.f32 %v2472, %v2584
        %2586 = vmatprep.mubr.bf16.mxu0 %v675
        %2587 = vmatmul.mubr.bf16.gmra.mrb[0].mxu0 %v674
        %v2588 = vpop.f32.mrb[0].mxu0
        %v2589 = vadd.f32 %v2476, %v2588
        %v2590 = vpop.f32.mrb[0].mxu0
        %v2591 = vadd.f32 %v2478, %v2590
        %v2592 = vpop.f32.mrb[0].mxu0
        %v2593 = vadd.f32 %v2480, %v2592
        %v2594 = vpop.f32.mrb[0].mxu0
        %v2595 = vadd.f32 %v2482, %v2594
        %2596 = vmatprep.mubr.bf16.mxu0 %v691
        %2597 = vmatmul.mubr.bf16.gmra.mrb[0].mxu0 %v690
        %v2598 = vpop.f32.mrb[0].mxu0
        %v2599 = vadd.f32 %v2486, %v2598
        %v2600 = vpop.f32.mrb[0].mxu0
        %v2601 = vadd.f32 %v2488, %v2600
        %v2602 = vpop.f32.mrb[0].mxu0
        %v2603 = vadd.f32 %v2490, %v2602
        %v2604 = vpop.f32.mrb[0].mxu0
        %v2605 = vadd.f32 %v2492, %v2604
        %2606 = vmatprep.mubr.bf16.mxu0 %v707
        %2607 = vmatmul.mubr.bf16.gmra.mrb[0].mxu0 %v706
        %v2608 = vpop.f32.mrb[0].mxu0
        %v2609 = vadd.f32 %v2496, %v2608
        %v2610 = vpop.f32.mrb[0].mxu0
        %v2611 = vadd.f32 %v2498, %v2610
        %v2612 = vpop.f32.mrb[0].mxu0
        %v2613 = vadd.f32 %v2500, %v2612
        %v2614 = vpop.f32.mrb[0].mxu0
        %v2615 = vadd.f32 %v2502, %v2614
        %2616 = vmatprep.mubr.bf16.mxu0 %v723
        %2617 = vmatmul.mubr.bf16.gmra.mrb[0].mxu0 %v722
        %v2618 = vpop.f32.mrb[0].mxu0
        %v2619 = vadd.f32 %v2506, %v2618
        %v2620 = vpop.f32.mrb[0].mxu0
        %v2621 = vadd.f32 %v2508, %v2620
        %v2622 = vpop.f32.mrb[0].mxu0
        %v2623 = vadd.f32 %v2510, %v2622
        %v2624 = vpop.f32.mrb[0].mxu0
        %v2625 = vadd.f32 %v2512, %v2624
        %2626 = vmatprep.mubr.bf16.mxu0 %v739
        %2627 = vmatmul.mubr.bf16.gmra.mrb[0].mxu0 %v738
        %v2628 = vpop.f32.mrb[0].mxu0
        %v2629 = vadd.f32 %v2516, %v2628
        %v2630 = vpop.f32.mrb[0].mxu0
        %v2631 = vadd.f32 %v2518, %v2630
        %v2632 = vpop.f32.mrb[0].mxu0
        %v2633 = vadd.f32 %v2520, %v2632
        %v2634 = vpop.f32.mrb[0].mxu0
        %v2635 = vadd.f32 %v2522, %v2634
        %2636 = vdwg.mxu0
        %2637 = vmatprep.subr.bf16.mxu0 %v1883
        %2638 = vmatpush1.bf16.msra.mxu0 %v1882
        %2639 = vmatprep.subr.bf16.mxu0 %v1885
        %2640 = vmatpush1.bf16.msra.mxu0 %v1884
        %2641 = vmatprep.subr.bf16.mxu0 %v1887
        %2642 = vmatpush1.bf16.msra.mxu0 %v1886
        %2643 = vmatprep.subr.bf16.mxu0 %v1889
        %2644 = vmatpush1.bf16.msra.mxu0 %v1888
        %2645 = vmatprep.subr.bf16.mxu0 %v1891
        %2646 = vmatpush1.bf16.msra.mxu0 %v1890
        %2647 = vmatprep.subr.bf16.mxu0 %v1893
        %2648 = vmatpush1.bf16.msra.mxu0 %v1892
        %2649 = vmatprep.subr.bf16.mxu0 %v1895
        %2650 = vmatpush1.bf16.msra.mxu0 %v1894
        %2651 = vmatprep.subr.bf16.mxu0 %v1897
        %2652 = vmatpush1.bf16.msra.mxu0 %v1896
        %2653 = vmatprep.subr.bf16.mxu0 %v1899
        %2654 = vmatpush1.bf16.msra.mxu0 %v1898
        %2655 = vmatprep.subr.bf16.mxu0 %v1901
        %2656 = vmatpush1.bf16.msra.mxu0 %v1900
        %2657 = vmatprep.subr.bf16.mxu0 %v1903
        %2658 = vmatpush1.bf16.msra.mxu0 %v1902
        %2659 = vmatprep.subr.bf16.mxu0 %v1905
        %2660 = vmatpush1.bf16.msra.mxu0 %v1904
        %2661 = vmatprep.subr.bf16.mxu0 %v1907
        %2662 = vmatpush1.bf16.msra.mxu0 %v1906
        %2663 = vmatprep.subr.bf16.mxu0 %v1909
        %2664 = vmatpush1.bf16.msra.mxu0 %v1908
        %2665 = vmatprep.subr.bf16.mxu0 %v1911
        %2666 = vmatpush1.bf16.msra.mxu0 %v1910
        %2667 = vmatprep.subr.bf16.mxu0 %v1913
        %2668 = vmatpush1.bf16.msra.mxu0 %v1912
        %2669 = vmatprep.mubr.bf16.mxu0 %v629
        %2670 = vmatmul.mubr.bf16.gmra.mrb[0].mxu0 %v628
        %v2671 = vpop.f32.mrb[0].mxu0
        %v2672 = vadd.f32 %v2559, %v2671
        %v2673 = vpop.f32.mrb[0].mxu0
        %v2674 = vadd.f32 %v2561, %v2673
        %v2675 = vpop.f32.mrb[0].mxu0
        %v2676 = vadd.f32 %v2563, %v2675
        %v2677 = vpop.f32.mrb[0].mxu0
        %v2678 = vadd.f32 %v2565, %v2677
        %2679 = vmatprep.mubr.bf16.mxu0 %v645
        %2680 = vmatmul.mubr.bf16.gmra.mrb[0].mxu0 %v644
        %v2681 = vpop.f32.mrb[0].mxu0
        %v2682 = vadd.f32 %v2569, %v2681
        %v2683 = vpop.f32.mrb[0].mxu0
        %v2684 = vadd.f32 %v2571, %v2683
        %v2685 = vpop.f32.mrb[0].mxu0
        %v2686 = vadd.f32 %v2573, %v2685
        %v2687 = vpop.f32.mrb[0].mxu0
        %v2688 = vadd.f32 %v2575, %v2687
        %2689 = vmatprep.mubr.bf16.mxu0 %v661
        %2690 = vmatmul.mubr.bf16.gmra.mrb[0].mxu0 %v660
        %v2691 = vpop.f32.mrb[0].mxu0
        %v2692 = vadd.f32 %v2579, %v2691
        %v2693 = vpop.f32.mrb[0].mxu0
        %v2694 = vadd.f32 %v2581, %v2693
        %v2695 = vpop.f32.mrb[0].mxu0
        %v2696 = vadd.f32 %v2583, %v2695
        %v2697 = vpop.f32.mrb[0].mxu0
        %v2698 = vadd.f32 %v2585, %v2697
        %2699 = vmatprep.mubr.bf16.mxu0 %v677
        %2700 = vmatmul.mubr.bf16.gmra.mrb[0].mxu0 %v676
        %v2701 = vpop.f32.mrb[0].mxu0
        %v2702 = vadd.f32 %v2589, %v2701
        %v2703 = vpop.f32.mrb[0].mxu0
        %v2704 = vadd.f32 %v2591, %v2703
        %v2705 = vpop.f32.mrb[0].mxu0
        %v2706 = vadd.f32 %v2593, %v2705
        %v2707 = vpop.f32.mrb[0].mxu0
        %v2708 = vadd.f32 %v2595, %v2707
        %2709 = vmatprep.mubr.bf16.mxu0 %v693
        %2710 = vmatmul.mubr.bf16.gmra.mrb[0].mxu0 %v692
        %v2711 = vpop.f32.mrb[0].mxu0
        %v2712 = vadd.f32 %v2599, %v2711
        %v2713 = vpop.f32.mrb[0].mxu0
        %v2714 = vadd.f32 %v2601, %v2713
        %v2715 = vpop.f32.mrb[0].mxu0
        %v2716 = vadd.f32 %v2603, %v2715
        %v2717 = vpop.f32.mrb[0].mxu0
        %v2718 = vadd.f32 %v2605, %v2717
        %2719 = vmatprep.mubr.bf16.mxu0 %v709
        %2720 = vmatmul.mubr.bf16.gmra.mrb[0].mxu0 %v708
        %v2721 = vpop.f32.mrb[0].mxu0
        %v2722 = vadd.f32 %v2609, %v2721
        %v2723 = vpop.f32.mrb[0].mxu0
        %v2724 = vadd.f32 %v2611, %v2723
        %v2725 = vpop.f32.mrb[0].mxu0
        %v2726 = vadd.f32 %v2613, %v2725
        %v2727 = vpop.f32.mrb[0].mxu0
        %v2728 = vadd.f32 %v2615, %v2727
        %2729 = vmatprep.mubr.bf16.mxu0 %v725
        %2730 = vmatmul.mubr.bf16.gmra.mrb[0].mxu0 %v724
        %v2731 = vpop.f32.mrb[0].mxu0
        %v2732 = vadd.f32 %v2619, %v2731
        %v2733 = vpop.f32.mrb[0].mxu0
        %v2734 = vadd.f32 %v2621, %v2733
        %v2735 = vpop.f32.mrb[0].mxu0
        %v2736 = vadd.f32 %v2623, %v2735
        %v2737 = vpop.f32.mrb[0].mxu0
        %v2738 = vadd.f32 %v2625, %v2737
        %2739 = vmatprep.mubr.bf16.mxu0 %v741
        %2740 = vmatmul.mubr.bf16.gmra.mrb[0].mxu0 %v740
        %v2741 = vpop.f32.mrb[0].mxu0
        %v2742 = vadd.f32 %v2629, %v2741
        %v2743 = vpop.f32.mrb[0].mxu0
        %v2744 = vadd.f32 %v2631, %v2743
        %v2745 = vpop.f32.mrb[0].mxu0
        %v2746 = vadd.f32 %v2633, %v2745
        %v2747 = vpop.f32.mrb[0].mxu0
        %v2748 = vadd.f32 %v2635, %v2747
        %2749 = vdwg.mxu0
        %2750 = vmatprep.subr.bf16.mxu0 %v1915
        %2751 = vmatpush1.bf16.msra.mxu0 %v1914
        %2752 = vmatprep.subr.bf16.mxu0 %v1917
        %2753 = vmatpush1.bf16.msra.mxu0 %v1916
        %2754 = vmatprep.subr.bf16.mxu0 %v1919
        %2755 = vmatpush1.bf16.msra.mxu0 %v1918
        %2756 = vmatprep.subr.bf16.mxu0 %v1921
        %2757 = vmatpush1.bf16.msra.mxu0 %v1920
        %2758 = vmatprep.subr.bf16.mxu0 %v1923
        %2759 = vmatpush1.bf16.msra.mxu0 %v1922
        %2760 = vmatprep.subr.bf16.mxu0 %v1925
        %2761 = vmatpush1.bf16.msra.mxu0 %v1924
        %2762 = vmatprep.subr.bf16.mxu0 %v1927
        %2763 = vmatpush1.bf16.msra.mxu0 %v1926
        %2764 = vmatprep.subr.bf16.mxu0 %v1929
        %2765 = vmatpush1.bf16.msra.mxu0 %v1928
        %2766 = vmatprep.subr.bf16.mxu0 %v1931
        %2767 = vmatpush1.bf16.msra.mxu0 %v1930
        %2768 = vmatprep.subr.bf16.mxu0 %v1933
        %2769 = vmatpush1.bf16.msra.mxu0 %v1932
        %2770 = vmatprep.subr.bf16.mxu0 %v1935
        %2771 = vmatpush1.bf16.msra.mxu0 %v1934
        %2772 = vmatprep.subr.bf16.mxu0 %v1937
        %2773 = vmatpush1.bf16.msra.mxu0 %v1936
        %2774 = vmatprep.subr.bf16.mxu0 %v1939
        %2775 = vmatpush1.bf16.msra.mxu0 %v1938
        %2776 = vmatprep.subr.bf16.mxu0 %v1941
        %2777 = vmatpush1.bf16.msra.mxu0 %v1940
        %2778 = vmatprep.subr.bf16.mxu0 %v1943
        %2779 = vmatpush1.bf16.msra.mxu0 %v1942
        %2780 = vmatprep.subr.bf16.mxu0 %v1945
        %2781 = vmatpush1.bf16.msra.mxu0 %v1944
        %2782 = vmatprep.mubr.bf16.mxu0 %v631
        %2783 = vmatmul.mubr.bf16.gmra.mrb[0].mxu0 %v630
        %v2784 = vpop.f32.mrb[0].mxu0
        %v2785 = vadd.f32 %v2672, %v2784
        %v2786 = vpop.f32.mrb[0].mxu0
        %v2787 = vadd.f32 %v2674, %v2786
        %v2788 = vpop.f32.mrb[0].mxu0
        %v2789 = vadd.f32 %v2676, %v2788
        %v2790 = vpop.f32.mrb[0].mxu0
        %v2791 = vadd.f32 %v2678, %v2790
        %2792 = vmatprep.mubr.bf16.mxu0 %v647
        %2793 = vmatmul.mubr.bf16.gmra.mrb[0].mxu0 %v646
        %v2794 = vpop.f32.mrb[0].mxu0
        %v2795 = vadd.f32 %v2682, %v2794
        %v2796 = vpop.f32.mrb[0].mxu0
        %v2797 = vadd.f32 %v2684, %v2796
        %v2798 = vpop.f32.mrb[0].mxu0
        %v2799 = vadd.f32 %v2686, %v2798
        %v2800 = vpop.f32.mrb[0].mxu0
        %v2801 = vadd.f32 %v2688, %v2800
        %2802 = vmatprep.mubr.bf16.mxu0 %v663
        %2803 = vmatmul.mubr.bf16.gmra.mrb[0].mxu0 %v662
        %v2804 = vpop.f32.mrb[0].mxu0
        %v2805 = vadd.f32 %v2692, %v2804
        %v2806 = vpop.f32.mrb[0].mxu0
        %v2807 = vadd.f32 %v2694, %v2806
        %v2808 = vpop.f32.mrb[0].mxu0
        %v2809 = vadd.f32 %v2696, %v2808
        %v2810 = vpop.f32.mrb[0].mxu0
        %v2811 = vadd.f32 %v2698, %v2810
        %2812 = vmatprep.mubr.bf16.mxu0 %v679
        %2813 = vmatmul.mubr.bf16.gmra.mrb[0].mxu0 %v678
        %v2814 = vpop.f32.mrb[0].mxu0
        %v2815 = vadd.f32 %v2702, %v2814
        %v2816 = vpop.f32.mrb[0].mxu0
        %v2817 = vadd.f32 %v2704, %v2816
        %v2818 = vpop.f32.mrb[0].mxu0
        %v2819 = vadd.f32 %v2706, %v2818
        %v2820 = vpop.f32.mrb[0].mxu0
        %v2821 = vadd.f32 %v2708, %v2820
        %2822 = vmatprep.mubr.bf16.mxu0 %v695
        %2823 = vmatmul.mubr.bf16.gmra.mrb[0].mxu0 %v694
        %v2824 = vpop.f32.mrb[0].mxu0
        %v2825 = vadd.f32 %v2712, %v2824
        %v2826 = vpop.f32.mrb[0].mxu0
        %v2827 = vadd.f32 %v2714, %v2826
        %v2828 = vpop.f32.mrb[0].mxu0
        %v2829 = vadd.f32 %v2716, %v2828
        %v2830 = vpop.f32.mrb[0].mxu0
        %v2831 = vadd.f32 %v2718, %v2830
        %2832 = vmatprep.mubr.bf16.mxu0 %v711
        %2833 = vmatmul.mubr.bf16.gmra.mrb[0].mxu0 %v710
        %v2834 = vpop.f32.mrb[0].mxu0
        %v2835 = vadd.f32 %v2722, %v2834
        %v2836 = vpop.f32.mrb[0].mxu0
        %v2837 = vadd.f32 %v2724, %v2836
        %v2838 = vpop.f32.mrb[0].mxu0
        %v2839 = vadd.f32 %v2726, %v2838
        %v2840 = vpop.f32.mrb[0].mxu0
        %v2841 = vadd.f32 %v2728, %v2840
        %2842 = vmatprep.mubr.bf16.mxu0 %v727
        %2843 = vmatmul.mubr.bf16.gmra.mrb[0].mxu0 %v726
        %v2844 = vpop.f32.mrb[0].mxu0
        %v2845 = vadd.f32 %v2732, %v2844
        %v2846 = vpop.f32.mrb[0].mxu0
        %v2847 = vadd.f32 %v2734, %v2846
        %v2848 = vpop.f32.mrb[0].mxu0
        %v2849 = vadd.f32 %v2736, %v2848
        %v2850 = vpop.f32.mrb[0].mxu0
        %v2851 = vadd.f32 %v2738, %v2850
        %2852 = vmatprep.mubr.bf16.mxu0 %v743
        %2853 = vmatmul.mubr.bf16.gmra.mrb[0].mxu0 %v742
        %v2854 = vpop.f32.mrb[0].mxu0
        %v2855 = vadd.f32 %v2742, %v2854
        %v2856 = vpop.f32.mrb[0].mxu0
        %v2857 = vadd.f32 %v2744, %v2856
        %v2858 = vpop.f32.mrb[0].mxu0
        %v2859 = vadd.f32 %v2746, %v2858
        %v2860 = vpop.f32.mrb[0].mxu0
        %v2861 = vadd.f32 %v2748, %v2860
        %2862 = vdwg.mxu0
        %2863 = vmatprep.subr.bf16.mxu0 %v1947
        %2864 = vmatpush1.bf16.msra.mxu0 %v1946
        %2865 = vmatprep.subr.bf16.mxu0 %v1949
        %2866 = vmatpush1.bf16.msra.mxu0 %v1948
        %2867 = vmatprep.subr.bf16.mxu0 %v1951
        %2868 = vmatpush1.bf16.msra.mxu0 %v1950
        %2869 = vmatprep.subr.bf16.mxu0 %v1953
        %2870 = vmatpush1.bf16.msra.mxu0 %v1952
        %2871 = vmatprep.subr.bf16.mxu0 %v1955
        %2872 = vmatpush1.bf16.msra.mxu0 %v1954
        %2873 = vmatprep.subr.bf16.mxu0 %v1957
        %2874 = vmatpush1.bf16.msra.mxu0 %v1956
        %2875 = vmatprep.subr.bf16.mxu0 %v1959
        %2876 = vmatpush1.bf16.msra.mxu0 %v1958
        %2877 = vmatprep.subr.bf16.mxu0 %v1961
        %2878 = vmatpush1.bf16.msra.mxu0 %v1960
        %2879 = vmatprep.subr.bf16.mxu0 %v1963
        %2880 = vmatpush1.bf16.msra.mxu0 %v1962
        %2881 = vmatprep.subr.bf16.mxu0 %v1965
        %2882 = vmatpush1.bf16.msra.mxu0 %v1964
        %2883 = vmatprep.subr.bf16.mxu0 %v1967
        %2884 = vmatpush1.bf16.msra.mxu0 %v1966
        %2885 = vmatprep.subr.bf16.mxu0 %v1969
        %2886 = vmatpush1.bf16.msra.mxu0 %v1968
        %2887 = vmatprep.subr.bf16.mxu0 %v1971
        %2888 = vmatpush1.bf16.msra.mxu0 %v1970
        %2889 = vmatprep.subr.bf16.mxu0 %v1973
        %2890 = vmatpush1.bf16.msra.mxu0 %v1972
        %2891 = vmatprep.subr.bf16.mxu0 %v1975
        %2892 = vmatpush1.bf16.msra.mxu0 %v1974
        %2893 = vmatprep.subr.bf16.mxu0 %v1977
        %2894 = vmatpush1.bf16.msra.mxu0 %v1976
        %2895 = vmatprep.mubr.bf16.mxu0 %v633
        %2896 = vmatmul.mubr.bf16.gmra.mrb[0].mxu0 %v632
        %v2897 = vpop.f32.mrb[0].mxu0
        %v2898 = vadd.f32 %v2785, %v2897
        %v2899 = vpop.f32.mrb[0].mxu0
        %v2900 = vadd.f32 %v2787, %v2899
        %v2901 = vpop.f32.mrb[0].mxu0
        %v2902 = vadd.f32 %v2789, %v2901
        %v2903 = vpop.f32.mrb[0].mxu0
        %v2904 = vadd.f32 %v2791, %v2903
        %2905 = vmatprep.mubr.bf16.mxu0 %v649
        %2906 = vmatmul.mubr.bf16.gmra.mrb[0].mxu0 %v648
        %v2907 = vpop.f32.mrb[0].mxu0
        %v2908 = vadd.f32 %v2795, %v2907
        %v2909 = vpop.f32.mrb[0].mxu0
        %v2910 = vadd.f32 %v2797, %v2909
        %v2911 = vpop.f32.mrb[0].mxu0
        %v2912 = vadd.f32 %v2799, %v2911
        %v2913 = vpop.f32.mrb[0].mxu0
        %v2914 = vadd.f32 %v2801, %v2913
        %2915 = vmatprep.mubr.bf16.mxu0 %v665
        %2916 = vmatmul.mubr.bf16.gmra.mrb[0].mxu0 %v664
        %v2917 = vpop.f32.mrb[0].mxu0
        %v2918 = vadd.f32 %v2805, %v2917
        %v2919 = vpop.f32.mrb[0].mxu0
        %v2920 = vadd.f32 %v2807, %v2919
        %v2921 = vpop.f32.mrb[0].mxu0
        %v2922 = vadd.f32 %v2809, %v2921
        %v2923 = vpop.f32.mrb[0].mxu0
        %v2924 = vadd.f32 %v2811, %v2923
        %2925 = vmatprep.mubr.bf16.mxu0 %v681
        %2926 = vmatmul.mubr.bf16.gmra.mrb[0].mxu0 %v680
        %v2927 = vpop.f32.mrb[0].mxu0
        %v2928 = vadd.f32 %v2815, %v2927
        %v2929 = vpop.f32.mrb[0].mxu0
        %v2930 = vadd.f32 %v2817, %v2929
        %v2931 = vpop.f32.mrb[0].mxu0
        %v2932 = vadd.f32 %v2819, %v2931
        %v2933 = vpop.f32.mrb[0].mxu0
        %v2934 = vadd.f32 %v2821, %v2933
        %2935 = vmatprep.mubr.bf16.mxu0 %v697
        %2936 = vmatmul.mubr.bf16.gmra.mrb[0].mxu0 %v696
        %v2937 = vpop.f32.mrb[0].mxu0
        %v2938 = vadd.f32 %v2825, %v2937
        %v2939 = vpop.f32.mrb[0].mxu0
        %v2940 = vadd.f32 %v2827, %v2939
        %v2941 = vpop.f32.mrb[0].mxu0
        %v2942 = vadd.f32 %v2829, %v2941
        %v2943 = vpop.f32.mrb[0].mxu0
        %v2944 = vadd.f32 %v2831, %v2943
        %2945 = vmatprep.mubr.bf16.mxu0 %v713
        %2946 = vmatmul.mubr.bf16.gmra.mrb[0].mxu0 %v712
        %v2947 = vpop.f32.mrb[0].mxu0
        %v2948 = vadd.f32 %v2835, %v2947
        %v2949 = vpop.f32.mrb[0].mxu0
        %v2950 = vadd.f32 %v2837, %v2949
        %v2951 = vpop.f32.mrb[0].mxu0
        %v2952 = vadd.f32 %v2839, %v2951
        %v2953 = vpop.f32.mrb[0].mxu0
        %v2954 = vadd.f32 %v2841, %v2953
        %2955 = vmatprep.mubr.bf16.mxu0 %v729
        %2956 = vmatmul.mubr.bf16.gmra.mrb[0].mxu0 %v728
        %v2957 = vpop.f32.mrb[0].mxu0
        %v2958 = vadd.f32 %v2845, %v2957
        %v2959 = vpop.f32.mrb[0].mxu0
        %v2960 = vadd.f32 %v2847, %v2959
        %v2961 = vpop.f32.mrb[0].mxu0
        %v2962 = vadd.f32 %v2849, %v2961
        %v2963 = vpop.f32.mrb[0].mxu0
        %v2964 = vadd.f32 %v2851, %v2963
        %2965 = vmatprep.mubr.bf16.mxu0 %v745
        %2966 = vmatmul.mubr.bf16.gmra.mrb[0].mxu0 %v744
        %v2967 = vpop.f32.mrb[0].mxu0
        %v2968 = vadd.f32 %v2855, %v2967
        %v2969 = vpop.f32.mrb[0].mxu0
        %v2970 = vadd.f32 %v2857, %v2969
        %v2971 = vpop.f32.mrb[0].mxu0
        %v2972 = vadd.f32 %v2859, %v2971
        %v2973 = vpop.f32.mrb[0].mxu0
        %v2974 = vadd.f32 %v2861, %v2973
        %2975 = vdwg.mxu0
        %2976 = vmatprep.subr.bf16.mxu0 %v1979
        %2977 = vmatpush1.bf16.msra.mxu0 %v1978
        %2978 = vmatprep.subr.bf16.mxu0 %v1981
        %2979 = vmatpush1.bf16.msra.mxu0 %v1980
        %2980 = vmatprep.subr.bf16.mxu0 %v1983
        %2981 = vmatpush1.bf16.msra.mxu0 %v1982
        %2982 = vmatprep.subr.bf16.mxu0 %v1985
        %2983 = vmatpush1.bf16.msra.mxu0 %v1984
        %2984 = vmatprep.subr.bf16.mxu0 %v1987
        %2985 = vmatpush1.bf16.msra.mxu0 %v1986
        %2986 = vmatprep.subr.bf16.mxu0 %v1989
        %2987 = vmatpush1.bf16.msra.mxu0 %v1988
        %2988 = vmatprep.subr.bf16.mxu0 %v1991
        %2989 = vmatpush1.bf16.msra.mxu0 %v1990
        %2990 = vmatprep.subr.bf16.mxu0 %v1993
        %2991 = vmatpush1.bf16.msra.mxu0 %v1992
        %2992 = vmatprep.subr.bf16.mxu0 %v1995
        %2993 = vmatpush1.bf16.msra.mxu0 %v1994
        %2994 = vmatprep.subr.bf16.mxu0 %v1997
        %2995 = vmatpush1.bf16.msra.mxu0 %v1996
        %2996 = vmatprep.subr.bf16.mxu0 %v1999
        %2997 = vmatpush1.bf16.msra.mxu0 %v1998
        %2998 = vmatprep.subr.bf16.mxu0 %v2001
        %2999 = vmatpush1.bf16.msra.mxu0 %v2000
        %3000 = vmatprep.subr.bf16.mxu0 %v2003
        %3001 = vmatpush1.bf16.msra.mxu0 %v2002
        %3002 = vmatprep.subr.bf16.mxu0 %v2005
        %3003 = vmatpush1.bf16.msra.mxu0 %v2004
        %3004 = vmatprep.subr.bf16.mxu0 %v2007
        %3005 = vmatpush1.bf16.msra.mxu0 %v2006
        %3006 = vmatprep.subr.bf16.mxu0 %v2009
        %3007 = vmatpush1.bf16.msra.mxu0 %v2008
        %3008 = vmatprep.mubr.bf16.mxu0 %v635
        %3009 = vmatmul.mubr.bf16.gmra.mrb[0].mxu0 %v634
        %v3010 = vpop.f32.mrb[0].mxu0
        %v3011 = vadd.f32 %v2898, %v3010
        %v3012 = vpop.f32.mrb[0].mxu0
        %v3013 = vadd.f32 %v2900, %v3012
        %v3014 = vpop.f32.mrb[0].mxu0
        %v3015 = vadd.f32 %v2902, %v3014
        %v3016 = vpop.f32.mrb[0].mxu0
        %v3017 = vadd.f32 %v2904, %v3016
        %3018 = vmatprep.mubr.bf16.mxu0 %v651
        %3019 = vmatmul.mubr.bf16.gmra.mrb[0].mxu0 %v650
        %v3020 = vpop.f32.mrb[0].mxu0
        %v3021 = vadd.f32 %v2908, %v3020
        %v3022 = vpop.f32.mrb[0].mxu0
        %v3023 = vadd.f32 %v2910, %v3022
        %v3024 = vpop.f32.mrb[0].mxu0
        %v3025 = vadd.f32 %v2912, %v3024
        %v3026 = vpop.f32.mrb[0].mxu0
        %v3027 = vadd.f32 %v2914, %v3026
        %3028 = vmatprep.mubr.bf16.mxu0 %v667
        %3029 = vmatmul.mubr.bf16.gmra.mrb[0].mxu0 %v666
        %v3030 = vpop.f32.mrb[0].mxu0
        %v3031 = vadd.f32 %v2918, %v3030
        %v3032 = vpop.f32.mrb[0].mxu0
        %v3033 = vadd.f32 %v2920, %v3032
        %v3034 = vpop.f32.mrb[0].mxu0
        %v3035 = vadd.f32 %v2922, %v3034
        %v3036 = vpop.f32.mrb[0].mxu0
        %v3037 = vadd.f32 %v2924, %v3036
        %3038 = vmatprep.mubr.bf16.mxu0 %v683
        %3039 = vmatmul.mubr.bf16.gmra.mrb[0].mxu0 %v682
        %v3040 = vpop.f32.mrb[0].mxu0
        %v3041 = vadd.f32 %v2928, %v3040
        %v3042 = vpop.f32.mrb[0].mxu0
        %v3043 = vadd.f32 %v2930, %v3042
        %v3044 = vpop.f32.mrb[0].mxu0
        %v3045 = vadd.f32 %v2932, %v3044
        %v3046 = vpop.f32.mrb[0].mxu0
        %v3047 = vadd.f32 %v2934, %v3046
        %3048 = vmatprep.mubr.bf16.mxu0 %v699
        %3049 = vmatmul.mubr.bf16.gmra.mrb[0].mxu0 %v698
        %v3050 = vpop.f32.mrb[0].mxu0
        %v3051 = vadd.f32 %v2938, %v3050
        %v3052 = vpop.f32.mrb[0].mxu0
        %v3053 = vadd.f32 %v2940, %v3052
        %v3054 = vpop.f32.mrb[0].mxu0
        %v3055 = vadd.f32 %v2942, %v3054
        %v3056 = vpop.f32.mrb[0].mxu0
        %v3057 = vadd.f32 %v2944, %v3056
        %3058 = vmatprep.mubr.bf16.mxu0 %v715
        %3059 = vmatmul.mubr.bf16.gmra.mrb[0].mxu0 %v714
        %v3060 = vpop.f32.mrb[0].mxu0
        %v3061 = vadd.f32 %v2948, %v3060
        %v3062 = vpop.f32.mrb[0].mxu0
        %v3063 = vadd.f32 %v2950, %v3062
        %v3064 = vpop.f32.mrb[0].mxu0
        %v3065 = vadd.f32 %v2952, %v3064
        %v3066 = vpop.f32.mrb[0].mxu0
        %v3067 = vadd.f32 %v2954, %v3066
        %3068 = vmatprep.mubr.bf16.mxu0 %v731
        %3069 = vmatmul.mubr.bf16.gmra.mrb[0].mxu0 %v730
        %v3070 = vpop.f32.mrb[0].mxu0
        %v3071 = vadd.f32 %v2958, %v3070
        %v3072 = vpop.f32.mrb[0].mxu0
        %v3073 = vadd.f32 %v2960, %v3072
        %v3074 = vpop.f32.mrb[0].mxu0
        %v3075 = vadd.f32 %v2962, %v3074
        %v3076 = vpop.f32.mrb[0].mxu0
        %v3077 = vadd.f32 %v2964, %v3076
        %3078 = vmatprep.mubr.bf16.mxu0 %v747
        %3079 = vmatmul.mubr.bf16.gmra.mrb[0].mxu0 %v746
        %v3080 = vpop.f32.mrb[0].mxu0
        %v3081 = vadd.f32 %v2968, %v3080
        %v3082 = vpop.f32.mrb[0].mxu0
        %v3083 = vadd.f32 %v2970, %v3082
        %v3084 = vpop.f32.mrb[0].mxu0
        %v3085 = vadd.f32 %v2972, %v3084
        %v3086 = vpop.f32.mrb[0].mxu0
        %v3087 = vadd.f32 %v2974, %v3086
        %3088 = vdwg.mxu0
        %3089 = vmatprep.subr.bf16.mxu0 %v2011
        %3090 = vmatpush1.bf16.msra.mxu0 %v2010
        %3091 = vmatprep.subr.bf16.mxu0 %v2013
        %3092 = vmatpush1.bf16.msra.mxu0 %v2012
        %3093 = vmatprep.subr.bf16.mxu0 %v2015
        %3094 = vmatpush1.bf16.msra.mxu0 %v2014
        %3095 = vmatprep.subr.bf16.mxu0 %v2017
        %3096 = vmatpush1.bf16.msra.mxu0 %v2016
        %3097 = vmatprep.subr.bf16.mxu0 %v2019
        %3098 = vmatpush1.bf16.msra.mxu0 %v2018
        %3099 = vmatprep.subr.bf16.mxu0 %v2021
        %3100 = vmatpush1.bf16.msra.mxu0 %v2020
        %3101 = vmatprep.subr.bf16.mxu0 %v2023
        %3102 = vmatpush1.bf16.msra.mxu0 %v2022
        %3103 = vmatprep.subr.bf16.mxu0 %v2025
        %3104 = vmatpush1.bf16.msra.mxu0 %v2024
        %3105 = vmatprep.subr.bf16.mxu0 %v2027
        %3106 = vmatpush1.bf16.msra.mxu0 %v2026
        %3107 = vmatprep.subr.bf16.mxu0 %v2029
        %3108 = vmatpush1.bf16.msra.mxu0 %v2028
        %3109 = vmatprep.subr.bf16.mxu0 %v2031
        %3110 = vmatpush1.bf16.msra.mxu0 %v2030
        %3111 = vmatprep.subr.bf16.mxu0 %v2033
        %3112 = vmatpush1.bf16.msra.mxu0 %v2032
        %3113 = vmatprep.subr.bf16.mxu0 %v2035
        %3114 = vmatpush1.bf16.msra.mxu0 %v2034
        %3115 = vmatprep.subr.bf16.mxu0 %v2037
        %3116 = vmatpush1.bf16.msra.mxu0 %v2036
        %3117 = vmatprep.subr.bf16.mxu0 %v2039
        %3118 = vmatpush1.bf16.msra.mxu0 %v2038
        %3119 = vmatprep.subr.bf16.mxu0 %v2041
        %3120 = vmatpush1.bf16.msra.mxu0 %v2040
        %3121 = vmatprep.mubr.bf16.mxu0 %v637
        %3122 = vmatmul.mubr.bf16.gmra.mrb[0].mxu0 %v636
        %v3123 = vpop.f32.mrb[0].mxu0
        %v3124 = vadd.f32 %v3011, %v3123
        %v3125 = vpop.f32.mrb[0].mxu0
        %v3126 = vadd.f32 %v3013, %v3125
        %v3127 = vpop.f32.mrb[0].mxu0
        %v3128 = vadd.f32 %v3015, %v3127
        %v3129 = vpop.f32.mrb[0].mxu0
        %v3130 = vadd.f32 %v3017, %v3129
        %3131 = vmatprep.mubr.bf16.mxu0 %v653
        %3132 = vmatmul.mubr.bf16.gmra.mrb[0].mxu0 %v652
        %v3133 = vpop.f32.mrb[0].mxu0
        %v3134 = vadd.f32 %v3021, %v3133
        %v3135 = vpop.f32.mrb[0].mxu0
        %v3136 = vadd.f32 %v3023, %v3135
        %v3137 = vpop.f32.mrb[0].mxu0
        %v3138 = vadd.f32 %v3025, %v3137
        %v3139 = vpop.f32.mrb[0].mxu0
        %v3140 = vadd.f32 %v3027, %v3139
        %3141 = vmatprep.mubr.bf16.mxu0 %v669
        %3142 = vmatmul.mubr.bf16.gmra.mrb[0].mxu0 %v668
        %v3143 = vpop.f32.mrb[0].mxu0
        %v3144 = vadd.f32 %v3031, %v3143
        %v3145 = vpop.f32.mrb[0].mxu0
        %v3146 = vadd.f32 %v3033, %v3145
        %v3147 = vpop.f32.mrb[0].mxu0
        %v3148 = vadd.f32 %v3035, %v3147
        %v3149 = vpop.f32.mrb[0].mxu0
        %v3150 = vadd.f32 %v3037, %v3149
        %3151 = vmatprep.mubr.bf16.mxu0 %v685
        %3152 = vmatmul.mubr.bf16.gmra.mrb[0].mxu0 %v684
        %v3153 = vpop.f32.mrb[0].mxu0
        %v3154 = vadd.f32 %v3041, %v3153
        %v3155 = vpop.f32.mrb[0].mxu0
        %v3156 = vadd.f32 %v3043, %v3155
        %v3157 = vpop.f32.mrb[0].mxu0
        %v3158 = vadd.f32 %v3045, %v3157
        %v3159 = vpop.f32.mrb[0].mxu0
        %v3160 = vadd.f32 %v3047, %v3159
        %3161 = vmatprep.mubr.bf16.mxu0 %v701
        %3162 = vmatmul.mubr.bf16.gmra.mrb[0].mxu0 %v700
        %v3163 = vpop.f32.mrb[0].mxu0
        %v3164 = vadd.f32 %v3051, %v3163
        %v3165 = vpop.f32.mrb[0].mxu0
        %v3166 = vadd.f32 %v3053, %v3165
        %v3167 = vpop.f32.mrb[0].mxu0
        %v3168 = vadd.f32 %v3055, %v3167
        %v3169 = vpop.f32.mrb[0].mxu0
        %v3170 = vadd.f32 %v3057, %v3169
        %3171 = vmatprep.mubr.bf16.mxu0 %v717
        %3172 = vmatmul.mubr.bf16.gmra.mrb[0].mxu0 %v716
        %v3173 = vpop.f32.mrb[0].mxu0
        %v3174 = vadd.f32 %v3061, %v3173
        %v3175 = vpop.f32.mrb[0].mxu0
        %v3176 = vadd.f32 %v3063, %v3175
        %v3177 = vpop.f32.mrb[0].mxu0
        %v3178 = vadd.f32 %v3065, %v3177
        %v3179 = vpop.f32.mrb[0].mxu0
        %v3180 = vadd.f32 %v3067, %v3179
        %3181 = vmatprep.mubr.bf16.mxu0 %v733
        %3182 = vmatmul.mubr.bf16.gmra.mrb[0].mxu0 %v732
        %v3183 = vpop.f32.mrb[0].mxu0
        %v3184 = vadd.f32 %v3071, %v3183
        %v3185 = vpop.f32.mrb[0].mxu0
        %v3186 = vadd.f32 %v3073, %v3185
        %v3187 = vpop.f32.mrb[0].mxu0
        %v3188 = vadd.f32 %v3075, %v3187
        %v3189 = vpop.f32.mrb[0].mxu0
        %v3190 = vadd.f32 %v3077, %v3189
        %3191 = vmatprep.mubr.bf16.mxu0 %v749
        %3192 = vmatmul.mubr.bf16.gmra.mrb[0].mxu0 %v748
        %v3193 = vpop.f32.mrb[0].mxu0
        %v3194 = vadd.f32 %v3081, %v3193
        %v3195 = vpop.f32.mrb[0].mxu0
        %v3196 = vadd.f32 %v3083, %v3195
        %v3197 = vpop.f32.mrb[0].mxu0
        %v3198 = vadd.f32 %v3085, %v3197
        %v3199 = vpop.f32.mrb[0].mxu0
        %v3200 = vadd.f32 %v3087, %v3199
        %3201 = vdwg.mxu0
        %v3202 = vmax.f32 %v3124, 0.0
        %v3203 = vmax.f32 %v3126, 0.0
        %v3204 = vmax.f32 %v3128, 0.0
        %v3205 = vmax.f32 %v3130, 0.0
        %v3206 = vmax.f32 %v3134, 0.0
        %v3207 = vmax.f32 %v3136, 0.0
        %v3208 = vmax.f32 %v3138, 0.0
        %v3209 = vmax.f32 %v3140, 0.0
        %v3210 = vmax.f32 %v3144, 0.0
        %v3211 = vmax.f32 %v3146, 0.0
        %v3212 = vmax.f32 %v3148, 0.0
        %v3213 = vmax.f32 %v3150, 0.0
        %v3214 = vmax.f32 %v3154, 0.0
        %v3215 = vmax.f32 %v3156, 0.0
        %v3216 = vmax.f32 %v3158, 0.0
        %v3217 = vmax.f32 %v3160, 0.0
        %v3218 = vmax.f32 %v3164, 0.0
        %v3219 = vmax.f32 %v3166, 0.0
        %v3220 = vmax.f32 %v3168, 0.0
        %v3221 = vmax.f32 %v3170, 0.0
        %v3222 = vmax.f32 %v3174, 0.0
        %v3223 = vmax.f32 %v3176, 0.0
        %v3224 = vmax.f32 %v3178, 0.0
        %v3225 = vmax.f32 %v3180, 0.0
        %v3226 = vmax.f32 %v3184, 0.0
        %v3227 = vmax.f32 %v3186, 0.0
        %v3228 = vmax.f32 %v3188, 0.0
        %v3229 = vmax.f32 %v3190, 0.0
        %v3230 = vmax.f32 %v3194, 0.0
        %v3231 = vmax.f32 %v3196, 0.0
        %v3232 = vmax.f32 %v3198, 0.0
        %v3233 = vmax.f32 %v3200, 0.0
        %v3234 = vpack.c.bf16 %v3204, %v3202
        %v3235 = vpack.c.bf16 %v3205, %v3203
        %v3236 = vpack.c.bf16 %v3208, %v3206
        %v3237 = vpack.c.bf16 %v3209, %v3207
        %v3238 = vpack.c.bf16 %v3212, %v3210
        %v3239 = vpack.c.bf16 %v3213, %v3211
        %v3240 = vpack.c.bf16 %v3216, %v3214
        %v3241 = vpack.c.bf16 %v3217, %v3215
        %v3242 = vpack.c.bf16 %v3220, %v3218
        %v3243 = vpack.c.bf16 %v3221, %v3219
        %v3244 = vpack.c.bf16 %v3224, %v3222
        %v3245 = vpack.c.bf16 %v3225, %v3223
        %v3246 = vpack.c.bf16 %v3228, %v3226
        %v3247 = vpack.c.bf16 %v3229, %v3227
        %v3248 = vpack.c.bf16 %v3232, %v3230
        %v3249 = vpack.c.bf16 %v3233, %v3231
        %v3250 = vld [vmem:[#allocation9] sm:$0xff]
        %v3251 = vld [vmem:[#allocation9 + $0x8] sm:$0xff]
        %v3252 = vld [vmem:[#allocation9 + $0x10] sm:$0xff]
        %v3253 = vld [vmem:[#allocation9 + $0x18] sm:$0xff]
        %v3254 = vld [vmem:[#allocation9 + $0x20] sm:$0xff]
        %v3255 = vld [vmem:[#allocation9 + $0x28] sm:$0xff]
        %v3256 = vld [vmem:[#allocation9 + $0x30] sm:$0xff]
        %v3257 = vld [vmem:[#allocation9 + $0x38] sm:$0xff]
        %v3258 = vld [vmem:[#allocation9 + $0x40] sm:$0xff]
        %v3259 = vld [vmem:[#allocation9 + $0x48] sm:$0xff]
        %v3260 = vld [vmem:[#allocation9 + $0x50] sm:$0xff]
        %v3261 = vld [vmem:[#allocation9 + $0x58] sm:$0xff]
        %v3262 = vld [vmem:[#allocation9 + $0x60] sm:$0xff]
        %v3263 = vld [vmem:[#allocation9 + $0x68] sm:$0xff]
        %v3264 = vld [vmem:[#allocation9 + $0x70] sm:$0xff]
        %v3265 = vld [vmem:[#allocation9 + $0x78] sm:$0xff]
        %v3266 = vld [vmem:[#allocation9 + $0x80] sm:$0xff]
        %v3267 = vld [vmem:[#allocation9 + $0x88] sm:$0xff]
        %v3268 = vld [vmem:[#allocation9 + $0x90] sm:$0xff]
        %v3269 = vld [vmem:[#allocation9 + $0x98] sm:$0xff]
        %v3270 = vld [vmem:[#allocation9 + $0xa0] sm:$0xff]
        %v3271 = vld [vmem:[#allocation9 + $0xa8] sm:$0xff]
        %v3272 = vld [vmem:[#allocation9 + $0xb0] sm:$0xff]
        %v3273 = vld [vmem:[#allocation9 + $0xb8] sm:$0xff]
        %v3274 = vld [vmem:[#allocation9 + $0xc0] sm:$0xff]
        %v3275 = vld [vmem:[#allocation9 + $0xc8] sm:$0xff]
        %v3276 = vld [vmem:[#allocation9 + $0xd0] sm:$0xff]
        %v3277 = vld [vmem:[#allocation9 + $0xd8] sm:$0xff]
        %v3278 = vld [vmem:[#allocation9 + $0xe0] sm:$0xff]
        %v3279 = vld [vmem:[#allocation9 + $0xe8] sm:$0xff]
        %v3280 = vld [vmem:[#allocation9 + $0xf0] sm:$0xff]
        %v3281 = vld [vmem:[#allocation9 + $0xf8] sm:$0xff]
        %v3282 = vld [vmem:[#allocation11] sm:$0x3]
        %v3284 = vlaneseq
        %v3285 = vshrl.u32 %v3284, 7
        %v3286 = vsub.s32 0, %v3285
        %v3287 = vrot.slane %v3282, %v3286
        %v3288 = vlaneseq
        %v3289 = vshrl.u32 %v3288, 7
        %v3290 = vsub.s32 1, %v3289
        %v3291 = vrot.slane %v3282, %v3290
        %v3326 = vunpack.c.l.b16 %v3250
        %v3327 = vunpack.c.h.b16 %v3250
        %v3328 = vunpack.c.l.b16 %v3251
        %v3329 = vunpack.c.h.b16 %v3251
        %v3330 = vunpack.c.l.b16 %v3252
        %v3331 = vunpack.c.h.b16 %v3252
        %v3332 = vunpack.c.l.b16 %v3253
        %v3333 = vunpack.c.h.b16 %v3253
        %v3334 = vunpack.c.l.b16 %v3254
        %v3335 = vunpack.c.h.b16 %v3254
        %v3336 = vunpack.c.l.b16 %v3255
        %v3337 = vunpack.c.h.b16 %v3255
        %v3338 = vunpack.c.l.b16 %v3256
        %v3339 = vunpack.c.h.b16 %v3256
        %v3340 = vunpack.c.l.b16 %v3257
        %v3341 = vunpack.c.h.b16 %v3257
        %v3342 = vunpack.c.l.b16 %v3258
        %v3343 = vunpack.c.h.b16 %v3258
        %v3344 = vunpack.c.l.b16 %v3259
        %v3345 = vunpack.c.h.b16 %v3259
        %v3346 = vunpack.c.l.b16 %v3260
        %v3347 = vunpack.c.h.b16 %v3260
        %v3348 = vunpack.c.l.b16 %v3261
        %v3349 = vunpack.c.h.b16 %v3261
        %v3350 = vunpack.c.l.b16 %v3262
        %v3351 = vunpack.c.h.b16 %v3262
        %v3352 = vunpack.c.l.b16 %v3263
        %v3353 = vunpack.c.h.b16 %v3263
        %v3354 = vunpack.c.l.b16 %v3264
        %v3355 = vunpack.c.h.b16 %v3264
        %v3356 = vunpack.c.l.b16 %v3265
        %v3357 = vunpack.c.h.b16 %v3265
        %v3358 = vunpack.c.l.b16 %v3266
        %v3359 = vunpack.c.h.b16 %v3266
        %v3360 = vunpack.c.l.b16 %v3267
        %v3361 = vunpack.c.h.b16 %v3267
        %v3362 = vunpack.c.l.b16 %v3268
        %v3363 = vunpack.c.h.b16 %v3268
        %v3364 = vunpack.c.l.b16 %v3269
        %v3365 = vunpack.c.h.b16 %v3269
        %v3366 = vunpack.c.l.b16 %v3270
        %v3367 = vunpack.c.h.b16 %v3270
        %v3368 = vunpack.c.l.b16 %v3271
        %v3369 = vunpack.c.h.b16 %v3271
        %v3370 = vunpack.c.l.b16 %v3272
        %v3371 = vunpack.c.h.b16 %v3272
        %v3372 = vunpack.c.l.b16 %v3273
        %v3373 = vunpack.c.h.b16 %v3273
        %v3374 = vunpack.c.l.b16 %v3274
        %v3375 = vunpack.c.h.b16 %v3274
        %v3376 = vunpack.c.l.b16 %v3275
        %v3377 = vunpack.c.h.b16 %v3275
        %v3378 = vunpack.c.l.b16 %v3276
        %v3379 = vunpack.c.h.b16 %v3276
        %v3380 = vunpack.c.l.b16 %v3277
        %v3381 = vunpack.c.h.b16 %v3277
        %v3382 = vunpack.c.l.b16 %v3278
        %v3383 = vunpack.c.h.b16 %v3278
        %v3384 = vunpack.c.l.b16 %v3279
        %v3385 = vunpack.c.h.b16 %v3279
        %v3386 = vunpack.c.l.b16 %v3280
        %v3387 = vunpack.c.h.b16 %v3280
        %v3388 = vunpack.c.l.b16 %v3281
        %v3389 = vunpack.c.h.b16 %v3281
        %v3390 = vpack.c.b16 %v3328, %v3326
        %v3391 = vpack.c.b16 %v3329, %v3327
        %v3392 = vpack.c.b16 %v3332, %v3330
        %v3393 = vpack.c.b16 %v3333, %v3331
        %v3394 = vpack.c.b16 %v3336, %v3334
        %v3395 = vpack.c.b16 %v3337, %v3335
        %v3396 = vpack.c.b16 %v3340, %v3338
        %v3397 = vpack.c.b16 %v3341, %v3339
        %v3398 = vpack.c.b16 %v3344, %v3342
        %v3399 = vpack.c.b16 %v3345, %v3343
        %v3400 = vpack.c.b16 %v3348, %v3346
        %v3401 = vpack.c.b16 %v3349, %v3347
        %v3402 = vpack.c.b16 %v3352, %v3350
        %v3403 = vpack.c.b16 %v3353, %v3351
        %v3404 = vpack.c.b16 %v3356, %v3354
        %v3405 = vpack.c.b16 %v3357, %v3355
        %v3406 = vpack.c.b16 %v3360, %v3358
        %v3407 = vpack.c.b16 %v3361, %v3359
        %v3408 = vpack.c.b16 %v3364, %v3362
        %v3409 = vpack.c.b16 %v3365, %v3363
        %v3410 = vpack.c.b16 %v3368, %v3366
        %v3411 = vpack.c.b16 %v3369, %v3367
        %v3412 = vpack.c.b16 %v3372, %v3370
        %v3413 = vpack.c.b16 %v3373, %v3371
        %v3414 = vpack.c.b16 %v3376, %v3374
        %v3415 = vpack.c.b16 %v3377, %v3375
        %v3416 = vpack.c.b16 %v3380, %v3378
        %v3417 = vpack.c.b16 %v3381, %v3379
        %v3418 = vpack.c.b16 %v3384, %v3382
        %v3419 = vpack.c.b16 %v3385, %v3383
        %v3420 = vpack.c.b16 %v3388, %v3386
        %v3421 = vpack.c.b16 %v3389, %v3387
        %3454 = vmatprep.subr.bf16.mxu0 %v3391
        %3455 = vmatpush1.bf16.msra.mxu0 %v3390
        %3456 = vmatprep.subr.bf16.mxu0 %v3393
        %3457 = vmatpush1.bf16.msra.mxu0 %v3392
        %3458 = vmatprep.subr.bf16.mxu0 %v3395
        %3459 = vmatpush1.bf16.msra.mxu0 %v3394
        %3460 = vmatprep.subr.bf16.mxu0 %v3397
        %3461 = vmatpush1.bf16.msra.mxu0 %v3396
        %3462 = vmatprep.subr.bf16.mxu0 %v3399
        %3463 = vmatpush1.bf16.msra.mxu0 %v3398
        %3464 = vmatprep.subr.bf16.mxu0 %v3401
        %3465 = vmatpush1.bf16.msra.mxu0 %v3400
        %3466 = vmatprep.subr.bf16.mxu0 %v3403
        %3467 = vmatpush1.bf16.msra.mxu0 %v3402
        %3468 = vmatprep.subr.bf16.mxu0 %v3405
        %3469 = vmatpush1.bf16.msra.mxu0 %v3404
        %3470 = vmatprep.subr.bf16.mxu0 %v3407
        %3471 = vmatpush1.bf16.msra.mxu0 %v3406
        %3472 = vmatprep.subr.bf16.mxu0 %v3409
        %3473 = vmatpush1.bf16.msra.mxu0 %v3408
        %3474 = vmatprep.subr.bf16.mxu0 %v3411
        %3475 = vmatpush1.bf16.msra.mxu0 %v3410
        %3476 = vmatprep.subr.bf16.mxu0 %v3413
        %3477 = vmatpush1.bf16.msra.mxu0 %v3412
        %3478 = vmatprep.subr.bf16.mxu0 %v3415
        %3479 = vmatpush1.bf16.msra.mxu0 %v3414
        %3480 = vmatprep.subr.bf16.mxu0 %v3417
        %3481 = vmatpush1.bf16.msra.mxu0 %v3416
        %3482 = vmatprep.subr.bf16.mxu0 %v3419
        %3483 = vmatpush1.bf16.msra.mxu0 %v3418
        %3484 = vmatprep.subr.bf16.mxu0 %v3421
        %3485 = vmatpush1.bf16.msra.mxu0 %v3420
        %3486 = vmatprep.mubr.bf16.mxu0 %v3235
        %3487 = vmatmul.mubr.bf16.gmra.mrb[0].mxu0 %v3234
        %v3488 = vpop.f32.mrb[0].mxu0
        %v3489 = vadd.f32 %v3287, %v3488
        %v3490 = vpop.f32.mrb[0].mxu0
        %v3491 = vadd.f32 %v3291, %v3490
        %v3492 = vpop.f32.mrb[0].mxu0
        %v3493 = vadd.f32 %v3287, %v3492
        %v3494 = vpop.f32.mrb[0].mxu0
        %v3495 = vadd.f32 %v3291, %v3494
        %3496 = vmatprep.mubr.bf16.mxu0 %v3237
        %3497 = vmatmul.mubr.bf16.gmra.mrb[0].mxu0 %v3236
        %v3498 = vpop.f32.mrb[0].mxu0
        %v3499 = vadd.f32 %v3287, %v3498
        %v3500 = vpop.f32.mrb[0].mxu0
        %v3501 = vadd.f32 %v3291, %v3500
        %v3502 = vpop.f32.mrb[0].mxu0
        %v3503 = vadd.f32 %v3287, %v3502
        %v3504 = vpop.f32.mrb[0].mxu0
        %v3505 = vadd.f32 %v3291, %v3504
        %3506 = vmatprep.mubr.bf16.mxu0 %v3239
        %3507 = vmatmul.mubr.bf16.gmra.mrb[0].mxu0 %v3238
        %v3508 = vpop.f32.mrb[0].mxu0
        %v3509 = vadd.f32 %v3287, %v3508
        %v3510 = vpop.f32.mrb[0].mxu0
        %v3511 = vadd.f32 %v3291, %v3510
        %v3512 = vpop.f32.mrb[0].mxu0
        %v3513 = vadd.f32 %v3287, %v3512
        %v3514 = vpop.f32.mrb[0].mxu0
        %v3515 = vadd.f32 %v3291, %v3514
        %3516 = vmatprep.mubr.bf16.mxu0 %v3241
        %3517 = vmatmul.mubr.bf16.gmra.mrb[0].mxu0 %v3240
        %v3518 = vpop.f32.mrb[0].mxu0
        %v3519 = vadd.f32 %v3287, %v3518
        %v3520 = vpop.f32.mrb[0].mxu0
        %v3521 = vadd.f32 %v3291, %v3520
        %v3522 = vpop.f32.mrb[0].mxu0
        %v3523 = vadd.f32 %v3287, %v3522
        %v3524 = vpop.f32.mrb[0].mxu0
        %v3525 = vadd.f32 %v3291, %v3524
        %3526 = vmatprep.mubr.bf16.mxu0 %v3243
        %3527 = vmatmul.mubr.bf16.gmra.mrb[0].mxu0 %v3242
        %v3528 = vpop.f32.mrb[0].mxu0
        %v3529 = vadd.f32 %v3287, %v3528
        %v3530 = vpop.f32.mrb[0].mxu0
        %v3531 = vadd.f32 %v3291, %v3530
        %v3532 = vpop.f32.mrb[0].mxu0
        %v3533 = vadd.f32 %v3287, %v3532
        %v3534 = vpop.f32.mrb[0].mxu0
        %v3535 = vadd.f32 %v3291, %v3534
        %3536 = vmatprep.mubr.bf16.mxu0 %v3245
        %3537 = vmatmul.mubr.bf16.gmra.mrb[0].mxu0 %v3244
        %v3538 = vpop.f32.mrb[0].mxu0
        %v3539 = vadd.f32 %v3287, %v3538
        %v3540 = vpop.f32.mrb[0].mxu0
        %v3541 = vadd.f32 %v3291, %v3540
        %v3542 = vpop.f32.mrb[0].mxu0
        %v3543 = vadd.f32 %v3287, %v3542
        %v3544 = vpop.f32.mrb[0].mxu0
        %v3545 = vadd.f32 %v3291, %v3544
        %3546 = vmatprep.mubr.bf16.mxu0 %v3247
        %3547 = vmatmul.mubr.bf16.gmra.mrb[0].mxu0 %v3246
        %v3548 = vpop.f32.mrb[0].mxu0
        %v3549 = vadd.f32 %v3287, %v3548
        %v3550 = vpop.f32.mrb[0].mxu0
        %v3551 = vadd.f32 %v3291, %v3550
        %v3552 = vpop.f32.mrb[0].mxu0
        %v3553 = vadd.f32 %v3287, %v3552
        %v3554 = vpop.f32.mrb[0].mxu0
        %v3555 = vadd.f32 %v3291, %v3554
        %3556 = vmatprep.mubr.bf16.mxu0 %v3249
        %3557 = vmatmul.mubr.bf16.gmra.mrb[0].mxu0 %v3248
        %v3558 = vpop.f32.mrb[0].mxu0
        %v3559 = vadd.f32 %v3287, %v3558
        %v3560 = vpop.f32.mrb[0].mxu0
        %v3561 = vadd.f32 %v3291, %v3560
        %v3562 = vpop.f32.mrb[0].mxu0
        %v3563 = vadd.f32 %v3287, %v3562
        %v3564 = vpop.f32.mrb[0].mxu0
        %v3565 = vadd.f32 %v3291, %v3564
        %3566 = vdwg.mxu0
        %v3567 = vmax.f32 %v3489, 0.0
        %v3568 = vmax.f32 %v3491, 0.0
        %v3569 = vmax.f32 %v3493, 0.0
        %v3570 = vmax.f32 %v3495, 0.0
        %v3571 = vmax.f32 %v3499, 0.0
        %v3572 = vmax.f32 %v3501, 0.0
        %v3573 = vmax.f32 %v3503, 0.0
        %v3574 = vmax.f32 %v3505, 0.0
        %v3575 = vmax.f32 %v3509, 0.0
        %v3576 = vmax.f32 %v3511, 0.0
        %v3577 = vmax.f32 %v3513, 0.0
        %v3578 = vmax.f32 %v3515, 0.0
        %v3579 = vmax.f32 %v3519, 0.0
        %v3580 = vmax.f32 %v3521, 0.0
        %v3581 = vmax.f32 %v3523, 0.0
        %v3582 = vmax.f32 %v3525, 0.0
        %v3583 = vmax.f32 %v3529, 0.0
        %v3584 = vmax.f32 %v3531, 0.0
        %v3585 = vmax.f32 %v3533, 0.0
        %v3586 = vmax.f32 %v3535, 0.0
        %v3587 = vmax.f32 %v3539, 0.0
        %v3588 = vmax.f32 %v3541, 0.0
        %v3589 = vmax.f32 %v3543, 0.0
        %v3590 = vmax.f32 %v3545, 0.0
        %v3591 = vmax.f32 %v3549, 0.0
        %v3592 = vmax.f32 %v3551, 0.0
        %v3593 = vmax.f32 %v3553, 0.0
        %v3594 = vmax.f32 %v3555, 0.0
        %v3595 = vmax.f32 %v3559, 0.0
        %v3596 = vmax.f32 %v3561, 0.0
        %v3597 = vmax.f32 %v3563, 0.0
        %v3598 = vmax.f32 %v3565, 0.0
        %v3599 = vld [vmem:[#allocation12] sm:$0x3]
        %v3600 = vunpack.c.l.bf16 %v3599
        %v3602 = vlaneseq
        %v3603 = vshrl.u32 %v3602, 7
        %v3604 = vsub.s32 0, %v3603
        %v3605 = vrot.slane %v3600, %v3604
        %v3606 = vlaneseq
        %v3607 = vshrl.u32 %v3606, 7
        %v3608 = vsub.s32 2, %v3607
        %v3609 = vrot.slane %v3600, %v3608
        %v3612 = vlaneseq
        %v3613 = vshrl.u32 %v3612, 7
        %v3614 = vsub.s32 0, %v3613
        %v3615 = vrot.slane %v3605, %v3614
        %v3616 = vlaneseq
        %v3617 = vshrl.u32 %v3616, 7
        %v3618 = vsub.s32 0, %v3617
        %v3619 = vrot.slane %v3609, %v3618
        %v3620 = vmul.f32 %v3567, %v3615
        %v3621 = vmul.f32 %v3568, %v3619
        %v3622 = vmul.f32 %v3569, %v3615
        %v3623 = vmul.f32 %v3570, %v3619
        %v3624 = vmul.f32 %v3571, %v3615
        %v3625 = vmul.f32 %v3572, %v3619
        %v3626 = vmul.f32 %v3573, %v3615
        %v3627 = vmul.f32 %v3574, %v3619
        %v3628 = vmul.f32 %v3575, %v3615
        %v3629 = vmul.f32 %v3576, %v3619
        %v3630 = vmul.f32 %v3577, %v3615
        %v3631 = vmul.f32 %v3578, %v3619
        %v3632 = vmul.f32 %v3579, %v3615
        %v3633 = vmul.f32 %v3580, %v3619
        %v3634 = vmul.f32 %v3581, %v3615
        %v3635 = vmul.f32 %v3582, %v3619
        %v3636 = vmul.f32 %v3583, %v3615
        %v3637 = vmul.f32 %v3584, %v3619
        %v3638 = vmul.f32 %v3585, %v3615
        %v3639 = vmul.f32 %v3586, %v3619
        %v3640 = vmul.f32 %v3587, %v3615
        %v3641 = vmul.f32 %v3588, %v3619
        %v3642 = vmul.f32 %v3589, %v3615
        %v3643 = vmul.f32 %v3590, %v3619
        %v3644 = vmul.f32 %v3591, %v3615
        %v3645 = vmul.f32 %v3592, %v3619
        %v3646 = vmul.f32 %v3593, %v3615
        %v3647 = vmul.f32 %v3594, %v3619
        %v3648 = vmul.f32 %v3595, %v3615
        %v3649 = vmul.f32 %v3596, %v3619
        %v3650 = vmul.f32 %v3597, %v3615
        %v3651 = vmul.f32 %v3598, %v3619
        %3652 = vxpose.xlu0.b32.start [1/16] %v3620, 128
        %3653 = vxpose.xlu0.b32.cont [2/16] %v3622, 128
        %3654 = vxpose.xlu0.b32.cont [3/16] %v3624, 128
        %3655 = vxpose.xlu0.b32.cont [4/16] %v3626, 128
        %3656 = vxpose.xlu0.b32.cont [5/16] %v3628, 128
        %3657 = vxpose.xlu0.b32.cont [6/16] %v3630, 128
        %3658 = vxpose.xlu0.b32.cont [7/16] %v3632, 128
        %3659 = vxpose.xlu0.b32.cont [8/16] %v3634, 128
        %3660 = vxpose.xlu0.b32.cont [9/16] %v3636, 128
        %3661 = vxpose.xlu0.b32.cont [10/16] %v3638, 128
        %3662 = vxpose.xlu0.b32.cont [11/16] %v3640, 128
        %3663 = vxpose.xlu0.b32.cont [12/16] %v3642, 128
        %3664 = vxpose.xlu0.b32.cont [13/16] %v3644, 128
        %3665 = vxpose.xlu0.b32.cont [14/16] %v3646, 128
        %3666 = vxpose.xlu0.b32.cont [15/16] %v3648, 128
        %3667 = vxpose.xlu0.b32.end [16/16] %v3650, 128
        %v3668 = vpop.trf.xlu0
        %v3669 = vpop.trf.xlu0
        %v3670 = vpop.trf.xlu0
        %v3671 = vpop.trf.xlu0
        %v3672 = vpop.trf.xlu0
        %v3673 = vpop.trf.xlu0
        %v3674 = vpop.trf.xlu0
        %v3675 = vpop.trf.xlu0
        %v3676 = vpop.trf.xlu0
        %v3677 = vpop.trf.xlu0
        %v3678 = vpop.trf.xlu0
        %v3679 = vpop.trf.xlu0
        %v3680 = vpop.trf.xlu0
        %v3681 = vpop.trf.xlu0
        %v3682 = vpop.trf.xlu0
        %v3683 = vpop.trf.xlu0
        %3684 = vxpose.xlu0.b32.start [1/16] %v3621, 128
        %3685 = vxpose.xlu0.b32.cont [2/16] %v3623, 128
        %3686 = vxpose.xlu0.b32.cont [3/16] %v3625, 128
        %3687 = vxpose.xlu0.b32.cont [4/16] %v3627, 128
        %3688 = vxpose.xlu0.b32.cont [5/16] %v3629, 128
        %3689 = vxpose.xlu0.b32.cont [6/16] %v3631, 128
        %3690 = vxpose.xlu0.b32.cont [7/16] %v3633, 128
        %3691 = vxpose.xlu0.b32.cont [8/16] %v3635, 128
        %3692 = vxpose.xlu0.b32.cont [9/16] %v3637, 128
        %3693 = vxpose.xlu0.b32.cont [10/16] %v3639, 128
        %3694 = vxpose.xlu0.b32.cont [11/16] %v3641, 128
        %3695 = vxpose.xlu0.b32.cont [12/16] %v3643, 128
        %3696 = vxpose.xlu0.b32.cont [13/16] %v3645, 128
        %3697 = vxpose.xlu0.b32.cont [14/16] %v3647, 128
        %3698 = vxpose.xlu0.b32.cont [15/16] %v3649, 128
        %3699 = vxpose.xlu0.b32.end [16/16] %v3651, 128
        %v3700 = vpop.trf.xlu0
        %v3701 = vpop.trf.xlu0
        %v3702 = vpop.trf.xlu0
        %v3703 = vpop.trf.xlu0
        %v3704 = vpop.trf.xlu0
        %v3705 = vpop.trf.xlu0
        %v3706 = vpop.trf.xlu0
        %v3707 = vpop.trf.xlu0
        %v3708 = vpop.trf.xlu0
        %v3709 = vpop.trf.xlu0
        %v3710 = vpop.trf.xlu0
        %v3711 = vpop.trf.xlu0
        %v3712 = vpop.trf.xlu0
        %v3713 = vpop.trf.xlu0
        %v3714 = vpop.trf.xlu0
        %v3715 = vpop.trf.xlu0
        %v3716 = vadd.f32 %v3668, %v3669
        %v3717 = vadd.f32 %v3716, %v3670
        %v3718 = vadd.f32 %v3717, %v3671
        %v3719 = vadd.f32 %v3718, %v3672
        %v3720 = vadd.f32 %v3719, %v3673
        %v3721 = vadd.f32 %v3720, %v3674
        %v3722 = vadd.f32 %v3721, %v3675
        %v3723 = vadd.f32 %v3722, %v3676
        %v3724 = vadd.f32 %v3723, %v3677
        %v3725 = vadd.f32 %v3724, %v3678
        %v3726 = vadd.f32 %v3725, %v3679
        %v3727 = vadd.f32 %v3726, %v3680
        %v3728 = vadd.f32 %v3727, %v3681
        %v3729 = vadd.f32 %v3728, %v3682
        %v3730 = vadd.f32 %v3729, %v3683
        %v3731 = vadd.f32 %v3730, %v3700
        %v3732 = vadd.f32 %v3731, %v3701
        %v3733 = vadd.f32 %v3732, %v3702
        %v3734 = vadd.f32 %v3733, %v3703
        %v3735 = vadd.f32 %v3734, %v3704
        %v3736 = vadd.f32 %v3735, %v3705
        %v3737 = vadd.f32 %v3736, %v3706
        %v3738 = vadd.f32 %v3737, %v3707
        %v3739 = vadd.f32 %v3738, %v3708
        %v3740 = vadd.f32 %v3739, %v3709
        %v3741 = vadd.f32 %v3740, %v3710
        %v3742 = vadd.f32 %v3741, %v3711
        %v3743 = vadd.f32 %v3742, %v3712
        %v3744 = vadd.f32 %v3743, %v3713
        %v3745 = vadd.f32 %v3744, %v3714
        %v3746 = vadd.f32 %v3745, %v3715
        %v3747 = vrot.slane %v3746, 4
        %v3748 = vadd.f32 %v3746, %v3747
        %v3749 = vrot.slane %v3748, 2
        %v3750 = vadd.f32 %v3748, %v3749
        %v3751 = vrot.slane %v3750, 1
        %v3752 = vadd.f32 %v3750, %v3751
        %s3753 = sld [smem:[#allocation2]]
        %v3754 = vstv %s3753
        %v3755 = vadd.f32 %v3752, %v3754
        %v3756 = vxor.u32 %v3755, 2147483648
        %v3757 = vmul.f32 %v3756, 1.442695
        %v3758 = vpow.pop %v3757
        %v3759 = vadd.f32 %v3758, 1.0
        %v3760 = vrcp.pop %v3759
        %v3761 = vmul.f32 1.0, %v3760
        %3762 = vst [vmem:[%s364] sm:$0x1] %v3761
        %s3763 = sand.u32 %s188, 1
        %s3764 = scalar_lea.sflag [#allocation5], %s3763
        %s3765 = sand.u32 %s188, 1
        %s3766 = scalar_lea.vmem [#allocation14], %s3765
        // Predicated region
        $region73: #{tpu_custom_call.1} parent=47 // pred_check
          %p3767 = pneg %p198
        $region74: #{tpu_custom_call.1} parent=47 // pred_check_branch
          %3769 = sbr.rel (%p3767) target = $region76
        $region75: #{tpu_custom_call.1} parent=47 // pred_region
          %s3771 = ssub.s32 16, 16
          %3772 = vsyncadd %s3764, %s3771
          %s3773 = smul.addr %s28, 16
          %s3774 = scalar_lea.hbm %s7, %s3773
          %s3776 = sshll.u32 %s3766, 4
          %s3777 = int_to_ptr.vmem [resolvable:$true] %s3776
          %3779 = dma.vmem_to_hbm [thread:$0]  %s3777, 16, %s3774, %s3764
        $region76: #{tpu_custom_call.1} parent=47 // pred_fallthru
          _
      $region48: #{tpu_custom_call.1} parent=5 // pred_fallthru
        _
      %p3780 = scmp.le.s32.totalorder 2, %s23
      // Predicated region
      $region77: #{tpu_custom_call.1} parent=5 // pred_check
        %p3781 = pneg %p3780
      $region78: #{tpu_custom_call.1} parent=5 // pred_check_branch
        %3783 = sbr.rel (%p3781) target = $region80
      $region79: #{tpu_custom_call.1} parent=5 // pred_region
        %s3784 = ssub.s32 %s23, 2
        // Predicated region
        $region81: #{tpu_custom_call.1} parent=79 // pred_check
          %p3785 = pneg %p204
        $region82: #{tpu_custom_call.1} parent=79 // pred_check_branch
          %3787 = sbr.rel (%p3785) target = $region84
        $region83: #{tpu_custom_call.1} parent=79 // pred_region
          %s3788 = sand.u32 %s189, 1
          %s3789 = scalar_lea.sflag [#allocation5], %s3788
          %s3790 = sand.u32 %s189, 1
          %s3791 = scalar_lea.vmem [#allocation14], %s3790
          %3792 = dma.done %s3789, 16
        $region84: #{tpu_custom_call.1} parent=79 // pred_fallthru
          _
      $region80: #{tpu_custom_call.1} parent=5 // pred_fallthru
        _
    $region6: #{tpu_custom_call.1} parent=1 // loop_footer
      %s27 = sadd.s32 1, %s23
    $region7: #{tpu_custom_call.1} parent=1 // loop_footer_branch
      %22 = sbr.rel target = $region3
    $region8: #{tpu_custom_call.1} parent=1 // loop_exit
      _
    %3793 = vsyncpa [#allocation4], 1
    %s3794 = scalar_lea.sflag [#allocation4], 1
    %3795 = vsyncpa %s3794, 1
    %3796 = vsyncpa [#allocation7], 1
    %3797 = vsyncpa [#allocation10], 1
    %3798 = vsyncpa [#allocation13], 1
    %3799 = vsyncpa [#allocation5], 1
    %s3800 = scalar_lea.sflag [#allocation5], 1
    %3801 = vsyncpa %s3800, 1

</llo_original>
